<compile_context>
chip_gen: v7x
topology: tpu7x:2x2x1
jax: 0.10.0
libtpu: 0.0.40
codegen_flags: <defaults>
</compile_context>

<pallas_src>
import functools
import math

import jax
import jax.numpy as jnp
from jax.experimental import pallas as pl
from jax.experimental.pallas import tpu as pltpu

EPS = 1e-5  # nn.BatchNorm2d default eps


def _paraphraser_kernel(x_ref, w1_ref, w2_ref, w3_ref, w4_ref, b4_ref,
                        z_ref, out_ref, xpad_ref, *, N, H, W, c_mid):
    """Fully fused paraphraser forward.

    x_ref    : (N, H, W, 64)      f32 input (NHWC)
    w*_ref   : (9*Cin, Cout)      f32 conv weights, 3x3 taps packed along K
    b4_ref   : (1, 64)            f32 bias of the last conv
    z_ref    : (N*H*W, c_mid)     f32 encoder output (flattened NHWC)
    out_ref  : (N*H*W, 64)        f32 decoder output (flattened NHWC)
    xpad_ref : (N, H+2, W+2, 64)  f32 VMEM scratch: reusable zero-halo buffer
    """
    NHW = N * H * W
    inv_n = 1.0 / float(NHW)

    # Zero the padded scratch once; its 1-pixel halo stays zero for all four
    # layers (only the interior is overwritten below).
    xpad_ref[...] = jnp.zeros_like(xpad_ref)

    def conv(a4d, w_ref):
        """3x3 'same' conv as a single im2col matmul (K = 9 * Cin)."""
        C = a4d.shape[-1]
        xpad_ref[:, 1:H + 1, 1:W + 1, :C] = a4d
        taps = [xpad_ref[:, ky:ky + H, kx:kx + W, :C]
                for ky in range(3) for kx in range(3)]
        col = jnp.concatenate(taps, axis=-1).reshape(NHW, 9 * C)
        # TODO(synk): cast col / w to bf16 on v6e/v7x for ~2x MXU throughput
        # (kept f32 so the 4-layer chain stays within 1e-3 of the f32 reference).
        return jnp.dot(col, w_ref[...], preferred_element_type=jnp.float32)

    def bn_relu(y2d):
        """Training-mode BatchNorm (gamma=1, beta=0) + ReLU as a conv epilogue."""
        mean = jnp.sum(y2d, axis=0, keepdims=True) * inv_n
        msq = jnp.sum(y2d * y2d, axis=0, keepdims=True) * inv_n
        var = jnp.maximum(msq - mean * mean, 0.0)  # clamp one-pass cancellation
        return jnp.maximum((y2d - mean) * jax.lax.rsqrt(var + EPS), 0.0)

    # encoder: conv -> BN -> ReLU -> conv
    y1 = conv(x_ref[...], w1_ref)                           # (NHW, 64)
    a1 = bn_relu(y1).reshape(N, H, W, 64)
    z = conv(a1, w2_ref)                                    # (NHW, c_mid)
    z_ref[...] = z

    # decoder: BN -> ReLU -> conv -> BN -> ReLU -> conv(+bias)
    a2 = bn_relu(z).reshape(N, H, W, c_mid)
    h = conv(a2, w3_ref)                                    # (NHW, 64)
    a3 = bn_relu(h).reshape(N, H, W, 64)
    out_ref[...] = conv(a3, w4_ref) + b4_ref[...]           # (NHW, 64)


def paraphraser_forward(x_nchw, params):
    """Mirrors paraphraser.forward; x_nchw: (N, 64, H, W). Returns (z, out) NCHW."""
    x = jnp.transpose(x_nchw, (0, 2, 3, 1)).astype(jnp.float32)   # -> NHWC
    N, H, W, _ = x.shape
    c_mid = params["w2"].shape[-1]

    kernel = functools.partial(_paraphraser_kernel, N=N, H=H, W=W, c_mid=c_mid)
    vmem = lambda: pl.BlockSpec(memory_space=pltpu.MemorySpace.VMEM)
    # TODO(synk): for large N*H*W this single-shot fused kernel would exceed
    # VMEM; a gridded per-layer pipeline with stat accumulators is needed there.
    z2d, out2d = pl.pallas_call(
        kernel,
        out_shape=(jax.ShapeDtypeStruct((N * H * W, c_mid), jnp.float32),
                   jax.ShapeDtypeStruct((N * H * W, 64), jnp.float32)),
        in_specs=[vmem() for _ in range(6)],
        out_specs=(vmem(), vmem()),
        scratch_shapes=[pltpu.VMEM((N, H + 2, W + 2, 64), jnp.float32)],
    )(x, params["w1"], params["w2"], params["w3"], params["w4"],
      params["b4"].reshape(1, 64))

    z = jnp.transpose(z2d.reshape(N, H, W, c_mid), (0, 3, 1, 2))
    out = jnp.transpose(out2d.reshape(N, H, W, 64), (0, 3, 1, 2))
    return z, out


def init_params(key, k=0.5):
    """Deterministic synthetic init (PyTorch-like uniform(-1/sqrt(fan_in), ...))."""
    c_mid = int(64 * k)

    def conv_w(kk, cin, cout):
        bound = 1.0 / math.sqrt(cin * 9.0)
        return jax.random.uniform(kk, (3, 3, cin, cout), jnp.float32, -bound, bound)

    k1, k2, k3, k4, k5 = jax.random.split(key, 5)
    w1 = conv_w(k1, 64, 64)
    w2 = conv_w(k2, 64, c_mid)
    w3 = conv_w(k3, c_mid, 64)
    w4 = conv_w(k4, 64, 64)
    bb = 1.0 / math.sqrt(64 * 9.0)
    b4 = jax.random.uniform(k5, (64,), jnp.float32, -bb, bb)

    # HWIO (3,3,Cin,Cout) -> (9*Cin, Cout): rows ordered (ky, kx, cin), matching
    # the in-kernel im2col tap order.
    as_mat = lambda w: w.reshape(9 * w.shape[2], w.shape[3])
    params = {"w1": as_mat(w1), "w2": as_mat(w2), "w3": as_mat(w3),
              "w4": as_mat(w4), "b4": b4}
    params_hwio = {"w1": w1, "w2": w2, "w3": w3, "w4": w4, "b4": b4}
    return params, params_hwio


def ref_forward(x_nchw, pw):
    """Pure-JAX reference (lax.conv) with the same training-mode BN semantics."""
    x = jnp.transpose(x_nchw, (0, 2, 3, 1)).astype(jnp.float32)
    conv = lambda a, w: jax.lax.conv_general_dilated(
        a, w, (1, 1), "SAME", dimension_numbers=("NHWC", "HWIO", "NHWC"))

    def bnrelu(a):
        m = jnp.mean(a, axis=(0, 1, 2), keepdims=True)
        v = jnp.mean((a - m) ** 2, axis=(0, 1, 2), keepdims=True)
        return jnp.maximum((a - m) * jax.lax.rsqrt(v + EPS), 0.0)

    y1 = conv(x, pw["w1"])
    z = conv(bnrelu(y1), pw["w2"])
    h = conv(bnrelu(z), pw["w3"])
    out = conv(bnrelu(h), pw["w4"]) + pw["b4"]
    return jnp.transpose(z, (0, 3, 1, 2)), jnp.transpose(out, (0, 3, 1, 2))


if __name__ == "__main__":
    key = jax.random.PRNGKey(0)
    kx, kp = jax.random.split(key)

    # NCHW input, like the PyTorch module: 64 in-channels is fixed by __init__.
    x = jax.random.normal(kx, (2, 64, 8, 8), jnp.float32)
    params, params_hwio = init_params(kp, k=0.5)

    z, out = jax.jit(paraphraser_forward)(x, params)
    jax.block_until_ready((z, out))

    assert z.shape == (2, 32, 8, 8), z.shape
    assert out.shape == (2, 64, 8, 8), out.shape

    z_ref, out_ref = ref_forward(x, params_hwio)
    assert jnp.allclose(z, z_ref, atol=1e-3, rtol=1e-3), "encoder mismatch"
    assert jnp.allclose(out, out_ref, atol=1e-3, rtol=1e-3), "decoder mismatch"

    print("KERNEL_OK")
</pallas_src>

<mosaic_0001>
module attributes {stable_mosaic.version = 11 : i64} {
  func.func @_paraphraser_kernel(%arg0: memref<2x8x8x64xf32, #tpu.memory_space<vmem>>, %arg1: memref<576x64xf32, #tpu.memory_space<vmem>>, %arg2: memref<576x32xf32, #tpu.memory_space<vmem>>, %arg3: memref<288x64xf32, #tpu.memory_space<vmem>>, %arg4: memref<576x64xf32, #tpu.memory_space<vmem>>, %arg5: memref<1x64xf32, #tpu.memory_space<vmem>>, %arg6: memref<128x32xf32, #tpu.memory_space<vmem>>, %arg7: memref<128x64xf32, #tpu.memory_space<vmem>>, %arg8: memref<2x10x10x64xf32, #tpu.memory_space<vmem>>) attributes {dimension_semantics = [], scalar_prefetch = 0 : i64, scratch_operands = 1 : i64, tpu.core_type = #tpu.core_type<tc>} {
    %cst = arith.constant 0.000000e+00 : f32
    %0 = vector.broadcast %cst : f32 to vector<2x10x10x64xf32>
    %c0 = arith.constant 0 : index
    %c0_0 = arith.constant 0 : index
    %c0_1 = arith.constant 0 : index
    %c0_2 = arith.constant 0 : index
    %1 = vector.load %arg8[%c0, %c0_0, %c0_1, %c0_2] : memref<2x10x10x64xf32, #tpu.memory_space<vmem>>, vector<2x10x10x64xf32>
    tpu.vector_store %arg8[%c0, %c0_0, %c0_1, %c0_2], %0 {strides = array<i32>} : memref<2x10x10x64xf32, #tpu.memory_space<vmem>>, vector<2x10x10x64xf32>,
    %c0_3 = arith.constant 0 : index
    %c0_4 = arith.constant 0 : index
    %c0_5 = arith.constant 0 : index
    %c0_6 = arith.constant 0 : index
    %2 = vector.load %arg0[%c0_3, %c0_4, %c0_5, %c0_6] : memref<2x8x8x64xf32, #tpu.memory_space<vmem>>, vector<2x8x8x64xf32>
    %c0_7 = arith.constant 0 : index
    %c1 = arith.constant 1 : index
    %c1_8 = arith.constant 1 : index
    %c0_9 = arith.constant 0 : index
    %3 = vector.load %arg8[%c0_7, %c1, %c1_8, %c0_9] : memref<2x10x10x64xf32, #tpu.memory_space<vmem>>, vector<2x8x8x64xf32>
    tpu.vector_store %arg8[%c0_7, %c1, %c1_8, %c0_9], %2 {strides = array<i32>} : memref<2x10x10x64xf32, #tpu.memory_space<vmem>>, vector<2x8x8x64xf32>,
    %c0_10 = arith.constant 0 : index
    %c0_11 = arith.constant 0 : index
    %c0_12 = arith.constant 0 : index
    %c0_13 = arith.constant 0 : index
    %4 = vector.load %arg8[%c0_10, %c0_11, %c0_12, %c0_13] : memref<2x10x10x64xf32, #tpu.memory_space<vmem>>, vector<2x8x8x64xf32>
    %c0_14 = arith.constant 0 : index
    %c0_15 = arith.constant 0 : index
    %c1_16 = arith.constant 1 : index
    %c0_17 = arith.constant 0 : index
    %5 = vector.load %arg8[%c0_14, %c0_15, %c1_16, %c0_17] : memref<2x10x10x64xf32, #tpu.memory_space<vmem>>, vector<2x8x8x64xf32>
    %c0_18 = arith.constant 0 : index
    %c0_19 = arith.constant 0 : index
    %c2 = arith.constant 2 : index
    %c0_20 = arith.constant 0 : index
    %6 = vector.load %arg8[%c0_18, %c0_19, %c2, %c0_20] : memref<2x10x10x64xf32, #tpu.memory_space<vmem>>, vector<2x8x8x64xf32>
    %c0_21 = arith.constant 0 : index
    %c1_22 = arith.constant 1 : index
    %c0_23 = arith.constant 0 : index
    %c0_24 = arith.constant 0 : index
    %7 = vector.load %arg8[%c0_21, %c1_22, %c0_23, %c0_24] : memref<2x10x10x64xf32, #tpu.memory_space<vmem>>, vector<2x8x8x64xf32>
    %c0_25 = arith.constant 0 : index
    %c1_26 = arith.constant 1 : index
    %c1_27 = arith.constant 1 : index
    %c0_28 = arith.constant 0 : index
    %8 = vector.load %arg8[%c0_25, %c1_26, %c1_27, %c0_28] : memref<2x10x10x64xf32, #tpu.memory_space<vmem>>, vector<2x8x8x64xf32>
    %c0_29 = arith.constant 0 : index
    %c1_30 = arith.constant 1 : index
    %c2_31 = arith.constant 2 : index
    %c0_32 = arith.constant 0 : index
    %9 = vector.load %arg8[%c0_29, %c1_30, %c2_31, %c0_32] : memref<2x10x10x64xf32, #tpu.memory_space<vmem>>, vector<2x8x8x64xf32>
    %c0_33 = arith.constant 0 : index
    %c2_34 = arith.constant 2 : index
    %c0_35 = arith.constant 0 : index
    %c0_36 = arith.constant 0 : index
    %10 = vector.load %arg8[%c0_33, %c2_34, %c0_35, %c0_36] : memref<2x10x10x64xf32, #tpu.memory_space<vmem>>, vector<2x8x8x64xf32>
    %c0_37 = arith.constant 0 : index
    %c2_38 = arith.constant 2 : index
    %c1_39 = arith.constant 1 : index
    %c0_40 = arith.constant 0 : index
    %11 = vector.load %arg8[%c0_37, %c2_38, %c1_39, %c0_40] : memref<2x10x10x64xf32, #tpu.memory_space<vmem>>, vector<2x8x8x64xf32>
    %c0_41 = arith.constant 0 : index
    %c2_42 = arith.constant 2 : index
    %c2_43 = arith.constant 2 : index
    %c0_44 = arith.constant 0 : index
    %12 = vector.load %arg8[%c0_41, %c2_42, %c2_43, %c0_44] : memref<2x10x10x64xf32, #tpu.memory_space<vmem>>, vector<2x8x8x64xf32>
    %13 = tpu.concatenate %4, %5, %6, %7, %8, %9, %10, %11, %12 in 3 : vector<2x8x8x64xf32>, vector<2x8x8x64xf32>, vector<2x8x8x64xf32>, vector<2x8x8x64xf32>, vector<2x8x8x64xf32>, vector<2x8x8x64xf32>, vector<2x8x8x64xf32>, vector<2x8x8x64xf32>, vector<2x8x8x64xf32> -> vector<2x8x8x576xf32>
    %14 = vector.shape_cast %13 : vector<2x8x8x576xf32> to vector<128x576xf32>
    %c0_45 = arith.constant 0 : index
    %c0_46 = arith.constant 0 : index
    %15 = vector.load %arg1[%c0_45, %c0_46] : memref<576x64xf32, #tpu.memory_space<vmem>>, vector<576x64xf32>
    %cst_47 = arith.constant dense<0.000000e+00> : vector<128x64xf32>
    %16 = tpu.matmul %14, %15, %cst_47 {dimension_numbers = #tpu.dot_dimension_numbers<[1], [0], [0], [1], [0, 0, 1, 1], [], []>} : vector<128x576xf32>, vector<576x64xf32>, vector<128x64xf32> -> vector<128x64xf32>
    %cst_48 = arith.constant dense<0.000000e+00> : vector<64xf32>
    %17 = vector.multi_reduction <add>, %16, %cst_48 [0] : vector<128x64xf32> to vector<64xf32>
    %18 = vector.shape_cast %17 : vector<64xf32> to vector<1x64xf32>
    %cst_49 = arith.constant 7.812500e-03 : f32
    %19 = vector.broadcast %cst_49 : f32 to vector<1x64xf32>
    %20 = arith.mulf %18, %19 : vector<1x64xf32>
    %21 = arith.mulf %16, %16 : vector<128x64xf32>
    %cst_50 = arith.constant dense<0.000000e+00> : vector<64xf32>
    %22 = vector.multi_reduction <add>, %21, %cst_50 [0] : vector<128x64xf32> to vector<64xf32>
    %23 = vector.shape_cast %22 : vector<64xf32> to vector<1x64xf32>
    %cst_51 = arith.constant 7.812500e-03 : f32
    %24 = vector.broadcast %cst_51 : f32 to vector<1x64xf32>
    %25 = arith.mulf %23, %24 : vector<1x64xf32>
    %26 = arith.mulf %20, %20 : vector<1x64xf32>
    %27 = arith.subf %25, %26 : vector<1x64xf32>
    %cst_52 = arith.constant 0.000000e+00 : f32
    %28 = vector.broadcast %cst_52 : f32 to vector<1x64xf32>
    %29 = arith.maximumf %27, %28 : vector<1x64xf32>
    %30 = vector.broadcast %20 : vector<1x64xf32> to vector<128x64xf32>
    %31 = arith.subf %16, %30 : vector<128x64xf32>
    %cst_53 = arith.constant 9.99999974E-6 : f32
    %32 = vector.broadcast %cst_53 : f32 to vector<1x64xf32>
    %33 = arith.addf %29, %32 : vector<1x64xf32>
    %34 = math.rsqrt %33 : vector<1x64xf32>
    %35 = vector.broadcast %34 : vector<1x64xf32> to vector<128x64xf32>
    %36 = arith.mulf %31, %35 : vector<128x64xf32>
    %cst_54 = arith.constant 0.000000e+00 : f32
    %37 = vector.broadcast %cst_54 : f32 to vector<128x64xf32>
    %38 = arith.maximumf %36, %37 : vector<128x64xf32>
    %39 = vector.shape_cast %38 : vector<128x64xf32> to vector<2x8x8x64xf32>
    %c0_55 = arith.constant 0 : index
    %c1_56 = arith.constant 1 : index
    %c1_57 = arith.constant 1 : index
    %c0_58 = arith.constant 0 : index
    %40 = vector.load %arg8[%c0_55, %c1_56, %c1_57, %c0_58] : memref<2x10x10x64xf32, #tpu.memory_space<vmem>>, vector<2x8x8x64xf32>
    tpu.vector_store %arg8[%c0_55, %c1_56, %c1_57, %c0_58], %39 {strides = array<i32>} : memref<2x10x10x64xf32, #tpu.memory_space<vmem>>, vector<2x8x8x64xf32>,
    %c0_59 = arith.constant 0 : index
    %c0_60 = arith.constant 0 : index
    %c0_61 = arith.constant 0 : index
    %c0_62 = arith.constant 0 : index
    %41 = vector.load %arg8[%c0_59, %c0_60, %c0_61, %c0_62] : memref<2x10x10x64xf32, #tpu.memory_space<vmem>>, vector<2x8x8x64xf32>
    %c0_63 = arith.constant 0 : index
    %c0_64 = arith.constant 0 : index
    %c1_65 = arith.constant 1 : index
    %c0_66 = arith.constant 0 : index
    %42 = vector.load %arg8[%c0_63, %c0_64, %c1_65, %c0_66] : memref<2x10x10x64xf32, #tpu.memory_space<vmem>>, vector<2x8x8x64xf32>
    %c0_67 = arith.constant 0 : index
    %c0_68 = arith.constant 0 : index
    %c2_69 = arith.constant 2 : index
    %c0_70 = arith.constant 0 : index
    %43 = vector.load %arg8[%c0_67, %c0_68, %c2_69, %c0_70] : memref<2x10x10x64xf32, #tpu.memory_space<vmem>>, vector<2x8x8x64xf32>
    %c0_71 = arith.constant 0 : index
    %c1_72 = arith.constant 1 : index
    %c0_73 = arith.constant 0 : index
    %c0_74 = arith.constant 0 : index
    %44 = vector.load %arg8[%c0_71, %c1_72, %c0_73, %c0_74] : memref<2x10x10x64xf32, #tpu.memory_space<vmem>>, vector<2x8x8x64xf32>
    %c0_75 = arith.constant 0 : index
    %c1_76 = arith.constant 1 : index
    %c1_77 = arith.constant 1 : index
    %c0_78 = arith.constant 0 : index
    %45 = vector.load %arg8[%c0_75, %c1_76, %c1_77, %c0_78] : memref<2x10x10x64xf32, #tpu.memory_space<vmem>>, vector<2x8x8x64xf32>
    %c0_79 = arith.constant 0 : index
    %c1_80 = arith.constant 1 : index
    %c2_81 = arith.constant 2 : index
    %c0_82 = arith.constant 0 : index
    %46 = vector.load %arg8[%c0_79, %c1_80, %c2_81, %c0_82] : memref<2x10x10x64xf32, #tpu.memory_space<vmem>>, vector<2x8x8x64xf32>
    %c0_83 = arith.constant 0 : index
    %c2_84 = arith.constant 2 : index
    %c0_85 = arith.constant 0 : index
    %c0_86 = arith.constant 0 : index
    %47 = vector.load %arg8[%c0_83, %c2_84, %c0_85, %c0_86] : memref<2x10x10x64xf32, #tpu.memory_space<vmem>>, vector<2x8x8x64xf32>
    %c0_87 = arith.constant 0 : index
    %c2_88 = arith.constant 2 : index
    %c1_89 = arith.constant 1 : index
    %c0_90 = arith.constant 0 : index
    %48 = vector.load %arg8[%c0_87, %c2_88, %c1_89, %c0_90] : memref<2x10x10x64xf32, #tpu.memory_space<vmem>>, vector<2x8x8x64xf32>
    %c0_91 = arith.constant 0 : index
    %c2_92 = arith.constant 2 : index
    %c2_93 = arith.constant 2 : index
    %c0_94 = arith.constant 0 : index
    %49 = vector.load %arg8[%c0_91, %c2_92, %c2_93, %c0_94] : memref<2x10x10x64xf32, #tpu.memory_space<vmem>>, vector<2x8x8x64xf32>
    %50 = tpu.concatenate %41, %42, %43, %44, %45, %46, %47, %48, %49 in 3 : vector<2x8x8x64xf32>, vector<2x8x8x64xf32>, vector<2x8x8x64xf32>, vector<2x8x8x64xf32>, vector<2x8x8x64xf32>, vector<2x8x8x64xf32>, vector<2x8x8x64xf32>, vector<2x8x8x64xf32>, vector<2x8x8x64xf32> -> vector<2x8x8x576xf32>
    %51 = vector.shape_cast %50 : vector<2x8x8x576xf32> to vector<128x576xf32>
    %c0_95 = arith.constant 0 : index
    %c0_96 = arith.constant 0 : index
    %52 = vector.load %arg2[%c0_95, %c0_96] : memref<576x32xf32, #tpu.memory_space<vmem>>, vector<576x32xf32>
    %cst_97 = arith.constant dense<0.000000e+00> : vector<128x32xf32>
    %53 = tpu.matmul %51, %52, %cst_97 {dimension_numbers = #tpu.dot_dimension_numbers<[1], [0], [0], [1], [0, 0, 1, 1], [], []>} : vector<128x576xf32>, vector<576x32xf32>, vector<128x32xf32> -> vector<128x32xf32>
    %c0_98 = arith.constant 0 : index
    %c0_99 = arith.constant 0 : index
    %54 = vector.load %arg6[%c0_98, %c0_99] : memref<128x32xf32, #tpu.memory_space<vmem>>, vector<128x32xf32>
    tpu.vector_store %arg6[%c0_98, %c0_99], %53 {strides = array<i32>} : memref<128x32xf32, #tpu.memory_space<vmem>>, vector<128x32xf32>,
    %cst_100 = arith.constant dense<0.000000e+00> : vector<32xf32>
    %55 = vector.multi_reduction <add>, %53, %cst_100 [0] : vector<128x32xf32> to vector<32xf32>
    %56 = vector.shape_cast %55 : vector<32xf32> to vector<1x32xf32>
    %cst_101 = arith.constant 7.812500e-03 : f32
    %57 = vector.broadcast %cst_101 : f32 to vector<1x32xf32>
    %58 = arith.mulf %56, %57 : vector<1x32xf32>
    %59 = arith.mulf %53, %53 : vector<128x32xf32>
    %cst_102 = arith.constant dense<0.000000e+00> : vector<32xf32>
    %60 = vector.multi_reduction <add>, %59, %cst_102 [0] : vector<128x32xf32> to vector<32xf32>
    %61 = vector.shape_cast %60 : vector<32xf32> to vector<1x32xf32>
    %cst_103 = arith.constant 7.812500e-03 : f32
    %62 = vector.broadcast %cst_103 : f32 to vector<1x32xf32>
    %63 = arith.mulf %61, %62 : vector<1x32xf32>
    %64 = arith.mulf %58, %58 : vector<1x32xf32>
    %65 = arith.subf %63, %64 : vector<1x32xf32>
    %cst_104 = arith.constant 0.000000e+00 : f32
    %66 = vector.broadcast %cst_104 : f32 to vector<1x32xf32>
    %67 = arith.maximumf %65, %66 : vector<1x32xf32>
    %68 = vector.broadcast %58 : vector<1x32xf32> to vector<128x32xf32>
    %69 = arith.subf %53, %68 : vector<128x32xf32>
    %cst_105 = arith.constant 9.99999974E-6 : f32
    %70 = vector.broadcast %cst_105 : f32 to vector<1x32xf32>
    %71 = arith.addf %67, %70 : vector<1x32xf32>
    %72 = math.rsqrt %71 : vector<1x32xf32>
    %73 = vector.broadcast %72 : vector<1x32xf32> to vector<128x32xf32>
    %74 = arith.mulf %69, %73 : vector<128x32xf32>
    %cst_106 = arith.constant 0.000000e+00 : f32
    %75 = vector.broadcast %cst_106 : f32 to vector<128x32xf32>
    %76 = arith.maximumf %74, %75 : vector<128x32xf32>
    %77 = vector.shape_cast %76 : vector<128x32xf32> to vector<2x8x8x32xf32>
    %c0_107 = arith.constant 0 : index
    %c1_108 = arith.constant 1 : index
    %c1_109 = arith.constant 1 : index
    %c0_110 = arith.constant 0 : index
    %78 = vector.load %arg8[%c0_107, %c1_108, %c1_109, %c0_110] : memref<2x10x10x64xf32, #tpu.memory_space<vmem>>, vector<2x8x8x32xf32>
    tpu.vector_store %arg8[%c0_107, %c1_108, %c1_109, %c0_110], %77 {strides = array<i32>} : memref<2x10x10x64xf32, #tpu.memory_space<vmem>>, vector<2x8x8x32xf32>,
    %c0_111 = arith.constant 0 : index
    %c0_112 = arith.constant 0 : index
    %c0_113 = arith.constant 0 : index
    %c0_114 = arith.constant 0 : index
    %79 = vector.load %arg8[%c0_111, %c0_112, %c0_113, %c0_114] : memref<2x10x10x64xf32, #tpu.memory_space<vmem>>, vector<2x8x8x32xf32>
    %c0_115 = arith.constant 0 : index
    %c0_116 = arith.constant 0 : index
    %c1_117 = arith.constant 1 : index
    %c0_118 = arith.constant 0 : index
    %80 = vector.load %arg8[%c0_115, %c0_116, %c1_117, %c0_118] : memref<2x10x10x64xf32, #tpu.memory_space<vmem>>, vector<2x8x8x32xf32>
    %c0_119 = arith.constant 0 : index
    %c0_120 = arith.constant 0 : index
    %c2_121 = arith.constant 2 : index
    %c0_122 = arith.constant 0 : index
    %81 = vector.load %arg8[%c0_119, %c0_120, %c2_121, %c0_122] : memref<2x10x10x64xf32, #tpu.memory_space<vmem>>, vector<2x8x8x32xf32>
    %c0_123 = arith.constant 0 : index
    %c1_124 = arith.constant 1 : index
    %c0_125 = arith.constant 0 : index
    %c0_126 = arith.constant 0 : index
    %82 = vector.load %arg8[%c0_123, %c1_124, %c0_125, %c0_126] : memref<2x10x10x64xf32, #tpu.memory_space<vmem>>, vector<2x8x8x32xf32>
    %c0_127 = arith.constant 0 : index
    %c1_128 = arith.constant 1 : index
    %c1_129 = arith.constant 1 : index
    %c0_130 = arith.constant 0 : index
    %83 = vector.load %arg8[%c0_127, %c1_128, %c1_129, %c0_130] : memref<2x10x10x64xf32, #tpu.memory_space<vmem>>, vector<2x8x8x32xf32>
    %c0_131 = arith.constant 0 : index
    %c1_132 = arith.constant 1 : index
    %c2_133 = arith.constant 2 : index
    %c0_134 = arith.constant 0 : index
    %84 = vector.load %arg8[%c0_131, %c1_132, %c2_133, %c0_134] : memref<2x10x10x64xf32, #tpu.memory_space<vmem>>, vector<2x8x8x32xf32>
    %c0_135 = arith.constant 0 : index
    %c2_136 = arith.constant 2 : index
    %c0_137 = arith.constant 0 : index
    %c0_138 = arith.constant 0 : index
    %85 = vector.load %arg8[%c0_135, %c2_136, %c0_137, %c0_138] : memref<2x10x10x64xf32, #tpu.memory_space<vmem>>, vector<2x8x8x32xf32>
    %c0_139 = arith.constant 0 : index
    %c2_140 = arith.constant 2 : index
    %c1_141 = arith.constant 1 : index
    %c0_142 = arith.constant 0 : index
    %86 = vector.load %arg8[%c0_139, %c2_140, %c1_141, %c0_142] : memref<2x10x10x64xf32, #tpu.memory_space<vmem>>, vector<2x8x8x32xf32>
    %c0_143 = arith.constant 0 : index
    %c2_144 = arith.constant 2 : index
    %c2_145 = arith.constant 2 : index
    %c0_146 = arith.constant 0 : index
    %87 = vector.load %arg8[%c0_143, %c2_144, %c2_145, %c0_146] : memref<2x10x10x64xf32, #tpu.memory_space<vmem>>, vector<2x8x8x32xf32>
    %88 = tpu.concatenate %79, %80, %81, %82, %83, %84, %85, %86, %87 in 3 : vector<2x8x8x32xf32>, vector<2x8x8x32xf32>, vector<2x8x8x32xf32>, vector<2x8x8x32xf32>, vector<2x8x8x32xf32>, vector<2x8x8x32xf32>, vector<2x8x8x32xf32>, vector<2x8x8x32xf32>, vector<2x8x8x32xf32> -> vector<2x8x8x288xf32>
    %89 = vector.shape_cast %88 : vector<2x8x8x288xf32> to vector<128x288xf32>
    %c0_147 = arith.constant 0 : index
    %c0_148 = arith.constant 0 : index
    %90 = vector.load %arg3[%c0_147, %c0_148] : memref<288x64xf32, #tpu.memory_space<vmem>>, vector<288x64xf32>
    %cst_149 = arith.constant dense<0.000000e+00> : vector<128x64xf32>
    %91 = tpu.matmul %89, %90, %cst_149 {dimension_numbers = #tpu.dot_dimension_numbers<[1], [0], [0], [1], [0, 0, 1, 1], [], []>} : vector<128x288xf32>, vector<288x64xf32>, vector<128x64xf32> -> vector<128x64xf32>
    %cst_150 = arith.constant dense<0.000000e+00> : vector<64xf32>
    %92 = vector.multi_reduction <add>, %91, %cst_150 [0] : vector<128x64xf32> to vector<64xf32>
    %93 = vector.shape_cast %92 : vector<64xf32> to vector<1x64xf32>
    %cst_151 = arith.constant 7.812500e-03 : f32
    %94 = vector.broadcast %cst_151 : f32 to vector<1x64xf32>
    %95 = arith.mulf %93, %94 : vector<1x64xf32>
    %96 = arith.mulf %91, %91 : vector<128x64xf32>
    %cst_152 = arith.constant dense<0.000000e+00> : vector<64xf32>
    %97 = vector.multi_reduction <add>, %96, %cst_152 [0] : vector<128x64xf32> to vector<64xf32>
    %98 = vector.shape_cast %97 : vector<64xf32> to vector<1x64xf32>
    %cst_153 = arith.constant 7.812500e-03 : f32
    %99 = vector.broadcast %cst_153 : f32 to vector<1x64xf32>
    %100 = arith.mulf %98, %99 : vector<1x64xf32>
    %101 = arith.mulf %95, %95 : vector<1x64xf32>
    %102 = arith.subf %100, %101 : vector<1x64xf32>
    %cst_154 = arith.constant 0.000000e+00 : f32
    %103 = vector.broadcast %cst_154 : f32 to vector<1x64xf32>
    %104 = arith.maximumf %102, %103 : vector<1x64xf32>
    %105 = vector.broadcast %95 : vector<1x64xf32> to vector<128x64xf32>
    %106 = arith.subf %91, %105 : vector<128x64xf32>
    %cst_155 = arith.constant 9.99999974E-6 : f32
    %107 = vector.broadcast %cst_155 : f32 to vector<1x64xf32>
    %108 = arith.addf %104, %107 : vector<1x64xf32>
    %109 = math.rsqrt %108 : vector<1x64xf32>
    %110 = vector.broadcast %109 : vector<1x64xf32> to vector<128x64xf32>
    %111 = arith.mulf %106, %110 : vector<128x64xf32>
    %cst_156 = arith.constant 0.000000e+00 : f32
    %112 = vector.broadcast %cst_156 : f32 to vector<128x64xf32>
    %113 = arith.maximumf %111, %112 : vector<128x64xf32>
    %114 = vector.shape_cast %113 : vector<128x64xf32> to vector<2x8x8x64xf32>
    %c0_157 = arith.constant 0 : index
    %c1_158 = arith.constant 1 : index
    %c1_159 = arith.constant 1 : index
    %c0_160 = arith.constant 0 : index
    %115 = vector.load %arg8[%c0_157, %c1_158, %c1_159, %c0_160] : memref<2x10x10x64xf32, #tpu.memory_space<vmem>>, vector<2x8x8x64xf32>
    tpu.vector_store %arg8[%c0_157, %c1_158, %c1_159, %c0_160], %114 {strides = array<i32>} : memref<2x10x10x64xf32, #tpu.memory_space<vmem>>, vector<2x8x8x64xf32>,
    %c0_161 = arith.constant 0 : index
    %c0_162 = arith.constant 0 : index
    %c0_163 = arith.constant 0 : index
    %c0_164 = arith.constant 0 : index
    %116 = vector.load %arg8[%c0_161, %c0_162, %c0_163, %c0_164] : memref<2x10x10x64xf32, #tpu.memory_space<vmem>>, vector<2x8x8x64xf32>
    %c0_165 = arith.constant 0 : index
    %c0_166 = arith.constant 0 : index
    %c1_167 = arith.constant 1 : index
    %c0_168 = arith.constant 0 : index
    %117 = vector.load %arg8[%c0_165, %c0_166, %c1_167, %c0_168] : memref<2x10x10x64xf32, #tpu.memory_space<vmem>>, vector<2x8x8x64xf32>
    %c0_169 = arith.constant 0 : index
    %c0_170 = arith.constant 0 : index
    %c2_171 = arith.constant 2 : index
    %c0_172 = arith.constant 0 : index
    %118 = vector.load %arg8[%c0_169, %c0_170, %c2_171, %c0_172] : memref<2x10x10x64xf32, #tpu.memory_space<vmem>>, vector<2x8x8x64xf32>
    %c0_173 = arith.constant 0 : index
    %c1_174 = arith.constant 1 : index
    %c0_175 = arith.constant 0 : index
    %c0_176 = arith.constant 0 : index
    %119 = vector.load %arg8[%c0_173, %c1_174, %c0_175, %c0_176] : memref<2x10x10x64xf32, #tpu.memory_space<vmem>>, vector<2x8x8x64xf32>
    %c0_177 = arith.constant 0 : index
    %c1_178 = arith.constant 1 : index
    %c1_179 = arith.constant 1 : index
    %c0_180 = arith.constant 0 : index
    %120 = vector.load %arg8[%c0_177, %c1_178, %c1_179, %c0_180] : memref<2x10x10x64xf32, #tpu.memory_space<vmem>>, vector<2x8x8x64xf32>
    %c0_181 = arith.constant 0 : index
    %c1_182 = arith.constant 1 : index
    %c2_183 = arith.constant 2 : index
    %c0_184 = arith.constant 0 : index
    %121 = vector.load %arg8[%c0_181, %c1_182, %c2_183, %c0_184] : memref<2x10x10x64xf32, #tpu.memory_space<vmem>>, vector<2x8x8x64xf32>
    %c0_185 = arith.constant 0 : index
    %c2_186 = arith.constant 2 : index
    %c0_187 = arith.constant 0 : index
    %c0_188 = arith.constant 0 : index
    %122 = vector.load %arg8[%c0_185, %c2_186, %c0_187, %c0_188] : memref<2x10x10x64xf32, #tpu.memory_space<vmem>>, vector<2x8x8x64xf32>
    %c0_189 = arith.constant 0 : index
    %c2_190 = arith.constant 2 : index
    %c1_191 = arith.constant 1 : index
    %c0_192 = arith.constant 0 : index
    %123 = vector.load %arg8[%c0_189, %c2_190, %c1_191, %c0_192] : memref<2x10x10x64xf32, #tpu.memory_space<vmem>>, vector<2x8x8x64xf32>
    %c0_193 = arith.constant 0 : index
    %c2_194 = arith.constant 2 : index
    %c2_195 = arith.constant 2 : index
    %c0_196 = arith.constant 0 : index
    %124 = vector.load %arg8[%c0_193, %c2_194, %c2_195, %c0_196] : memref<2x10x10x64xf32, #tpu.memory_space<vmem>>, vector<2x8x8x64xf32>
    %125 = tpu.concatenate %116, %117, %118, %119, %120, %121, %122, %123, %124 in 3 : vector<2x8x8x64xf32>, vector<2x8x8x64xf32>, vector<2x8x8x64xf32>, vector<2x8x8x64xf32>, vector<2x8x8x64xf32>, vector<2x8x8x64xf32>, vector<2x8x8x64xf32>, vector<2x8x8x64xf32>, vector<2x8x8x64xf32> -> vector<2x8x8x576xf32>
    %126 = vector.shape_cast %125 : vector<2x8x8x576xf32> to vector<128x576xf32>
    %c0_197 = arith.constant 0 : index
    %c0_198 = arith.constant 0 : index
    %127 = vector.load %arg4[%c0_197, %c0_198] : memref<576x64xf32, #tpu.memory_space<vmem>>, vector<576x64xf32>
    %cst_199 = arith.constant dense<0.000000e+00> : vector<128x64xf32>
    %128 = tpu.matmul %126, %127, %cst_199 {dimension_numbers = #tpu.dot_dimension_numbers<[1], [0], [0], [1], [0, 0, 1, 1], [], []>} : vector<128x576xf32>, vector<576x64xf32>, vector<128x64xf32> -> vector<128x64xf32>
    %c0_200 = arith.constant 0 : index
    %c0_201 = arith.constant 0 : index
    %129 = vector.load %arg5[%c0_200, %c0_201] : memref<1x64xf32, #tpu.memory_space<vmem>>, vector<1x64xf32>
    %130 = vector.broadcast %129 : vector<1x64xf32> to vector<128x64xf32>
    %131 = arith.addf %128, %130 : vector<128x64xf32>
    %c0_202 = arith.constant 0 : index
    %c0_203 = arith.constant 0 : index
    %132 = vector.load %arg7[%c0_202, %c0_203] : memref<128x64xf32, #tpu.memory_space<vmem>>, vector<128x64xf32>
    tpu.vector_store %arg7[%c0_202, %c0_203], %131 {strides = array<i32>} : memref<128x64xf32, #tpu.memory_space<vmem>>, vector<128x64xf32>,
    return
  }
}

</mosaic_0001>

<llo_original>
// kernel: paraphraser_forward.1
$region0: #{paraphraser_forward.1}
  #allocation0 [shape = 'u32[]', space=smem, size = 0x4, offset = 0x4, fixed_abs, tag = 'smem constant byte address 0x4 - core index']
  #allocation1 [shape = 'u32[144,128]{1,0:T(1,128)}', space=vmem, size = 0x12000, scoped, tag = 'internal scratch']
  #allocation2 [shape = 'f32[2,10,10,64]{3,2,1,0:T(8,128)}', space=vmem, size = 0x28000, scoped, tag = 'scratch operand']
  %s0 = inlined_call_operand.vmem [shape: f32[2,8,8,64], index: 0, kind: input, shape index: {}]
  %s1 = inlined_call_operand.vmem [shape: f32[576,64], index: 1, kind: input, shape index: {}]
  %s2 = inlined_call_operand.vmem [shape: f32[576,32], index: 2, kind: input, shape index: {}]
  %s3 = inlined_call_operand.vmem [shape: f32[288,64], index: 3, kind: input, shape index: {}]
  %s4 = inlined_call_operand.vmem [shape: f32[576,64], index: 4, kind: input, shape index: {}]
  %s5 = inlined_call_operand.vmem [shape: f32[1,64], index: 5, kind: input, shape index: {}]
  %s6 = inlined_call_operand.hbm [shape: f32[128,32], index: 6, kind: output, shape index: {0}]
  %s7 = inlined_call_operand.hbm [shape: f32[128,64], index: 7, kind: output, shape index: {1}]
  %8 = xla_tuple %s6, %s7
  %s9 = sld [smem:[#allocation0]]
  $region42: #{paraphraser_forward.1} parent=0
    _
  %s11 = ssub.s32 1, %s9
  %s12 = scalar_select 0, %s11, %s9
  $region1: #{paraphraser_forward.1} parent=0
    #allocation3 [shape = 'u8[65536]{0}', space=vmem, size = 0x10000, scoped, tag = 'output window, operand 0, single buffered']
    #allocation4 [shape = 's32[1]{0}', space=sflag, size = 0x4, scoped, tag = 'scoped memory for paraphraser_forward.1']
    #allocation5 [shape = 'u8[65536]{0}', space=vmem, size = 0x10000, scoped, tag = 'output window, operand 1, single buffered']
    #allocation6 [shape = 's32[1]{0}', space=sflag, size = 0x4, scoped, tag = 'scoped memory for paraphraser_forward.1']
    %13 = vsyncpa [#allocation4], 0
    %14 = vsyncpa [#allocation6], 0
    // Predicated region
    $region2: #{paraphraser_forward.1} parent=1 // pred_check
      _
    $region3: #{paraphraser_forward.1} parent=1 // pred_check_branch
      %16 = sbr.rel (0) target = $region5
    $region4: #{paraphraser_forward.1} parent=1 // pred_region
      _
    $region5: #{paraphraser_forward.1} parent=1 // pred_fallthru
      _
    // Predicated region
    $region6: #{paraphraser_forward.1} parent=1 // pred_check
      _
    $region7: #{paraphraser_forward.1} parent=1 // pred_check_branch
      %18 = sbr.rel (0) target = $region9
    $region8: #{paraphraser_forward.1} parent=1 // pred_region
      _
    $region9: #{paraphraser_forward.1} parent=1 // pred_fallthru
      _
    // Predicated region
    $region10: #{paraphraser_forward.1} parent=1 // pred_check
      _
    $region11: #{paraphraser_forward.1} parent=1 // pred_check_branch
      %20 = sbr.rel (0) target = $region13
    $region12: #{paraphraser_forward.1} parent=1 // pred_region
      _
    $region13: #{paraphraser_forward.1} parent=1 // pred_fallthru
      _
    // Predicated region
    $region14: #{paraphraser_forward.1} parent=1 // pred_check
      _
    $region15: #{paraphraser_forward.1} parent=1 // pred_check_branch
      %22 = sbr.rel (0) target = $region17
    $region16: #{paraphraser_forward.1} parent=1 // pred_region
      _
    $region17: #{paraphraser_forward.1} parent=1 // pred_fallthru
      _
    // Predicated region
    $region18: #{paraphraser_forward.1} parent=1 // pred_check
      _
    $region19: #{paraphraser_forward.1} parent=1 // pred_check_branch
      %24 = sbr.rel (0) target = $region21
    $region20: #{paraphraser_forward.1} parent=1 // pred_region
      _
    $region21: #{paraphraser_forward.1} parent=1 // pred_fallthru
      _
    // Predicated region
    $region22: #{paraphraser_forward.1} parent=1 // pred_check
      _
    $region23: #{paraphraser_forward.1} parent=1 // pred_check_branch
      %26 = sbr.rel (0) target = $region25
    $region24: #{paraphraser_forward.1} parent=1 // pred_region
      _
    $region25: #{paraphraser_forward.1} parent=1 // pred_fallthru
      _
    %vm27 = vcmask 523264
    %28 = vst.msk [vmem:[#allocation2] sm:$0xff] %vm27, 0.0
    %vm29 = vcmask 517120
    %30 = vst.msk [vmem:[#allocation2 + $0x8] sm:$0x3] %vm29, 0.0
    %31 = vst.msk [vmem:[#allocation2 + $0x10] sm:$0xff] %vm27, 0.0
    %32 = vst.msk [vmem:[#allocation2 + $0x18] sm:$0x3] %vm29, 0.0
    %33 = vst.msk [vmem:[#allocation2 + $0x20] sm:$0xff] %vm27, 0.0
    %34 = vst.msk [vmem:[#allocation2 + $0x28] sm:$0x3] %vm29, 0.0
    %35 = vst.msk [vmem:[#allocation2 + $0x30] sm:$0xff] %vm27, 0.0
    %36 = vst.msk [vmem:[#allocation2 + $0x38] sm:$0x3] %vm29, 0.0
    %37 = vst.msk [vmem:[#allocation2 + $0x40] sm:$0xff] %vm27, 0.0
    %38 = vst.msk [vmem:[#allocation2 + $0x48] sm:$0x3] %vm29, 0.0
    %39 = vst.msk [vmem:[#allocation2 + $0x50] sm:$0xff] %vm27, 0.0
    %40 = vst.msk [vmem:[#allocation2 + $0x58] sm:$0x3] %vm29, 0.0
    %41 = vst.msk [vmem:[#allocation2 + $0x60] sm:$0xff] %vm27, 0.0
    %42 = vst.msk [vmem:[#allocation2 + $0x68] sm:$0x3] %vm29, 0.0
    %43 = vst.msk [vmem:[#allocation2 + $0x70] sm:$0xff] %vm27, 0.0
    %44 = vst.msk [vmem:[#allocation2 + $0x78] sm:$0x3] %vm29, 0.0
    %45 = vst.msk [vmem:[#allocation2 + $0x80] sm:$0xff] %vm27, 0.0
    %46 = vst.msk [vmem:[#allocation2 + $0x88] sm:$0x3] %vm29, 0.0
    %47 = vst.msk [vmem:[#allocation2 + $0x90] sm:$0xff] %vm27, 0.0
    %48 = vst.msk [vmem:[#allocation2 + $0x98] sm:$0x3] %vm29, 0.0
    %49 = vst.msk [vmem:[#allocation2 + $0xa0] sm:$0xff] %vm27, 0.0
    %50 = vst.msk [vmem:[#allocation2 + $0xa8] sm:$0x3] %vm29, 0.0
    %51 = vst.msk [vmem:[#allocation2 + $0xb0] sm:$0xff] %vm27, 0.0
    %52 = vst.msk [vmem:[#allocation2 + $0xb8] sm:$0x3] %vm29, 0.0
    %53 = vst.msk [vmem:[#allocation2 + $0xc0] sm:$0xff] %vm27, 0.0
    %54 = vst.msk [vmem:[#allocation2 + $0xc8] sm:$0x3] %vm29, 0.0
    %55 = vst.msk [vmem:[#allocation2 + $0xd0] sm:$0xff] %vm27, 0.0
    %56 = vst.msk [vmem:[#allocation2 + $0xd8] sm:$0x3] %vm29, 0.0
    %57 = vst.msk [vmem:[#allocation2 + $0xe0] sm:$0xff] %vm27, 0.0
    %58 = vst.msk [vmem:[#allocation2 + $0xe8] sm:$0x3] %vm29, 0.0
    %59 = vst.msk [vmem:[#allocation2 + $0xf0] sm:$0xff] %vm27, 0.0
    %60 = vst.msk [vmem:[#allocation2 + $0xf8] sm:$0x3] %vm29, 0.0
    %61 = vst.msk [vmem:[#allocation2 + $0x100] sm:$0xff] %vm27, 0.0
    %62 = vst.msk [vmem:[#allocation2 + $0x108] sm:$0x3] %vm29, 0.0
    %63 = vst.msk [vmem:[#allocation2 + $0x110] sm:$0xff] %vm27, 0.0
    %64 = vst.msk [vmem:[#allocation2 + $0x118] sm:$0x3] %vm29, 0.0
    %65 = vst.msk [vmem:[#allocation2 + $0x120] sm:$0xff] %vm27, 0.0
    %66 = vst.msk [vmem:[#allocation2 + $0x128] sm:$0x3] %vm29, 0.0
    %67 = vst.msk [vmem:[#allocation2 + $0x130] sm:$0xff] %vm27, 0.0
    %68 = vst.msk [vmem:[#allocation2 + $0x138] sm:$0x3] %vm29, 0.0
    %v69 = vld [vmem:[%s0] sm:$0xff]
    %v70 = vld [vmem:[%s0 + $0x8] sm:$0xff]
    %v71 = vld [vmem:[%s0 + $0x10] sm:$0xff]
    %v72 = vld [vmem:[%s0 + $0x18] sm:$0xff]
    %v73 = vld [vmem:[%s0 + $0x20] sm:$0xff]
    %v74 = vld [vmem:[%s0 + $0x28] sm:$0xff]
    %v75 = vld [vmem:[%s0 + $0x30] sm:$0xff]
    %v76 = vld [vmem:[%s0 + $0x38] sm:$0xff]
    %v77 = vld [vmem:[%s0 + $0x40] sm:$0xff]
    %v78 = vld [vmem:[%s0 + $0x48] sm:$0xff]
    %v79 = vld [vmem:[%s0 + $0x50] sm:$0xff]
    %v80 = vld [vmem:[%s0 + $0x58] sm:$0xff]
    %v81 = vld [vmem:[%s0 + $0x60] sm:$0xff]
    %v82 = vld [vmem:[%s0 + $0x68] sm:$0xff]
    %v83 = vld [vmem:[%s0 + $0x70] sm:$0xff]
    %v84 = vld [vmem:[%s0 + $0x78] sm:$0xff]
    %s85 = scalar_lea.vmem [#allocation2], 16
    %86 = vst.msk [vmem:[%s85 + $0x1] sm:$0xff] %vm27, %v69
    %87 = vst.msk [vmem:[%s85 + $0x11] sm:$0xff] %vm27, %v70
    %88 = vst.msk [vmem:[%s85 + $0x21] sm:$0xff] %vm27, %v71
    %89 = vst.msk [vmem:[%s85 + $0x31] sm:$0xff] %vm27, %v72
    %90 = vst.msk [vmem:[%s85 + $0x41] sm:$0xff] %vm27, %v73
    %91 = vst.msk [vmem:[%s85 + $0x51] sm:$0xff] %vm27, %v74
    %92 = vst.msk [vmem:[%s85 + $0x61] sm:$0xff] %vm27, %v75
    %93 = vst.msk [vmem:[%s85 + $0x71] sm:$0xff] %vm27, %v76
    %94 = vst.msk [vmem:[%s85 + $0xa1] sm:$0xff] %vm27, %v77
    %95 = vst.msk [vmem:[%s85 + $0xb1] sm:$0xff] %vm27, %v78
    %96 = vst.msk [vmem:[%s85 + $0xc1] sm:$0xff] %vm27, %v79
    %97 = vst.msk [vmem:[%s85 + $0xd1] sm:$0xff] %vm27, %v80
    %98 = vst.msk [vmem:[%s85 + $0xe1] sm:$0xff] %vm27, %v81
    %99 = vst.msk [vmem:[%s85 + $0xf1] sm:$0xff] %vm27, %v82
    %100 = vst.msk [vmem:[%s85 + $0x101] sm:$0xff] %vm27, %v83
    %101 = vst.msk [vmem:[%s85 + $0x111] sm:$0xff] %vm27, %v84
    %v102 = vld [vmem:[#allocation2] sm:$0xff]
    %v103 = vld [vmem:[#allocation2 + $0x10] sm:$0xff]
    %v104 = vld [vmem:[#allocation2 + $0x20] sm:$0xff]
    %v105 = vld [vmem:[#allocation2 + $0x30] sm:$0xff]
    %v106 = vld [vmem:[#allocation2 + $0x40] sm:$0xff]
    %v107 = vld [vmem:[#allocation2 + $0x50] sm:$0xff]
    %v108 = vld [vmem:[#allocation2 + $0x60] sm:$0xff]
    %v109 = vld [vmem:[#allocation2 + $0x70] sm:$0xff]
    %v110 = vld [vmem:[#allocation2 + $0xa0] sm:$0xff]
    %v111 = vld [vmem:[#allocation2 + $0xb0] sm:$0xff]
    %v112 = vld [vmem:[#allocation2 + $0xc0] sm:$0xff]
    %v113 = vld [vmem:[#allocation2 + $0xd0] sm:$0xff]
    %v114 = vld [vmem:[#allocation2 + $0xe0] sm:$0xff]
    %v115 = vld [vmem:[#allocation2 + $0xf0] sm:$0xff]
    %v116 = vld [vmem:[#allocation2 + $0x100] sm:$0xff]
    %v117 = vld [vmem:[#allocation2 + $0x110] sm:$0xff]
    %v118 = vld [vmem:[#allocation2 + $0x1] sm:$0xff]
    %v119 = vld [vmem:[#allocation2 + $0x11] sm:$0xff]
    %v120 = vld [vmem:[#allocation2 + $0x21] sm:$0xff]
    %v121 = vld [vmem:[#allocation2 + $0x31] sm:$0xff]
    %v122 = vld [vmem:[#allocation2 + $0x41] sm:$0xff]
    %v123 = vld [vmem:[#allocation2 + $0x51] sm:$0xff]
    %v124 = vld [vmem:[#allocation2 + $0x61] sm:$0xff]
    %v125 = vld [vmem:[#allocation2 + $0x71] sm:$0xff]
    %v126 = vld [vmem:[#allocation2 + $0xa1] sm:$0xff]
    %v127 = vld [vmem:[#allocation2 + $0xb1] sm:$0xff]
    %v128 = vld [vmem:[#allocation2 + $0xc1] sm:$0xff]
    %v129 = vld [vmem:[#allocation2 + $0xd1] sm:$0xff]
    %v130 = vld [vmem:[#allocation2 + $0xe1] sm:$0xff]
    %v131 = vld [vmem:[#allocation2 + $0xf1] sm:$0xff]
    %v132 = vld [vmem:[#allocation2 + $0x101] sm:$0xff]
    %v133 = vld [vmem:[#allocation2 + $0x111] sm:$0xff]
    %v134 = vld [vmem:[#allocation2 + $0x2] sm:$0xff]
    %v135 = vld [vmem:[#allocation2 + $0x12] sm:$0xff]
    %v136 = vld [vmem:[#allocation2 + $0x22] sm:$0xff]
    %v137 = vld [vmem:[#allocation2 + $0x32] sm:$0xff]
    %v138 = vld [vmem:[#allocation2 + $0x42] sm:$0xff]
    %v139 = vld [vmem:[#allocation2 + $0x52] sm:$0xff]
    %v140 = vld [vmem:[#allocation2 + $0x62] sm:$0xff]
    %v141 = vld [vmem:[#allocation2 + $0x72] sm:$0xff]
    %v142 = vld [vmem:[#allocation2 + $0xa2] sm:$0xff]
    %v143 = vld [vmem:[#allocation2 + $0xb2] sm:$0xff]
    %v144 = vld [vmem:[#allocation2 + $0xc2] sm:$0xff]
    %v145 = vld [vmem:[#allocation2 + $0xd2] sm:$0xff]
    %v146 = vld [vmem:[#allocation2 + $0xe2] sm:$0xff]
    %v147 = vld [vmem:[#allocation2 + $0xf2] sm:$0xff]
    %v148 = vld [vmem:[#allocation2 + $0x102] sm:$0xff]
    %v149 = vld [vmem:[#allocation2 + $0x112] sm:$0xff]
    %v150 = vld [vmem:[%s85] sm:$0xff]
    %v151 = vld [vmem:[%s85 + $0x10] sm:$0xff]
    %v152 = vld [vmem:[%s85 + $0x20] sm:$0xff]
    %v153 = vld [vmem:[%s85 + $0x30] sm:$0xff]
    %v154 = vld [vmem:[%s85 + $0x40] sm:$0xff]
    %v155 = vld [vmem:[%s85 + $0x50] sm:$0xff]
    %v156 = vld [vmem:[%s85 + $0x60] sm:$0xff]
    %v157 = vld [vmem:[%s85 + $0x70] sm:$0xff]
    %v158 = vld [vmem:[%s85 + $0xa0] sm:$0xff]
    %v159 = vld [vmem:[%s85 + $0xb0] sm:$0xff]
    %v160 = vld [vmem:[%s85 + $0xc0] sm:$0xff]
    %v161 = vld [vmem:[%s85 + $0xd0] sm:$0xff]
    %v162 = vld [vmem:[%s85 + $0xe0] sm:$0xff]
    %v163 = vld [vmem:[%s85 + $0xf0] sm:$0xff]
    %v164 = vld [vmem:[%s85 + $0x100] sm:$0xff]
    %v165 = vld [vmem:[%s85 + $0x110] sm:$0xff]
    %v166 = vld [vmem:[%s85 + $0x1] sm:$0xff]
    %v167 = vld [vmem:[%s85 + $0x11] sm:$0xff]
    %v168 = vld [vmem:[%s85 + $0x21] sm:$0xff]
    %v169 = vld [vmem:[%s85 + $0x31] sm:$0xff]
    %v170 = vld [vmem:[%s85 + $0x41] sm:$0xff]
    %v171 = vld [vmem:[%s85 + $0x51] sm:$0xff]
    %v172 = vld [vmem:[%s85 + $0x61] sm:$0xff]
    %v173 = vld [vmem:[%s85 + $0x71] sm:$0xff]
    %v174 = vld [vmem:[%s85 + $0xa1] sm:$0xff]
    %v175 = vld [vmem:[%s85 + $0xb1] sm:$0xff]
    %v176 = vld [vmem:[%s85 + $0xc1] sm:$0xff]
    %v177 = vld [vmem:[%s85 + $0xd1] sm:$0xff]
    %v178 = vld [vmem:[%s85 + $0xe1] sm:$0xff]
    %v179 = vld [vmem:[%s85 + $0xf1] sm:$0xff]
    %v180 = vld [vmem:[%s85 + $0x101] sm:$0xff]
    %v181 = vld [vmem:[%s85 + $0x111] sm:$0xff]
    %v182 = vld [vmem:[%s85 + $0x2] sm:$0xff]
    %v183 = vld [vmem:[%s85 + $0x12] sm:$0xff]
    %v184 = vld [vmem:[%s85 + $0x22] sm:$0xff]
    %v185 = vld [vmem:[%s85 + $0x32] sm:$0xff]
    %v186 = vld [vmem:[%s85 + $0x42] sm:$0xff]
    %v187 = vld [vmem:[%s85 + $0x52] sm:$0xff]
    %v188 = vld [vmem:[%s85 + $0x62] sm:$0xff]
    %v189 = vld [vmem:[%s85 + $0x72] sm:$0xff]
    %v190 = vld [vmem:[%s85 + $0xa2] sm:$0xff]
    %v191 = vld [vmem:[%s85 + $0xb2] sm:$0xff]
    %v192 = vld [vmem:[%s85 + $0xc2] sm:$0xff]
    %v193 = vld [vmem:[%s85 + $0xd2] sm:$0xff]
    %v194 = vld [vmem:[%s85 + $0xe2] sm:$0xff]
    %v195 = vld [vmem:[%s85 + $0xf2] sm:$0xff]
    %v196 = vld [vmem:[%s85 + $0x102] sm:$0xff]
    %v197 = vld [vmem:[%s85 + $0x112] sm:$0xff]
    %s198 = scalar_lea.vmem [#allocation2], 32
    %v199 = vld [vmem:[%s198] sm:$0xff]
    %v200 = vld [vmem:[%s198 + $0x10] sm:$0xff]
    %v201 = vld [vmem:[%s198 + $0x20] sm:$0xff]
    %v202 = vld [vmem:[%s198 + $0x30] sm:$0xff]
    %v203 = vld [vmem:[%s198 + $0x40] sm:$0xff]
    %v204 = vld [vmem:[%s198 + $0x50] sm:$0xff]
    %v205 = vld [vmem:[%s198 + $0x60] sm:$0xff]
    %v206 = vld [vmem:[%s198 + $0x70] sm:$0xff]
    %v207 = vld [vmem:[%s198 + $0xa0] sm:$0xff]
    %v208 = vld [vmem:[%s198 + $0xb0] sm:$0xff]
    %v209 = vld [vmem:[%s198 + $0xc0] sm:$0xff]
    %v210 = vld [vmem:[%s198 + $0xd0] sm:$0xff]
    %v211 = vld [vmem:[%s198 + $0xe0] sm:$0xff]
    %v212 = vld [vmem:[%s198 + $0xf0] sm:$0xff]
    %v213 = vld [vmem:[%s198 + $0x100] sm:$0xff]
    %v214 = vld [vmem:[%s198 + $0x110] sm:$0xff]
    %v215 = vld [vmem:[%s198 + $0x1] sm:$0xff]
    %v216 = vld [vmem:[%s198 + $0x11] sm:$0xff]
    %v217 = vld [vmem:[%s198 + $0x21] sm:$0xff]
    %v218 = vld [vmem:[%s198 + $0x31] sm:$0xff]
    %v219 = vld [vmem:[%s198 + $0x41] sm:$0xff]
    %v220 = vld [vmem:[%s198 + $0x51] sm:$0xff]
    %v221 = vld [vmem:[%s198 + $0x61] sm:$0xff]
    %v222 = vld [vmem:[%s198 + $0x71] sm:$0xff]
    %v223 = vld [vmem:[%s198 + $0xa1] sm:$0xff]
    %v224 = vld [vmem:[%s198 + $0xb1] sm:$0xff]
    %v225 = vld [vmem:[%s198 + $0xc1] sm:$0xff]
    %v226 = vld [vmem:[%s198 + $0xd1] sm:$0xff]
    %v227 = vld [vmem:[%s198 + $0xe1] sm:$0xff]
    %v228 = vld [vmem:[%s198 + $0xf1] sm:$0xff]
    %v229 = vld [vmem:[%s198 + $0x101] sm:$0xff]
    %v230 = vld [vmem:[%s198 + $0x111] sm:$0xff]
    %v231 = vld [vmem:[%s198 + $0x2] sm:$0xff]
    %v232 = vld [vmem:[%s198 + $0x12] sm:$0xff]
    %v233 = vld [vmem:[%s198 + $0x22] sm:$0xff]
    %v234 = vld [vmem:[%s198 + $0x32] sm:$0xff]
    %v235 = vld [vmem:[%s198 + $0x42] sm:$0xff]
    %v236 = vld [vmem:[%s198 + $0x52] sm:$0xff]
    %v237 = vld [vmem:[%s198 + $0x62] sm:$0xff]
    %v238 = vld [vmem:[%s198 + $0x72] sm:$0xff]
    %v239 = vld [vmem:[%s198 + $0xa2] sm:$0xff]
    %v240 = vld [vmem:[%s198 + $0xb2] sm:$0xff]
    %v241 = vld [vmem:[%s198 + $0xc2] sm:$0xff]
    %v242 = vld [vmem:[%s198 + $0xd2] sm:$0xff]
    %v243 = vld [vmem:[%s198 + $0xe2] sm:$0xff]
    %v244 = vld [vmem:[%s198 + $0xf2] sm:$0xff]
    %v245 = vld [vmem:[%s198 + $0x102] sm:$0xff]
    %v246 = vld [vmem:[%s198 + $0x112] sm:$0xff]
    %263 = vrot.lane.b32.xlu0 %v118, 64
    %v264 = vpop.permute.xlu0 %263
    %265 = vrot.lane.b32.xlu0 %v119, 64
    %v266 = vpop.permute.xlu0 %265
    %267 = vrot.lane.b32.xlu0 %v120, 64
    %v268 = vpop.permute.xlu0 %267
    %269 = vrot.lane.b32.xlu0 %v121, 64
    %v270 = vpop.permute.xlu0 %269
    %271 = vrot.lane.b32.xlu0 %v122, 64
    %v272 = vpop.permute.xlu0 %271
    %273 = vrot.lane.b32.xlu0 %v123, 64
    %v274 = vpop.permute.xlu0 %273
    %275 = vrot.lane.b32.xlu0 %v124, 64
    %v276 = vpop.permute.xlu0 %275
    %277 = vrot.lane.b32.xlu0 %v125, 64
    %v278 = vpop.permute.xlu0 %277
    %279 = vrot.lane.b32.xlu0 %v126, 64
    %v280 = vpop.permute.xlu0 %279
    %281 = vrot.lane.b32.xlu0 %v127, 64
    %v282 = vpop.permute.xlu0 %281
    %283 = vrot.lane.b32.xlu0 %v128, 64
    %v284 = vpop.permute.xlu0 %283
    %285 = vrot.lane.b32.xlu0 %v129, 64
    %v286 = vpop.permute.xlu0 %285
    %287 = vrot.lane.b32.xlu0 %v130, 64
    %v288 = vpop.permute.xlu0 %287
    %289 = vrot.lane.b32.xlu0 %v131, 64
    %v290 = vpop.permute.xlu0 %289
    %291 = vrot.lane.b32.xlu0 %v132, 64
    %v292 = vpop.permute.xlu0 %291
    %293 = vrot.lane.b32.xlu0 %v133, 64
    %v294 = vpop.permute.xlu0 %293
    %327 = vrot.lane.b32.xlu0 %v150, 64
    %v328 = vpop.permute.xlu0 %327
    %329 = vrot.lane.b32.xlu0 %v151, 64
    %v330 = vpop.permute.xlu0 %329
    %331 = vrot.lane.b32.xlu0 %v152, 64
    %v332 = vpop.permute.xlu0 %331
    %333 = vrot.lane.b32.xlu0 %v153, 64
    %v334 = vpop.permute.xlu0 %333
    %335 = vrot.lane.b32.xlu0 %v154, 64
    %v336 = vpop.permute.xlu0 %335
    %337 = vrot.lane.b32.xlu0 %v155, 64
    %v338 = vpop.permute.xlu0 %337
    %339 = vrot.lane.b32.xlu0 %v156, 64
    %v340 = vpop.permute.xlu0 %339
    %341 = vrot.lane.b32.xlu0 %v157, 64
    %v342 = vpop.permute.xlu0 %341
    %343 = vrot.lane.b32.xlu0 %v158, 64
    %v344 = vpop.permute.xlu0 %343
    %345 = vrot.lane.b32.xlu0 %v159, 64
    %v346 = vpop.permute.xlu0 %345
    %347 = vrot.lane.b32.xlu0 %v160, 64
    %v348 = vpop.permute.xlu0 %347
    %349 = vrot.lane.b32.xlu0 %v161, 64
    %v350 = vpop.permute.xlu0 %349
    %351 = vrot.lane.b32.xlu0 %v162, 64
    %v352 = vpop.permute.xlu0 %351
    %353 = vrot.lane.b32.xlu0 %v163, 64
    %v354 = vpop.permute.xlu0 %353
    %355 = vrot.lane.b32.xlu0 %v164, 64
    %v356 = vpop.permute.xlu0 %355
    %357 = vrot.lane.b32.xlu0 %v165, 64
    %v358 = vpop.permute.xlu0 %357
    %391 = vrot.lane.b32.xlu0 %v182, 64
    %v392 = vpop.permute.xlu0 %391
    %393 = vrot.lane.b32.xlu0 %v183, 64
    %v394 = vpop.permute.xlu0 %393
    %395 = vrot.lane.b32.xlu0 %v184, 64
    %v396 = vpop.permute.xlu0 %395
    %397 = vrot.lane.b32.xlu0 %v185, 64
    %v398 = vpop.permute.xlu0 %397
    %399 = vrot.lane.b32.xlu0 %v186, 64
    %v400 = vpop.permute.xlu0 %399
    %401 = vrot.lane.b32.xlu0 %v187, 64
    %v402 = vpop.permute.xlu0 %401
    %403 = vrot.lane.b32.xlu0 %v188, 64
    %v404 = vpop.permute.xlu0 %403
    %405 = vrot.lane.b32.xlu0 %v189, 64
    %v406 = vpop.permute.xlu0 %405
    %407 = vrot.lane.b32.xlu0 %v190, 64
    %v408 = vpop.permute.xlu0 %407
    %409 = vrot.lane.b32.xlu0 %v191, 64
    %v410 = vpop.permute.xlu0 %409
    %411 = vrot.lane.b32.xlu0 %v192, 64
    %v412 = vpop.permute.xlu0 %411
    %413 = vrot.lane.b32.xlu0 %v193, 64
    %v414 = vpop.permute.xlu0 %413
    %415 = vrot.lane.b32.xlu0 %v194, 64
    %v416 = vpop.permute.xlu0 %415
    %417 = vrot.lane.b32.xlu0 %v195, 64
    %v418 = vpop.permute.xlu0 %417
    %419 = vrot.lane.b32.xlu0 %v196, 64
    %v420 = vpop.permute.xlu0 %419
    %421 = vrot.lane.b32.xlu0 %v197, 64
    %v422 = vpop.permute.xlu0 %421
    %455 = vrot.lane.b32.xlu0 %v215, 64
    %v456 = vpop.permute.xlu0 %455
    %457 = vrot.lane.b32.xlu0 %v216, 64
    %v458 = vpop.permute.xlu0 %457
    %459 = vrot.lane.b32.xlu0 %v217, 64
    %v460 = vpop.permute.xlu0 %459
    %461 = vrot.lane.b32.xlu0 %v218, 64
    %v462 = vpop.permute.xlu0 %461
    %463 = vrot.lane.b32.xlu0 %v219, 64
    %v464 = vpop.permute.xlu0 %463
    %465 = vrot.lane.b32.xlu0 %v220, 64
    %v466 = vpop.permute.xlu0 %465
    %467 = vrot.lane.b32.xlu0 %v221, 64
    %v468 = vpop.permute.xlu0 %467
    %469 = vrot.lane.b32.xlu0 %v222, 64
    %v470 = vpop.permute.xlu0 %469
    %471 = vrot.lane.b32.xlu0 %v223, 64
    %v472 = vpop.permute.xlu0 %471
    %473 = vrot.lane.b32.xlu0 %v224, 64
    %v474 = vpop.permute.xlu0 %473
    %475 = vrot.lane.b32.xlu0 %v225, 64
    %v476 = vpop.permute.xlu0 %475
    %477 = vrot.lane.b32.xlu0 %v226, 64
    %v478 = vpop.permute.xlu0 %477
    %479 = vrot.lane.b32.xlu0 %v227, 64
    %v480 = vpop.permute.xlu0 %479
    %481 = vrot.lane.b32.xlu0 %v228, 64
    %v482 = vpop.permute.xlu0 %481
    %483 = vrot.lane.b32.xlu0 %v229, 64
    %v484 = vpop.permute.xlu0 %483
    %485 = vrot.lane.b32.xlu0 %v230, 64
    %v486 = vpop.permute.xlu0 %485
    %v503 = vsel %vm27, %v102, %v264
    %v504 = vsel %vm27, %v103, %v266
    %v505 = vsel %vm27, %v104, %v268
    %v506 = vsel %vm27, %v105, %v270
    %v507 = vsel %vm27, %v106, %v272
    %v508 = vsel %vm27, %v107, %v274
    %v509 = vsel %vm27, %v108, %v276
    %v510 = vsel %vm27, %v109, %v278
    %v511 = vsel %vm27, %v110, %v280
    %v512 = vsel %vm27, %v111, %v282
    %v513 = vsel %vm27, %v112, %v284
    %v514 = vsel %vm27, %v113, %v286
    %v515 = vsel %vm27, %v114, %v288
    %v516 = vsel %vm27, %v115, %v290
    %v517 = vsel %vm27, %v116, %v292
    %v518 = vsel %vm27, %v117, %v294
    %v519 = vsel %vm27, %v134, %v328
    %v520 = vsel %vm27, %v135, %v330
    %v521 = vsel %vm27, %v136, %v332
    %v522 = vsel %vm27, %v137, %v334
    %v523 = vsel %vm27, %v138, %v336
    %v524 = vsel %vm27, %v139, %v338
    %v525 = vsel %vm27, %v140, %v340
    %v526 = vsel %vm27, %v141, %v342
    %v527 = vsel %vm27, %v142, %v344
    %v528 = vsel %vm27, %v143, %v346
    %v529 = vsel %vm27, %v144, %v348
    %v530 = vsel %vm27, %v145, %v350
    %v531 = vsel %vm27, %v146, %v352
    %v532 = vsel %vm27, %v147, %v354
    %v533 = vsel %vm27, %v148, %v356
    %v534 = vsel %vm27, %v149, %v358
    %v535 = vsel %vm27, %v166, %v392
    %v536 = vsel %vm27, %v167, %v394
    %v537 = vsel %vm27, %v168, %v396
    %v538 = vsel %vm27, %v169, %v398
    %v539 = vsel %vm27, %v170, %v400
    %v540 = vsel %vm27, %v171, %v402
    %v541 = vsel %vm27, %v172, %v404
    %v542 = vsel %vm27, %v173, %v406
    %v543 = vsel %vm27, %v174, %v408
    %v544 = vsel %vm27, %v175, %v410
    %v545 = vsel %vm27, %v176, %v412
    %v546 = vsel %vm27, %v177, %v414
    %v547 = vsel %vm27, %v178, %v416
    %v548 = vsel %vm27, %v179, %v418
    %v549 = vsel %vm27, %v180, %v420
    %v550 = vsel %vm27, %v181, %v422
    %v551 = vsel %vm27, %v199, %v456
    %v552 = vsel %vm27, %v200, %v458
    %v553 = vsel %vm27, %v201, %v460
    %v554 = vsel %vm27, %v202, %v462
    %v555 = vsel %vm27, %v203, %v464
    %v556 = vsel %vm27, %v204, %v466
    %v557 = vsel %vm27, %v205, %v468
    %v558 = vsel %vm27, %v206, %v470
    %v559 = vsel %vm27, %v207, %v472
    %v560 = vsel %vm27, %v208, %v474
    %v561 = vsel %vm27, %v209, %v476
    %v562 = vsel %vm27, %v210, %v478
    %v563 = vsel %vm27, %v211, %v480
    %v564 = vsel %vm27, %v212, %v482
    %v565 = vsel %vm27, %v213, %v484
    %v566 = vsel %vm27, %v214, %v486
    %v567 = vld [vmem:[%s1] sm:$0xff]
    %v568 = vld [vmem:[%s1 + $0x8] sm:$0xff]
    %v569 = vld [vmem:[%s1 + $0x10] sm:$0xff]
    %v570 = vld [vmem:[%s1 + $0x18] sm:$0xff]
    %v571 = vld [vmem:[%s1 + $0x20] sm:$0xff]
    %v572 = vld [vmem:[%s1 + $0x28] sm:$0xff]
    %v573 = vld [vmem:[%s1 + $0x30] sm:$0xff]
    %v574 = vld [vmem:[%s1 + $0x38] sm:$0xff]
    %v575 = vld [vmem:[%s1 + $0x40] sm:$0xff]
    %v576 = vld [vmem:[%s1 + $0x48] sm:$0xff]
    %v577 = vld [vmem:[%s1 + $0x50] sm:$0xff]
    %v578 = vld [vmem:[%s1 + $0x58] sm:$0xff]
    %v579 = vld [vmem:[%s1 + $0x60] sm:$0xff]
    %v580 = vld [vmem:[%s1 + $0x68] sm:$0xff]
    %v581 = vld [vmem:[%s1 + $0x70] sm:$0xff]
    %v582 = vld [vmem:[%s1 + $0x78] sm:$0xff]
    %v583 = vld [vmem:[%s1 + $0x80] sm:$0xff]
    %v584 = vld [vmem:[%s1 + $0x88] sm:$0xff]
    %v585 = vld [vmem:[%s1 + $0x90] sm:$0xff]
    %v586 = vld [vmem:[%s1 + $0x98] sm:$0xff]
    %v587 = vld [vmem:[%s1 + $0xa0] sm:$0xff]
    %v588 = vld [vmem:[%s1 + $0xa8] sm:$0xff]
    %v589 = vld [vmem:[%s1 + $0xb0] sm:$0xff]
    %v590 = vld [vmem:[%s1 + $0xb8] sm:$0xff]
    %v591 = vld [vmem:[%s1 + $0xc0] sm:$0xff]
    %v592 = vld [vmem:[%s1 + $0xc8] sm:$0xff]
    %v593 = vld [vmem:[%s1 + $0xd0] sm:$0xff]
    %v594 = vld [vmem:[%s1 + $0xd8] sm:$0xff]
    %v595 = vld [vmem:[%s1 + $0xe0] sm:$0xff]
    %v596 = vld [vmem:[%s1 + $0xe8] sm:$0xff]
    %v597 = vld [vmem:[%s1 + $0xf0] sm:$0xff]
    %v598 = vld [vmem:[%s1 + $0xf8] sm:$0xff]
    %v599 = vld [vmem:[%s1 + $0x100] sm:$0xff]
    %v600 = vld [vmem:[%s1 + $0x108] sm:$0xff]
    %v601 = vld [vmem:[%s1 + $0x110] sm:$0xff]
    %v602 = vld [vmem:[%s1 + $0x118] sm:$0xff]
    %v603 = vld [vmem:[%s1 + $0x120] sm:$0xff]
    %v604 = vld [vmem:[%s1 + $0x128] sm:$0xff]
    %v605 = vld [vmem:[%s1 + $0x130] sm:$0xff]
    %v606 = vld [vmem:[%s1 + $0x138] sm:$0xff]
    %v607 = vld [vmem:[%s1 + $0x140] sm:$0xff]
    %v608 = vld [vmem:[%s1 + $0x148] sm:$0xff]
    %v609 = vld [vmem:[%s1 + $0x150] sm:$0xff]
    %v610 = vld [vmem:[%s1 + $0x158] sm:$0xff]
    %v611 = vld [vmem:[%s1 + $0x160] sm:$0xff]
    %v612 = vld [vmem:[%s1 + $0x168] sm:$0xff]
    %v613 = vld [vmem:[%s1 + $0x170] sm:$0xff]
    %v614 = vld [vmem:[%s1 + $0x178] sm:$0xff]
    %v615 = vld [vmem:[%s1 + $0x180] sm:$0xff]
    %v616 = vld [vmem:[%s1 + $0x188] sm:$0xff]
    %v617 = vld [vmem:[%s1 + $0x190] sm:$0xff]
    %v618 = vld [vmem:[%s1 + $0x198] sm:$0xff]
    %v619 = vld [vmem:[%s1 + $0x1a0] sm:$0xff]
    %v620 = vld [vmem:[%s1 + $0x1a8] sm:$0xff]
    %v621 = vld [vmem:[%s1 + $0x1b0] sm:$0xff]
    %v622 = vld [vmem:[%s1 + $0x1b8] sm:$0xff]
    %v623 = vld [vmem:[%s1 + $0x1c0] sm:$0xff]
    %v624 = vld [vmem:[%s1 + $0x1c8] sm:$0xff]
    %v625 = vld [vmem:[%s1 + $0x1d0] sm:$0xff]
    %v626 = vld [vmem:[%s1 + $0x1d8] sm:$0xff]
    %v627 = vld [vmem:[%s1 + $0x1e0] sm:$0xff]
    %v628 = vld [vmem:[%s1 + $0x1e8] sm:$0xff]
    %v629 = vld [vmem:[%s1 + $0x1f0] sm:$0xff]
    %v630 = vld [vmem:[%s1 + $0x1f8] sm:$0xff]
    %v631 = vld [vmem:[%s1 + $0x200] sm:$0xff]
    %v632 = vld [vmem:[%s1 + $0x208] sm:$0xff]
    %v633 = vld [vmem:[%s1 + $0x210] sm:$0xff]
    %v634 = vld [vmem:[%s1 + $0x218] sm:$0xff]
    %v635 = vld [vmem:[%s1 + $0x220] sm:$0xff]
    %v636 = vld [vmem:[%s1 + $0x228] sm:$0xff]
    %v637 = vld [vmem:[%s1 + $0x230] sm:$0xff]
    %v638 = vld [vmem:[%s1 + $0x238] sm:$0xff]
    %v640 = vsel %vm27, %v231, 0
    %v643 = vsel %vm27, %v232, 0
    %v646 = vsel %vm27, %v233, 0
    %v649 = vsel %vm27, %v234, 0
    %v652 = vsel %vm27, %v235, 0
    %v655 = vsel %vm27, %v236, 0
    %v658 = vsel %vm27, %v237, 0
    %v661 = vsel %vm27, %v238, 0
    %v664 = vsel %vm27, %v239, 0
    %v667 = vsel %vm27, %v240, 0
    %v670 = vsel %vm27, %v241, 0
    %v673 = vsel %vm27, %v242, 0
    %v676 = vsel %vm27, %v243, 0
    %v679 = vsel %vm27, %v244, 0
    %v682 = vsel %vm27, %v245, 0
    %v685 = vsel %vm27, %v246, 0
    %687 = vmatprep.subr.mxu0 0.0
    %688 = vmatpush1.msra.mxu0 %v567
    %689 = vmatprep.subr.mxu0 0.0
    %690 = vmatpush1.msra.mxu0 %v568
    %691 = vmatprep.subr.mxu0 0.0
    %692 = vmatpush1.msra.mxu0 %v569
    %693 = vmatprep.subr.mxu0 0.0
    %694 = vmatpush1.msra.mxu0 %v570
    %695 = vmatprep.subr.mxu0 0.0
    %696 = vmatpush1.msra.mxu0 %v571
    %697 = vmatprep.subr.mxu0 0.0
    %698 = vmatpush1.msra.mxu0 %v572
    %699 = vmatprep.subr.mxu0 0.0
    %700 = vmatpush1.msra.mxu0 %v573
    %701 = vmatprep.subr.mxu0 0.0
    %702 = vmatpush1.msra.mxu0 %v574
    %703 = vmatprep.subr.mxu0 0.0
    %704 = vmatpush1.msra.mxu0 %v575
    %705 = vmatprep.subr.mxu0 0.0
    %706 = vmatpush1.msra.mxu0 %v576
    %707 = vmatprep.subr.mxu0 0.0
    %708 = vmatpush1.msra.mxu0 %v577
    %709 = vmatprep.subr.mxu0 0.0
    %710 = vmatpush1.msra.mxu0 %v578
    %711 = vmatprep.subr.mxu0 0.0
    %712 = vmatpush1.msra.mxu0 %v579
    %713 = vmatprep.subr.mxu0 0.0
    %714 = vmatpush1.msra.mxu0 %v580
    %715 = vmatprep.subr.mxu0 0.0
    %716 = vmatpush1.msra.mxu0 %v581
    %717 = vmatprep.subr.mxu0 0.0
    %718 = vmatpush1.msra.mxu0 %v582
    %719 = vmatprep.subr.mxu0 0.0
    %720 = vmatpush1.msra.mxu0 %v583
    %721 = vmatprep.subr.mxu0 0.0
    %722 = vmatpush1.msra.mxu0 %v584
    %723 = vmatprep.subr.mxu0 0.0
    %724 = vmatpush1.msra.mxu0 %v585
    %725 = vmatprep.subr.mxu0 0.0
    %726 = vmatpush1.msra.mxu0 %v586
    %727 = vmatprep.subr.mxu0 0.0
    %728 = vmatpush1.msra.mxu0 %v587
    %729 = vmatprep.subr.mxu0 0.0
    %730 = vmatpush1.msra.mxu0 %v588
    %731 = vmatprep.subr.mxu0 0.0
    %732 = vmatpush1.msra.mxu0 %v589
    %733 = vmatprep.subr.mxu0 0.0
    %734 = vmatpush1.msra.mxu0 %v590
    %735 = vmatprep.subr.mxu0 0.0
    %736 = vmatpush1.msra.mxu0 %v591
    %737 = vmatprep.subr.mxu0 0.0
    %738 = vmatpush1.msra.mxu0 %v592
    %739 = vmatprep.subr.mxu0 0.0
    %740 = vmatpush1.msra.mxu0 %v593
    %741 = vmatprep.subr.mxu0 0.0
    %742 = vmatpush1.msra.mxu0 %v594
    %743 = vmatprep.subr.mxu0 0.0
    %744 = vmatpush1.msra.mxu0 %v595
    %745 = vmatprep.subr.mxu0 0.0
    %746 = vmatpush1.msra.mxu0 %v596
    %747 = vmatprep.subr.mxu0 0.0
    %748 = vmatpush1.msra.mxu0 %v597
    %749 = vmatprep.subr.mxu0 0.0
    %750 = vmatpush1.msra.mxu0 %v598
    %751 = vmatprep.mubr.f32.mxu0 %v519
    %752 = vmatmul.mubr.f32.gmra.mrb[0].mxu0 %v503
    %v753 = vpop.f32.mrb[0].mxu0
    %v754 = vadd.f32 0.0, %v753
    %v755 = vpop.f32.mrb[0].mxu0
    %756 = vmatprep.mubr.f32.mxu0 %v520
    %757 = vmatmul.mubr.f32.gmra.mrb[0].mxu0 %v504
    %v758 = vpop.f32.mrb[0].mxu0
    %v759 = vadd.f32 0.0, %v758
    %v760 = vpop.f32.mrb[0].mxu0
    %761 = vmatprep.mubr.f32.mxu0 %v521
    %762 = vmatmul.mubr.f32.gmra.mrb[0].mxu0 %v505
    %v763 = vpop.f32.mrb[0].mxu0
    %v764 = vadd.f32 0.0, %v763
    %v765 = vpop.f32.mrb[0].mxu0
    %766 = vmatprep.mubr.f32.mxu0 %v522
    %767 = vmatmul.mubr.f32.gmra.mrb[0].mxu0 %v506
    %v768 = vpop.f32.mrb[0].mxu0
    %v769 = vadd.f32 0.0, %v768
    %v770 = vpop.f32.mrb[0].mxu0
    %771 = vmatprep.mubr.f32.mxu0 %v523
    %772 = vmatmul.mubr.f32.gmra.mrb[0].mxu0 %v507
    %v773 = vpop.f32.mrb[0].mxu0
    %v774 = vadd.f32 0.0, %v773
    %v775 = vpop.f32.mrb[0].mxu0
    %776 = vmatprep.mubr.f32.mxu0 %v524
    %777 = vmatmul.mubr.f32.gmra.mrb[0].mxu0 %v508
    %v778 = vpop.f32.mrb[0].mxu0
    %v779 = vadd.f32 0.0, %v778
    %v780 = vpop.f32.mrb[0].mxu0
    %781 = vmatprep.mubr.f32.mxu0 %v525
    %782 = vmatmul.mubr.f32.gmra.mrb[0].mxu0 %v509
    %v783 = vpop.f32.mrb[0].mxu0
    %v784 = vadd.f32 0.0, %v783
    %v785 = vpop.f32.mrb[0].mxu0
    %786 = vmatprep.mubr.f32.mxu0 %v526
    %787 = vmatmul.mubr.f32.gmra.mrb[0].mxu0 %v510
    %v788 = vpop.f32.mrb[0].mxu0
    %v789 = vadd.f32 0.0, %v788
    %v790 = vpop.f32.mrb[0].mxu0
    %791 = vmatprep.mubr.f32.mxu0 %v527
    %792 = vmatmul.mubr.f32.gmra.mrb[0].mxu0 %v511
    %v793 = vpop.f32.mrb[0].mxu0
    %v794 = vadd.f32 0.0, %v793
    %v795 = vpop.f32.mrb[0].mxu0
    %796 = vmatprep.mubr.f32.mxu0 %v528
    %797 = vmatmul.mubr.f32.gmra.mrb[0].mxu0 %v512
    %v798 = vpop.f32.mrb[0].mxu0
    %v799 = vadd.f32 0.0, %v798
    %v800 = vpop.f32.mrb[0].mxu0
    %801 = vmatprep.mubr.f32.mxu0 %v529
    %802 = vmatmul.mubr.f32.gmra.mrb[0].mxu0 %v513
    %v803 = vpop.f32.mrb[0].mxu0
    %v804 = vadd.f32 0.0, %v803
    %v805 = vpop.f32.mrb[0].mxu0
    %806 = vmatprep.mubr.f32.mxu0 %v530
    %807 = vmatmul.mubr.f32.gmra.mrb[0].mxu0 %v514
    %v808 = vpop.f32.mrb[0].mxu0
    %v809 = vadd.f32 0.0, %v808
    %v810 = vpop.f32.mrb[0].mxu0
    %811 = vmatprep.mubr.f32.mxu0 %v531
    %812 = vmatmul.mubr.f32.gmra.mrb[0].mxu0 %v515
    %v813 = vpop.f32.mrb[0].mxu0
    %v814 = vadd.f32 0.0, %v813
    %v815 = vpop.f32.mrb[0].mxu0
    %816 = vmatprep.mubr.f32.mxu0 %v532
    %817 = vmatmul.mubr.f32.gmra.mrb[0].mxu0 %v516
    %v818 = vpop.f32.mrb[0].mxu0
    %v819 = vadd.f32 0.0, %v818
    %v820 = vpop.f32.mrb[0].mxu0
    %821 = vmatprep.mubr.f32.mxu0 %v533
    %822 = vmatmul.mubr.f32.gmra.mrb[0].mxu0 %v517
    %v823 = vpop.f32.mrb[0].mxu0
    %v824 = vadd.f32 0.0, %v823
    %v825 = vpop.f32.mrb[0].mxu0
    %826 = vmatprep.mubr.f32.mxu0 %v534
    %827 = vmatmul.mubr.f32.gmra.mrb[0].mxu0 %v518
    %v828 = vpop.f32.mrb[0].mxu0
    %v829 = vadd.f32 0.0, %v828
    %v830 = vpop.f32.mrb[0].mxu0
    %831 = vdwg.mxu0
    %832 = vmatprep.subr.mxu0 0.0
    %833 = vmatpush1.msra.mxu0 %v599
    %834 = vmatprep.subr.mxu0 0.0
    %835 = vmatpush1.msra.mxu0 %v600
    %836 = vmatprep.subr.mxu0 0.0
    %837 = vmatpush1.msra.mxu0 %v601
    %838 = vmatprep.subr.mxu0 0.0
    %839 = vmatpush1.msra.mxu0 %v602
    %840 = vmatprep.subr.mxu0 0.0
    %841 = vmatpush1.msra.mxu0 %v603
    %842 = vmatprep.subr.mxu0 0.0
    %843 = vmatpush1.msra.mxu0 %v604
    %844 = vmatprep.subr.mxu0 0.0
    %845 = vmatpush1.msra.mxu0 %v605
    %846 = vmatprep.subr.mxu0 0.0
    %847 = vmatpush1.msra.mxu0 %v606
    %848 = vmatprep.subr.mxu0 0.0
    %849 = vmatpush1.msra.mxu0 %v607
    %850 = vmatprep.subr.mxu0 0.0
    %851 = vmatpush1.msra.mxu0 %v608
    %852 = vmatprep.subr.mxu0 0.0
    %853 = vmatpush1.msra.mxu0 %v609
    %854 = vmatprep.subr.mxu0 0.0
    %855 = vmatpush1.msra.mxu0 %v610
    %856 = vmatprep.subr.mxu0 0.0
    %857 = vmatpush1.msra.mxu0 %v611
    %858 = vmatprep.subr.mxu0 0.0
    %859 = vmatpush1.msra.mxu0 %v612
    %860 = vmatprep.subr.mxu0 0.0
    %861 = vmatpush1.msra.mxu0 %v613
    %862 = vmatprep.subr.mxu0 0.0
    %863 = vmatpush1.msra.mxu0 %v614
    %864 = vmatprep.subr.mxu0 0.0
    %865 = vmatpush1.msra.mxu0 %v615
    %866 = vmatprep.subr.mxu0 0.0
    %867 = vmatpush1.msra.mxu0 %v616
    %868 = vmatprep.subr.mxu0 0.0
    %869 = vmatpush1.msra.mxu0 %v617
    %870 = vmatprep.subr.mxu0 0.0
    %871 = vmatpush1.msra.mxu0 %v618
    %872 = vmatprep.subr.mxu0 0.0
    %873 = vmatpush1.msra.mxu0 %v619
    %874 = vmatprep.subr.mxu0 0.0
    %875 = vmatpush1.msra.mxu0 %v620
    %876 = vmatprep.subr.mxu0 0.0
    %877 = vmatpush1.msra.mxu0 %v621
    %878 = vmatprep.subr.mxu0 0.0
    %879 = vmatpush1.msra.mxu0 %v622
    %880 = vmatprep.subr.mxu0 0.0
    %881 = vmatpush1.msra.mxu0 %v623
    %882 = vmatprep.subr.mxu0 0.0
    %883 = vmatpush1.msra.mxu0 %v624
    %884 = vmatprep.subr.mxu0 0.0
    %885 = vmatpush1.msra.mxu0 %v625
    %886 = vmatprep.subr.mxu0 0.0
    %887 = vmatpush1.msra.mxu0 %v626
    %888 = vmatprep.subr.mxu0 0.0
    %889 = vmatpush1.msra.mxu0 %v627
    %890 = vmatprep.subr.mxu0 0.0
    %891 = vmatpush1.msra.mxu0 %v628
    %892 = vmatprep.subr.mxu0 0.0
    %893 = vmatpush1.msra.mxu0 %v629
    %894 = vmatprep.subr.mxu0 0.0
    %895 = vmatpush1.msra.mxu0 %v630
    %896 = vmatprep.mubr.f32.mxu0 %v551
    %897 = vmatmul.mubr.f32.gmra.mrb[0].mxu0 %v535
    %v898 = vpop.f32.mrb[0].mxu0
    %v899 = vadd.f32 %v754, %v898
    %v900 = vpop.f32.mrb[0].mxu0
    %901 = vmatprep.mubr.f32.mxu0 %v552
    %902 = vmatmul.mubr.f32.gmra.mrb[0].mxu0 %v536
    %v903 = vpop.f32.mrb[0].mxu0
    %v904 = vadd.f32 %v759, %v903
    %v905 = vpop.f32.mrb[0].mxu0
    %906 = vmatprep.mubr.f32.mxu0 %v553
    %907 = vmatmul.mubr.f32.gmra.mrb[0].mxu0 %v537
    %v908 = vpop.f32.mrb[0].mxu0
    %v909 = vadd.f32 %v764, %v908
    %v910 = vpop.f32.mrb[0].mxu0
    %911 = vmatprep.mubr.f32.mxu0 %v554
    %912 = vmatmul.mubr.f32.gmra.mrb[0].mxu0 %v538
    %v913 = vpop.f32.mrb[0].mxu0
    %v914 = vadd.f32 %v769, %v913
    %v915 = vpop.f32.mrb[0].mxu0
    %916 = vmatprep.mubr.f32.mxu0 %v555
    %917 = vmatmul.mubr.f32.gmra.mrb[0].mxu0 %v539
    %v918 = vpop.f32.mrb[0].mxu0
    %v919 = vadd.f32 %v774, %v918
    %v920 = vpop.f32.mrb[0].mxu0
    %921 = vmatprep.mubr.f32.mxu0 %v556
    %922 = vmatmul.mubr.f32.gmra.mrb[0].mxu0 %v540
    %v923 = vpop.f32.mrb[0].mxu0
    %v924 = vadd.f32 %v779, %v923
    %v925 = vpop.f32.mrb[0].mxu0
    %926 = vmatprep.mubr.f32.mxu0 %v557
    %927 = vmatmul.mubr.f32.gmra.mrb[0].mxu0 %v541
    %v928 = vpop.f32.mrb[0].mxu0
    %v929 = vadd.f32 %v784, %v928
    %v930 = vpop.f32.mrb[0].mxu0
    %931 = vmatprep.mubr.f32.mxu0 %v558
    %932 = vmatmul.mubr.f32.gmra.mrb[0].mxu0 %v542
    %v933 = vpop.f32.mrb[0].mxu0
    %v934 = vadd.f32 %v789, %v933
    %v935 = vpop.f32.mrb[0].mxu0
    %936 = vmatprep.mubr.f32.mxu0 %v559
    %937 = vmatmul.mubr.f32.gmra.mrb[0].mxu0 %v543
    %v938 = vpop.f32.mrb[0].mxu0
    %v939 = vadd.f32 %v794, %v938
    %v940 = vpop.f32.mrb[0].mxu0
    %941 = vmatprep.mubr.f32.mxu0 %v560
    %942 = vmatmul.mubr.f32.gmra.mrb[0].mxu0 %v544
    %v943 = vpop.f32.mrb[0].mxu0
    %v944 = vadd.f32 %v799, %v943
    %v945 = vpop.f32.mrb[0].mxu0
    %946 = vmatprep.mubr.f32.mxu0 %v561
    %947 = vmatmul.mubr.f32.gmra.mrb[0].mxu0 %v545
    %v948 = vpop.f32.mrb[0].mxu0
    %v949 = vadd.f32 %v804, %v948
    %v950 = vpop.f32.mrb[0].mxu0
    %951 = vmatprep.mubr.f32.mxu0 %v562
    %952 = vmatmul.mubr.f32.gmra.mrb[0].mxu0 %v546
    %v953 = vpop.f32.mrb[0].mxu0
    %v954 = vadd.f32 %v809, %v953
    %v955 = vpop.f32.mrb[0].mxu0
    %956 = vmatprep.mubr.f32.mxu0 %v563
    %957 = vmatmul.mubr.f32.gmra.mrb[0].mxu0 %v547
    %v958 = vpop.f32.mrb[0].mxu0
    %v959 = vadd.f32 %v814, %v958
    %v960 = vpop.f32.mrb[0].mxu0
    %961 = vmatprep.mubr.f32.mxu0 %v564
    %962 = vmatmul.mubr.f32.gmra.mrb[0].mxu0 %v548
    %v963 = vpop.f32.mrb[0].mxu0
    %v964 = vadd.f32 %v819, %v963
    %v965 = vpop.f32.mrb[0].mxu0
    %966 = vmatprep.mubr.f32.mxu0 %v565
    %967 = vmatmul.mubr.f32.gmra.mrb[0].mxu0 %v549
    %v968 = vpop.f32.mrb[0].mxu0
    %v969 = vadd.f32 %v824, %v968
    %v970 = vpop.f32.mrb[0].mxu0
    %971 = vmatprep.mubr.f32.mxu0 %v566
    %972 = vmatmul.mubr.f32.gmra.mrb[0].mxu0 %v550
    %v973 = vpop.f32.mrb[0].mxu0
    %v974 = vadd.f32 %v829, %v973
    %v975 = vpop.f32.mrb[0].mxu0
    %976 = vdwg.mxu0
    %977 = vmatprep.subr.mxu0 0.0
    %978 = vmatpush1.msra.mxu0 %v631
    %979 = vmatprep.subr.mxu0 0.0
    %980 = vmatpush1.msra.mxu0 %v632
    %981 = vmatprep.subr.mxu0 0.0
    %982 = vmatpush1.msra.mxu0 %v633
    %983 = vmatprep.subr.mxu0 0.0
    %984 = vmatpush1.msra.mxu0 %v634
    %985 = vmatprep.subr.mxu0 0.0
    %986 = vmatpush1.msra.mxu0 %v635
    %987 = vmatprep.subr.mxu0 0.0
    %988 = vmatpush1.msra.mxu0 %v636
    %989 = vmatprep.subr.mxu0 0.0
    %990 = vmatpush1.msra.mxu0 %v637
    %991 = vmatprep.subr.mxu0 0.0
    %992 = vmatpush1.msra.mxu0 %v638
    %993 = vmatprep.subr.mxu0 0.0
    %994 = vmatpush1.msra.mxu0 0.0
    %995 = vmatprep.subr.mxu0 0.0
    %996 = vmatpush1.msra.mxu0 0.0
    %997 = vmatprep.subr.mxu0 0.0
    %998 = vmatpush1.msra.mxu0 0.0
    %999 = vmatprep.subr.mxu0 0.0
    %1000 = vmatpush1.msra.mxu0 0.0
    %1001 = vmatprep.subr.mxu0 0.0
    %1002 = vmatpush1.msra.mxu0 0.0
    %1003 = vmatprep.subr.mxu0 0.0
    %1004 = vmatpush1.msra.mxu0 0.0
    %1005 = vmatprep.subr.mxu0 0.0
    %1006 = vmatpush1.msra.mxu0 0.0
    %1007 = vmatprep.subr.mxu0 0.0
    %1008 = vmatpush1.msra.mxu0 0.0
    %1009 = vmatprep.subr.mxu0 0.0
    %1010 = vmatpush1.msra.mxu0 0.0
    %1011 = vmatprep.subr.mxu0 0.0
    %1012 = vmatpush1.msra.mxu0 0.0
    %1013 = vmatprep.subr.mxu0 0.0
    %1014 = vmatpush1.msra.mxu0 0.0
    %1015 = vmatprep.subr.mxu0 0.0
    %1016 = vmatpush1.msra.mxu0 0.0
    %1017 = vmatprep.subr.mxu0 0.0
    %1018 = vmatpush1.msra.mxu0 0.0
    %1019 = vmatprep.subr.mxu0 0.0
    %1020 = vmatpush1.msra.mxu0 0.0
    %1021 = vmatprep.subr.mxu0 0.0
    %1022 = vmatpush1.msra.mxu0 0.0
    %1023 = vmatprep.subr.mxu0 0.0
    %1024 = vmatpush1.msra.mxu0 0.0
    %1025 = vmatprep.subr.mxu0 0.0
    %1026 = vmatpush1.msra.mxu0 0.0
    %1027 = vmatprep.subr.mxu0 0.0
    %1028 = vmatpush1.msra.mxu0 0.0
    %1029 = vmatprep.subr.mxu0 0.0
    %1030 = vmatpush1.msra.mxu0 0.0
    %1031 = vmatprep.subr.mxu0 0.0
    %1032 = vmatpush1.msra.mxu0 0.0
    %1033 = vmatprep.subr.mxu0 0.0
    %1034 = vmatpush1.msra.mxu0 0.0
    %1035 = vmatprep.subr.mxu0 0.0
    %1036 = vmatpush1.msra.mxu0 0.0
    %1037 = vmatprep.subr.mxu0 0.0
    %1038 = vmatpush1.msra.mxu0 0.0
    %1039 = vmatprep.subr.mxu0 0.0
    %1040 = vmatpush1.msra.mxu0 0.0
    %1041 = vmatprep.mubr.f32.mxu0 0.0
    %1042 = vmatmul.mubr.f32.gmra.mrb[0].mxu0 %v640
    %v1043 = vpop.f32.mrb[0].mxu0
    %v1044 = vadd.f32 %v899, %v1043
    %v1045 = vpop.f32.mrb[0].mxu0
    %1046 = vmatprep.mubr.f32.mxu0 0.0
    %1047 = vmatmul.mubr.f32.gmra.mrb[0].mxu0 %v643
    %v1048 = vpop.f32.mrb[0].mxu0
    %v1049 = vadd.f32 %v904, %v1048
    %v1050 = vpop.f32.mrb[0].mxu0
    %1051 = vmatprep.mubr.f32.mxu0 0.0
    %1052 = vmatmul.mubr.f32.gmra.mrb[0].mxu0 %v646
    %v1053 = vpop.f32.mrb[0].mxu0
    %v1054 = vadd.f32 %v909, %v1053
    %v1055 = vpop.f32.mrb[0].mxu0
    %1056 = vmatprep.mubr.f32.mxu0 0.0
    %1057 = vmatmul.mubr.f32.gmra.mrb[0].mxu0 %v649
    %v1058 = vpop.f32.mrb[0].mxu0
    %v1059 = vadd.f32 %v914, %v1058
    %v1060 = vpop.f32.mrb[0].mxu0
    %1061 = vmatprep.mubr.f32.mxu0 0.0
    %1062 = vmatmul.mubr.f32.gmra.mrb[0].mxu0 %v652
    %v1063 = vpop.f32.mrb[0].mxu0
    %v1064 = vadd.f32 %v919, %v1063
    %v1065 = vpop.f32.mrb[0].mxu0
    %1066 = vmatprep.mubr.f32.mxu0 0.0
    %1067 = vmatmul.mubr.f32.gmra.mrb[0].mxu0 %v655
    %v1068 = vpop.f32.mrb[0].mxu0
    %v1069 = vadd.f32 %v924, %v1068
    %v1070 = vpop.f32.mrb[0].mxu0
    %1071 = vmatprep.mubr.f32.mxu0 0.0
    %1072 = vmatmul.mubr.f32.gmra.mrb[0].mxu0 %v658
    %v1073 = vpop.f32.mrb[0].mxu0
    %v1074 = vadd.f32 %v929, %v1073
    %v1075 = vpop.f32.mrb[0].mxu0
    %1076 = vmatprep.mubr.f32.mxu0 0.0
    %1077 = vmatmul.mubr.f32.gmra.mrb[0].mxu0 %v661
    %v1078 = vpop.f32.mrb[0].mxu0
    %v1079 = vadd.f32 %v934, %v1078
    %v1080 = vpop.f32.mrb[0].mxu0
    %1081 = vmatprep.mubr.f32.mxu0 0.0
    %1082 = vmatmul.mubr.f32.gmra.mrb[0].mxu0 %v664
    %v1083 = vpop.f32.mrb[0].mxu0
    %v1084 = vadd.f32 %v939, %v1083
    %v1085 = vpop.f32.mrb[0].mxu0
    %1086 = vmatprep.mubr.f32.mxu0 0.0
    %1087 = vmatmul.mubr.f32.gmra.mrb[0].mxu0 %v667
    %v1088 = vpop.f32.mrb[0].mxu0
    %v1089 = vadd.f32 %v944, %v1088
    %v1090 = vpop.f32.mrb[0].mxu0
    %1091 = vmatprep.mubr.f32.mxu0 0.0
    %1092 = vmatmul.mubr.f32.gmra.mrb[0].mxu0 %v670
    %v1093 = vpop.f32.mrb[0].mxu0
    %v1094 = vadd.f32 %v949, %v1093
    %v1095 = vpop.f32.mrb[0].mxu0
    %1096 = vmatprep.mubr.f32.mxu0 0.0
    %1097 = vmatmul.mubr.f32.gmra.mrb[0].mxu0 %v673
    %v1098 = vpop.f32.mrb[0].mxu0
    %v1099 = vadd.f32 %v954, %v1098
    %v1100 = vpop.f32.mrb[0].mxu0
    %1101 = vmatprep.mubr.f32.mxu0 0.0
    %1102 = vmatmul.mubr.f32.gmra.mrb[0].mxu0 %v676
    %v1103 = vpop.f32.mrb[0].mxu0
    %v1104 = vadd.f32 %v959, %v1103
    %v1105 = vpop.f32.mrb[0].mxu0
    %1106 = vmatprep.mubr.f32.mxu0 0.0
    %1107 = vmatmul.mubr.f32.gmra.mrb[0].mxu0 %v679
    %v1108 = vpop.f32.mrb[0].mxu0
    %v1109 = vadd.f32 %v964, %v1108
    %v1110 = vpop.f32.mrb[0].mxu0
    %1111 = vmatprep.mubr.f32.mxu0 0.0
    %1112 = vmatmul.mubr.f32.gmra.mrb[0].mxu0 %v682
    %v1113 = vpop.f32.mrb[0].mxu0
    %v1114 = vadd.f32 %v969, %v1113
    %v1115 = vpop.f32.mrb[0].mxu0
    %1116 = vmatprep.mubr.f32.mxu0 0.0
    %1117 = vmatmul.mubr.f32.gmra.mrb[0].mxu0 %v685
    %v1118 = vpop.f32.mrb[0].mxu0
    %v1119 = vadd.f32 %v974, %v1118
    %v1120 = vpop.f32.mrb[0].mxu0
    %1121 = vdwg.mxu0
    %v1122 = vsel %vm27, %v1044, 0.0
    %v1123 = vsel %vm27, %v1049, 0.0
    %v1124 = vadd.f32 %v1122, %v1123
    %v1125 = vsel %vm27, %v1054, 0.0
    %v1126 = vadd.f32 %v1124, %v1125
    %v1127 = vsel %vm27, %v1059, 0.0
    %v1128 = vadd.f32 %v1126, %v1127
    %v1129 = vsel %vm27, %v1064, 0.0
    %v1130 = vadd.f32 %v1128, %v1129
    %v1131 = vsel %vm27, %v1069, 0.0
    %v1132 = vadd.f32 %v1130, %v1131
    %v1133 = vsel %vm27, %v1074, 0.0
    %v1134 = vadd.f32 %v1132, %v1133
    %v1135 = vsel %vm27, %v1079, 0.0
    %v1136 = vadd.f32 %v1134, %v1135
    %v1137 = vsel %vm27, %v1084, 0.0
    %v1138 = vadd.f32 %v1136, %v1137
    %v1139 = vsel %vm27, %v1089, 0.0
    %v1140 = vadd.f32 %v1138, %v1139
    %v1141 = vsel %vm27, %v1094, 0.0
    %v1142 = vadd.f32 %v1140, %v1141
    %v1143 = vsel %vm27, %v1099, 0.0
    %v1144 = vadd.f32 %v1142, %v1143
    %v1145 = vsel %vm27, %v1104, 0.0
    %v1146 = vadd.f32 %v1144, %v1145
    %v1147 = vsel %vm27, %v1109, 0.0
    %v1148 = vadd.f32 %v1146, %v1147
    %v1149 = vsel %vm27, %v1114, 0.0
    %v1150 = vadd.f32 %v1148, %v1149
    %v1151 = vsel %vm27, %v1119, 0.0
    %v1152 = vadd.f32 %v1150, %v1151
    %v1153 = vrot.slane %v1152, 4
    %v1154 = vadd.f32 %v1152, %v1153
    %v1155 = vrot.slane %v1154, 2
    %v1156 = vadd.f32 %v1154, %v1155
    %v1157 = vrot.slane %v1156, 1
    %v1158 = vadd.f32 %v1156, %v1157
    %v1159 = vmul.f32 %v1158, 0.0078125
    %v1160 = vmul.f32 %v1044, %v1044
    %v1161 = vmul.f32 %v1049, %v1049
    %v1162 = vmul.f32 %v1054, %v1054
    %v1163 = vmul.f32 %v1059, %v1059
    %v1164 = vmul.f32 %v1064, %v1064
    %v1165 = vmul.f32 %v1069, %v1069
    %v1166 = vmul.f32 %v1074, %v1074
    %v1167 = vmul.f32 %v1079, %v1079
    %v1168 = vmul.f32 %v1084, %v1084
    %v1169 = vmul.f32 %v1089, %v1089
    %v1170 = vmul.f32 %v1094, %v1094
    %v1171 = vmul.f32 %v1099, %v1099
    %v1172 = vmul.f32 %v1104, %v1104
    %v1173 = vmul.f32 %v1109, %v1109
    %v1174 = vmul.f32 %v1114, %v1114
    %v1175 = vmul.f32 %v1119, %v1119
    %v1176 = vsel %vm27, %v1160, 0.0
    %v1177 = vsel %vm27, %v1161, 0.0
    %v1178 = vadd.f32 %v1176, %v1177
    %v1179 = vsel %vm27, %v1162, 0.0
    %v1180 = vadd.f32 %v1178, %v1179
    %v1181 = vsel %vm27, %v1163, 0.0
    %v1182 = vadd.f32 %v1180, %v1181
    %v1183 = vsel %vm27, %v1164, 0.0
    %v1184 = vadd.f32 %v1182, %v1183
    %v1185 = vsel %vm27, %v1165, 0.0
    %v1186 = vadd.f32 %v1184, %v1185
    %v1187 = vsel %vm27, %v1166, 0.0
    %v1188 = vadd.f32 %v1186, %v1187
    %v1189 = vsel %vm27, %v1167, 0.0
    %v1190 = vadd.f32 %v1188, %v1189
    %v1191 = vsel %vm27, %v1168, 0.0
    %v1192 = vadd.f32 %v1190, %v1191
    %v1193 = vsel %vm27, %v1169, 0.0
    %v1194 = vadd.f32 %v1192, %v1193
    %v1195 = vsel %vm27, %v1170, 0.0
    %v1196 = vadd.f32 %v1194, %v1195
    %v1197 = vsel %vm27, %v1171, 0.0
    %v1198 = vadd.f32 %v1196, %v1197
    %v1199 = vsel %vm27, %v1172, 0.0
    %v1200 = vadd.f32 %v1198, %v1199
    %v1201 = vsel %vm27, %v1173, 0.0
    %v1202 = vadd.f32 %v1200, %v1201
    %v1203 = vsel %vm27, %v1174, 0.0
    %v1204 = vadd.f32 %v1202, %v1203
    %v1205 = vsel %vm27, %v1175, 0.0
    %v1206 = vadd.f32 %v1204, %v1205
    %v1207 = vrot.slane %v1206, 4
    %v1208 = vadd.f32 %v1206, %v1207
    %v1209 = vrot.slane %v1208, 2
    %v1210 = vadd.f32 %v1208, %v1209
    %v1211 = vrot.slane %v1210, 1
    %v1212 = vadd.f32 %v1210, %v1211
    %v1213 = vmul.f32 %v1212, 0.0078125
    %v1214 = vmul.f32 %v1159, %v1159
    %v1215 = vsub.f32 %v1213, %v1214
    %v1216 = vmax.f32 %v1215, 0.0
    %v1217 = vsub.f32 %v1044, %v1159
    %v1218 = vsub.f32 %v1049, %v1159
    %v1219 = vsub.f32 %v1054, %v1159
    %v1220 = vsub.f32 %v1059, %v1159
    %v1221 = vsub.f32 %v1064, %v1159
    %v1222 = vsub.f32 %v1069, %v1159
    %v1223 = vsub.f32 %v1074, %v1159
    %v1224 = vsub.f32 %v1079, %v1159
    %v1225 = vsub.f32 %v1084, %v1159
    %v1226 = vsub.f32 %v1089, %v1159
    %v1227 = vsub.f32 %v1094, %v1159
    %v1228 = vsub.f32 %v1099, %v1159
    %v1229 = vsub.f32 %v1104, %v1159
    %v1230 = vsub.f32 %v1109, %v1159
    %v1231 = vsub.f32 %v1114, %v1159
    %v1232 = vsub.f32 %v1119, %v1159
    %v1233 = vadd.f32 %v1216, 1e-05
    %v1234 = vrsqrt.pop %v1233
    %v1235 = vmul.f32 %v1217, %v1234
    %v1236 = vmul.f32 %v1218, %v1234
    %v1237 = vmul.f32 %v1219, %v1234
    %v1238 = vmul.f32 %v1220, %v1234
    %v1239 = vmul.f32 %v1221, %v1234
    %v1240 = vmul.f32 %v1222, %v1234
    %v1241 = vmul.f32 %v1223, %v1234
    %v1242 = vmul.f32 %v1224, %v1234
    %v1243 = vmul.f32 %v1225, %v1234
    %v1244 = vmul.f32 %v1226, %v1234
    %v1245 = vmul.f32 %v1227, %v1234
    %v1246 = vmul.f32 %v1228, %v1234
    %v1247 = vmul.f32 %v1229, %v1234
    %v1248 = vmul.f32 %v1230, %v1234
    %v1249 = vmul.f32 %v1231, %v1234
    %v1250 = vmul.f32 %v1232, %v1234
    %v1251 = vmax.f32 %v1235, 0.0
    %v1252 = vmax.f32 %v1236, 0.0
    %v1253 = vmax.f32 %v1237, 0.0
    %v1254 = vmax.f32 %v1238, 0.0
    %v1255 = vmax.f32 %v1239, 0.0
    %v1256 = vmax.f32 %v1240, 0.0
    %v1257 = vmax.f32 %v1241, 0.0
    %v1258 = vmax.f32 %v1242, 0.0
    %v1259 = vmax.f32 %v1243, 0.0
    %v1260 = vmax.f32 %v1244, 0.0
    %v1261 = vmax.f32 %v1245, 0.0
    %v1262 = vmax.f32 %v1246, 0.0
    %v1263 = vmax.f32 %v1247, 0.0
    %v1264 = vmax.f32 %v1248, 0.0
    %v1265 = vmax.f32 %v1249, 0.0
    %v1266 = vmax.f32 %v1250, 0.0
    %1267 = vst.msk [vmem:[%s85 + $0x1] sm:$0xff] %vm27, %v1251
    %1268 = vst.msk [vmem:[%s85 + $0x11] sm:$0xff] %vm27, %v1252
    %1269 = vst.msk [vmem:[%s85 + $0x21] sm:$0xff] %vm27, %v1253
    %1270 = vst.msk [vmem:[%s85 + $0x31] sm:$0xff] %vm27, %v1254
    %1271 = vst.msk [vmem:[%s85 + $0x41] sm:$0xff] %vm27, %v1255
    %1272 = vst.msk [vmem:[%s85 + $0x51] sm:$0xff] %vm27, %v1256
    %1273 = vst.msk [vmem:[%s85 + $0x61] sm:$0xff] %vm27, %v1257
    %1274 = vst.msk [vmem:[%s85 + $0x71] sm:$0xff] %vm27, %v1258
    %1275 = vst.msk [vmem:[%s85 + $0xa1] sm:$0xff] %vm27, %v1259
    %1276 = vst.msk [vmem:[%s85 + $0xb1] sm:$0xff] %vm27, %v1260
    %1277 = vst.msk [vmem:[%s85 + $0xc1] sm:$0xff] %vm27, %v1261
    %1278 = vst.msk [vmem:[%s85 + $0xd1] sm:$0xff] %vm27, %v1262
    %1279 = vst.msk [vmem:[%s85 + $0xe1] sm:$0xff] %vm27, %v1263
    %1280 = vst.msk [vmem:[%s85 + $0xf1] sm:$0xff] %vm27, %v1264
    %1281 = vst.msk [vmem:[%s85 + $0x101] sm:$0xff] %vm27, %v1265
    %1282 = vst.msk [vmem:[%s85 + $0x111] sm:$0xff] %vm27, %v1266
    %v1283 = vld [vmem:[#allocation2] sm:$0xff]
    %v1284 = vld [vmem:[#allocation2 + $0x10] sm:$0xff]
    %v1285 = vld [vmem:[#allocation2 + $0x20] sm:$0xff]
    %v1286 = vld [vmem:[#allocation2 + $0x30] sm:$0xff]
    %v1287 = vld [vmem:[#allocation2 + $0x40] sm:$0xff]
    %v1288 = vld [vmem:[#allocation2 + $0x50] sm:$0xff]
    %v1289 = vld [vmem:[#allocation2 + $0x60] sm:$0xff]
    %v1290 = vld [vmem:[#allocation2 + $0x70] sm:$0xff]
    %v1291 = vld [vmem:[#allocation2 + $0xa0] sm:$0xff]
    %v1292 = vld [vmem:[#allocation2 + $0xb0] sm:$0xff]
    %v1293 = vld [vmem:[#allocation2 + $0xc0] sm:$0xff]
    %v1294 = vld [vmem:[#allocation2 + $0xd0] sm:$0xff]
    %v1295 = vld [vmem:[#allocation2 + $0xe0] sm:$0xff]
    %v1296 = vld [vmem:[#allocation2 + $0xf0] sm:$0xff]
    %v1297 = vld [vmem:[#allocation2 + $0x100] sm:$0xff]
    %v1298 = vld [vmem:[#allocation2 + $0x110] sm:$0xff]
    %v1299 = vld [vmem:[#allocation2 + $0x1] sm:$0xff]
    %v1300 = vld [vmem:[#allocation2 + $0x11] sm:$0xff]
    %v1301 = vld [vmem:[#allocation2 + $0x21] sm:$0xff]
    %v1302 = vld [vmem:[#allocation2 + $0x31] sm:$0xff]
    %v1303 = vld [vmem:[#allocation2 + $0x41] sm:$0xff]
    %v1304 = vld [vmem:[#allocation2 + $0x51] sm:$0xff]
    %v1305 = vld [vmem:[#allocation2 + $0x61] sm:$0xff]
    %v1306 = vld [vmem:[#allocation2 + $0x71] sm:$0xff]
    %v1307 = vld [vmem:[#allocation2 + $0xa1] sm:$0xff]
    %v1308 = vld [vmem:[#allocation2 + $0xb1] sm:$0xff]
    %v1309 = vld [vmem:[#allocation2 + $0xc1] sm:$0xff]
    %v1310 = vld [vmem:[#allocation2 + $0xd1] sm:$0xff]
    %v1311 = vld [vmem:[#allocation2 + $0xe1] sm:$0xff]
    %v1312 = vld [vmem:[#allocation2 + $0xf1] sm:$0xff]
    %v1313 = vld [vmem:[#allocation2 + $0x101] sm:$0xff]
    %v1314 = vld [vmem:[#allocation2 + $0x111] sm:$0xff]
    %v1315 = vld [vmem:[#allocation2 + $0x2] sm:$0xff]
    %v1316 = vld [vmem:[#allocation2 + $0x12] sm:$0xff]
    %v1317 = vld [vmem:[#allocation2 + $0x22] sm:$0xff]
    %v1318 = vld [vmem:[#allocation2 + $0x32] sm:$0xff]
    %v1319 = vld [vmem:[#allocation2 + $0x42] sm:$0xff]
    %v1320 = vld [vmem:[#allocation2 + $0x52] sm:$0xff]
    %v1321 = vld [vmem:[#allocation2 + $0x62] sm:$0xff]
    %v1322 = vld [vmem:[#allocation2 + $0x72] sm:$0xff]
    %v1323 = vld [vmem:[#allocation2 + $0xa2] sm:$0xff]
    %v1324 = vld [vmem:[#allocation2 + $0xb2] sm:$0xff]
    %v1325 = vld [vmem:[#allocation2 + $0xc2] sm:$0xff]
    %v1326 = vld [vmem:[#allocation2 + $0xd2] sm:$0xff]
    %v1327 = vld [vmem:[#allocation2 + $0xe2] sm:$0xff]
    %v1328 = vld [vmem:[#allocation2 + $0xf2] sm:$0xff]
    %v1329 = vld [vmem:[#allocation2 + $0x102] sm:$0xff]
    %v1330 = vld [vmem:[#allocation2 + $0x112] sm:$0xff]
    %v1331 = vld [vmem:[%s85] sm:$0xff]
    %v1332 = vld [vmem:[%s85 + $0x10] sm:$0xff]
    %v1333 = vld [vmem:[%s85 + $0x20] sm:$0xff]
    %v1334 = vld [vmem:[%s85 + $0x30] sm:$0xff]
    %v1335 = vld [vmem:[%s85 + $0x40] sm:$0xff]
    %v1336 = vld [vmem:[%s85 + $0x50] sm:$0xff]
    %v1337 = vld [vmem:[%s85 + $0x60] sm:$0xff]
    %v1338 = vld [vmem:[%s85 + $0x70] sm:$0xff]
    %v1339 = vld [vmem:[%s85 + $0xa0] sm:$0xff]
    %v1340 = vld [vmem:[%s85 + $0xb0] sm:$0xff]
    %v1341 = vld [vmem:[%s85 + $0xc0] sm:$0xff]
    %v1342 = vld [vmem:[%s85 + $0xd0] sm:$0xff]
    %v1343 = vld [vmem:[%s85 + $0xe0] sm:$0xff]
    %v1344 = vld [vmem:[%s85 + $0xf0] sm:$0xff]
    %v1345 = vld [vmem:[%s85 + $0x100] sm:$0xff]
    %v1346 = vld [vmem:[%s85 + $0x110] sm:$0xff]
    %v1347 = vld [vmem:[%s85 + $0x1] sm:$0xff]
    %v1348 = vld [vmem:[%s85 + $0x11] sm:$0xff]
    %v1349 = vld [vmem:[%s85 + $0x21] sm:$0xff]
    %v1350 = vld [vmem:[%s85 + $0x31] sm:$0xff]
    %v1351 = vld [vmem:[%s85 + $0x41] sm:$0xff]
    %v1352 = vld [vmem:[%s85 + $0x51] sm:$0xff]
    %v1353 = vld [vmem:[%s85 + $0x61] sm:$0xff]
    %v1354 = vld [vmem:[%s85 + $0x71] sm:$0xff]
    %v1355 = vld [vmem:[%s85 + $0xa1] sm:$0xff]
    %v1356 = vld [vmem:[%s85 + $0xb1] sm:$0xff]
    %v1357 = vld [vmem:[%s85 + $0xc1] sm:$0xff]
    %v1358 = vld [vmem:[%s85 + $0xd1] sm:$0xff]
    %v1359 = vld [vmem:[%s85 + $0xe1] sm:$0xff]
    %v1360 = vld [vmem:[%s85 + $0xf1] sm:$0xff]
    %v1361 = vld [vmem:[%s85 + $0x101] sm:$0xff]
    %v1362 = vld [vmem:[%s85 + $0x111] sm:$0xff]
    %v1363 = vld [vmem:[%s85 + $0x2] sm:$0xff]
    %v1364 = vld [vmem:[%s85 + $0x12] sm:$0xff]
    %v1365 = vld [vmem:[%s85 + $0x22] sm:$0xff]
    %v1366 = vld [vmem:[%s85 + $0x32] sm:$0xff]
    %v1367 = vld [vmem:[%s85 + $0x42] sm:$0xff]
    %v1368 = vld [vmem:[%s85 + $0x52] sm:$0xff]
    %v1369 = vld [vmem:[%s85 + $0x62] sm:$0xff]
    %v1370 = vld [vmem:[%s85 + $0x72] sm:$0xff]
    %v1371 = vld [vmem:[%s85 + $0xa2] sm:$0xff]
    %v1372 = vld [vmem:[%s85 + $0xb2] sm:$0xff]
    %v1373 = vld [vmem:[%s85 + $0xc2] sm:$0xff]
    %v1374 = vld [vmem:[%s85 + $0xd2] sm:$0xff]
    %v1375 = vld [vmem:[%s85 + $0xe2] sm:$0xff]
    %v1376 = vld [vmem:[%s85 + $0xf2] sm:$0xff]
    %v1377 = vld [vmem:[%s85 + $0x102] sm:$0xff]
    %v1378 = vld [vmem:[%s85 + $0x112] sm:$0xff]
    %v1379 = vld [vmem:[%s198] sm:$0xff]
    %v1380 = vld [vmem:[%s198 + $0x10] sm:$0xff]
    %v1381 = vld [vmem:[%s198 + $0x20] sm:$0xff]
    %v1382 = vld [vmem:[%s198 + $0x30] sm:$0xff]
    %v1383 = vld [vmem:[%s198 + $0x40] sm:$0xff]
    %v1384 = vld [vmem:[%s198 + $0x50] sm:$0xff]
    %v1385 = vld [vmem:[%s198 + $0x60] sm:$0xff]
    %v1386 = vld [vmem:[%s198 + $0x70] sm:$0xff]
    %v1387 = vld [vmem:[%s198 + $0xa0] sm:$0xff]
    %v1388 = vld [vmem:[%s198 + $0xb0] sm:$0xff]
    %v1389 = vld [vmem:[%s198 + $0xc0] sm:$0xff]
    %v1390 = vld [vmem:[%s198 + $0xd0] sm:$0xff]
    %v1391 = vld [vmem:[%s198 + $0xe0] sm:$0xff]
    %v1392 = vld [vmem:[%s198 + $0xf0] sm:$0xff]
    %v1393 = vld [vmem:[%s198 + $0x100] sm:$0xff]
    %v1394 = vld [vmem:[%s198 + $0x110] sm:$0xff]
    %v1395 = vld [vmem:[%s198 + $0x1] sm:$0xff]
    %v1396 = vld [vmem:[%s198 + $0x11] sm:$0xff]
    %v1397 = vld [vmem:[%s198 + $0x21] sm:$0xff]
    %v1398 = vld [vmem:[%s198 + $0x31] sm:$0xff]
    %v1399 = vld [vmem:[%s198 + $0x41] sm:$0xff]
    %v1400 = vld [vmem:[%s198 + $0x51] sm:$0xff]
    %v1401 = vld [vmem:[%s198 + $0x61] sm:$0xff]
    %v1402 = vld [vmem:[%s198 + $0x71] sm:$0xff]
    %v1403 = vld [vmem:[%s198 + $0xa1] sm:$0xff]
    %v1404 = vld [vmem:[%s198 + $0xb1] sm:$0xff]
    %v1405 = vld [vmem:[%s198 + $0xc1] sm:$0xff]
    %v1406 = vld [vmem:[%s198 + $0xd1] sm:$0xff]
    %v1407 = vld [vmem:[%s198 + $0xe1] sm:$0xff]
    %v1408 = vld [vmem:[%s198 + $0xf1] sm:$0xff]
    %v1409 = vld [vmem:[%s198 + $0x101] sm:$0xff]
    %v1410 = vld [vmem:[%s198 + $0x111] sm:$0xff]
    %v1411 = vld [vmem:[%s198 + $0x2] sm:$0xff]
    %v1412 = vld [vmem:[%s198 + $0x12] sm:$0xff]
    %v1413 = vld [vmem:[%s198 + $0x22] sm:$0xff]
    %v1414 = vld [vmem:[%s198 + $0x32] sm:$0xff]
    %v1415 = vld [vmem:[%s198 + $0x42] sm:$0xff]
    %v1416 = vld [vmem:[%s198 + $0x52] sm:$0xff]
    %v1417 = vld [vmem:[%s198 + $0x62] sm:$0xff]
    %v1418 = vld [vmem:[%s198 + $0x72] sm:$0xff]
    %v1419 = vld [vmem:[%s198 + $0xa2] sm:$0xff]
    %v1420 = vld [vmem:[%s198 + $0xb2] sm:$0xff]
    %v1421 = vld [vmem:[%s198 + $0xc2] sm:$0xff]
    %v1422 = vld [vmem:[%s198 + $0xd2] sm:$0xff]
    %v1423 = vld [vmem:[%s198 + $0xe2] sm:$0xff]
    %v1424 = vld [vmem:[%s198 + $0xf2] sm:$0xff]
    %v1425 = vld [vmem:[%s198 + $0x102] sm:$0xff]
    %v1426 = vld [vmem:[%s198 + $0x112] sm:$0xff]
    %1443 = vrot.lane.b32.xlu0 %v1299, 64
    %v1444 = vpop.permute.xlu0 %1443
    %1445 = vrot.lane.b32.xlu0 %v1300, 64
    %v1446 = vpop.permute.xlu0 %1445
    %1447 = vrot.lane.b32.xlu0 %v1301, 64
    %v1448 = vpop.permute.xlu0 %1447
    %1449 = vrot.lane.b32.xlu0 %v1302, 64
    %v1450 = vpop.permute.xlu0 %1449
    %1451 = vrot.lane.b32.xlu0 %v1303, 64
    %v1452 = vpop.permute.xlu0 %1451
    %1453 = vrot.lane.b32.xlu0 %v1304, 64
    %v1454 = vpop.permute.xlu0 %1453
    %1455 = vrot.lane.b32.xlu0 %v1305, 64
    %v1456 = vpop.permute.xlu0 %1455
    %1457 = vrot.lane.b32.xlu0 %v1306, 64
    %v1458 = vpop.permute.xlu0 %1457
    %1459 = vrot.lane.b32.xlu0 %v1307, 64
    %v1460 = vpop.permute.xlu0 %1459
    %1461 = vrot.lane.b32.xlu0 %v1308, 64
    %v1462 = vpop.permute.xlu0 %1461
    %1463 = vrot.lane.b32.xlu0 %v1309, 64
    %v1464 = vpop.permute.xlu0 %1463
    %1465 = vrot.lane.b32.xlu0 %v1310, 64
    %v1466 = vpop.permute.xlu0 %1465
    %1467 = vrot.lane.b32.xlu0 %v1311, 64
    %v1468 = vpop.permute.xlu0 %1467
    %1469 = vrot.lane.b32.xlu0 %v1312, 64
    %v1470 = vpop.permute.xlu0 %1469
    %1471 = vrot.lane.b32.xlu0 %v1313, 64
    %v1472 = vpop.permute.xlu0 %1471
    %1473 = vrot.lane.b32.xlu0 %v1314, 64
    %v1474 = vpop.permute.xlu0 %1473
    %1507 = vrot.lane.b32.xlu0 %v1331, 64
    %v1508 = vpop.permute.xlu0 %1507
    %1509 = vrot.lane.b32.xlu0 %v1332, 64
    %v1510 = vpop.permute.xlu0 %1509
    %1511 = vrot.lane.b32.xlu0 %v1333, 64
    %v1512 = vpop.permute.xlu0 %1511
    %1513 = vrot.lane.b32.xlu0 %v1334, 64
    %v1514 = vpop.permute.xlu0 %1513
    %1515 = vrot.lane.b32.xlu0 %v1335, 64
    %v1516 = vpop.permute.xlu0 %1515
    %1517 = vrot.lane.b32.xlu0 %v1336, 64
    %v1518 = vpop.permute.xlu0 %1517
    %1519 = vrot.lane.b32.xlu0 %v1337, 64
    %v1520 = vpop.permute.xlu0 %1519
    %1521 = vrot.lane.b32.xlu0 %v1338, 64
    %v1522 = vpop.permute.xlu0 %1521
    %1523 = vrot.lane.b32.xlu0 %v1339, 64
    %v1524 = vpop.permute.xlu0 %1523
    %1525 = vrot.lane.b32.xlu0 %v1340, 64
    %v1526 = vpop.permute.xlu0 %1525
    %1527 = vrot.lane.b32.xlu0 %v1341, 64
    %v1528 = vpop.permute.xlu0 %1527
    %1529 = vrot.lane.b32.xlu0 %v1342, 64
    %v1530 = vpop.permute.xlu0 %1529
    %1531 = vrot.lane.b32.xlu0 %v1343, 64
    %v1532 = vpop.permute.xlu0 %1531
    %1533 = vrot.lane.b32.xlu0 %v1344, 64
    %v1534 = vpop.permute.xlu0 %1533
    %1535 = vrot.lane.b32.xlu0 %v1345, 64
    %v1536 = vpop.permute.xlu0 %1535
    %1537 = vrot.lane.b32.xlu0 %v1346, 64
    %v1538 = vpop.permute.xlu0 %1537
    %1571 = vrot.lane.b32.xlu0 %v1363, 64
    %v1572 = vpop.permute.xlu0 %1571
    %1573 = vrot.lane.b32.xlu0 %v1364, 64
    %v1574 = vpop.permute.xlu0 %1573
    %1575 = vrot.lane.b32.xlu0 %v1365, 64
    %v1576 = vpop.permute.xlu0 %1575
    %1577 = vrot.lane.b32.xlu0 %v1366, 64
    %v1578 = vpop.permute.xlu0 %1577
    %1579 = vrot.lane.b32.xlu0 %v1367, 64
    %v1580 = vpop.permute.xlu0 %1579
    %1581 = vrot.lane.b32.xlu0 %v1368, 64
    %v1582 = vpop.permute.xlu0 %1581
    %1583 = vrot.lane.b32.xlu0 %v1369, 64
    %v1584 = vpop.permute.xlu0 %1583
    %1585 = vrot.lane.b32.xlu0 %v1370, 64
    %v1586 = vpop.permute.xlu0 %1585
    %1587 = vrot.lane.b32.xlu0 %v1371, 64
    %v1588 = vpop.permute.xlu0 %1587
    %1589 = vrot.lane.b32.xlu0 %v1372, 64
    %v1590 = vpop.permute.xlu0 %1589
    %1591 = vrot.lane.b32.xlu0 %v1373, 64
    %v1592 = vpop.permute.xlu0 %1591
    %1593 = vrot.lane.b32.xlu0 %v1374, 64
    %v1594 = vpop.permute.xlu0 %1593
    %1595 = vrot.lane.b32.xlu0 %v1375, 64
    %v1596 = vpop.permute.xlu0 %1595
    %1597 = vrot.lane.b32.xlu0 %v1376, 64
    %v1598 = vpop.permute.xlu0 %1597
    %1599 = vrot.lane.b32.xlu0 %v1377, 64
    %v1600 = vpop.permute.xlu0 %1599
    %1601 = vrot.lane.b32.xlu0 %v1378, 64
    %v1602 = vpop.permute.xlu0 %1601
    %1635 = vrot.lane.b32.xlu0 %v1395, 64
    %v1636 = vpop.permute.xlu0 %1635
    %1637 = vrot.lane.b32.xlu0 %v1396, 64
    %v1638 = vpop.permute.xlu0 %1637
    %1639 = vrot.lane.b32.xlu0 %v1397, 64
    %v1640 = vpop.permute.xlu0 %1639
    %1641 = vrot.lane.b32.xlu0 %v1398, 64
    %v1642 = vpop.permute.xlu0 %1641
    %1643 = vrot.lane.b32.xlu0 %v1399, 64
    %v1644 = vpop.permute.xlu0 %1643
    %1645 = vrot.lane.b32.xlu0 %v1400, 64
    %v1646 = vpop.permute.xlu0 %1645
    %1647 = vrot.lane.b32.xlu0 %v1401, 64
    %v1648 = vpop.permute.xlu0 %1647
    %1649 = vrot.lane.b32.xlu0 %v1402, 64
    %v1650 = vpop.permute.xlu0 %1649
    %1651 = vrot.lane.b32.xlu0 %v1403, 64
    %v1652 = vpop.permute.xlu0 %1651
    %1653 = vrot.lane.b32.xlu0 %v1404, 64
    %v1654 = vpop.permute.xlu0 %1653
    %1655 = vrot.lane.b32.xlu0 %v1405, 64
    %v1656 = vpop.permute.xlu0 %1655
    %1657 = vrot.lane.b32.xlu0 %v1406, 64
    %v1658 = vpop.permute.xlu0 %1657
    %1659 = vrot.lane.b32.xlu0 %v1407, 64
    %v1660 = vpop.permute.xlu0 %1659
    %1661 = vrot.lane.b32.xlu0 %v1408, 64
    %v1662 = vpop.permute.xlu0 %1661
    %1663 = vrot.lane.b32.xlu0 %v1409, 64
    %v1664 = vpop.permute.xlu0 %1663
    %1665 = vrot.lane.b32.xlu0 %v1410, 64
    %v1666 = vpop.permute.xlu0 %1665
    %v1683 = vsel %vm27, %v1283, %v1444
    %v1684 = vsel %vm27, %v1284, %v1446
    %v1685 = vsel %vm27, %v1285, %v1448
    %v1686 = vsel %vm27, %v1286, %v1450
    %v1687 = vsel %vm27, %v1287, %v1452
    %v1688 = vsel %vm27, %v1288, %v1454
    %v1689 = vsel %vm27, %v1289, %v1456
    %v1690 = vsel %vm27, %v1290, %v1458
    %v1691 = vsel %vm27, %v1291, %v1460
    %v1692 = vsel %vm27, %v1292, %v1462
    %v1693 = vsel %vm27, %v1293, %v1464
    %v1694 = vsel %vm27, %v1294, %v1466
    %v1695 = vsel %vm27, %v1295, %v1468
    %v1696 = vsel %vm27, %v1296, %v1470
    %v1697 = vsel %vm27, %v1297, %v1472
    %v1698 = vsel %vm27, %v1298, %v1474
    %v1699 = vsel %vm27, %v1315, %v1508
    %v1700 = vsel %vm27, %v1316, %v1510
    %v1701 = vsel %vm27, %v1317, %v1512
    %v1702 = vsel %vm27, %v1318, %v1514
    %v1703 = vsel %vm27, %v1319, %v1516
    %v1704 = vsel %vm27, %v1320, %v1518
    %v1705 = vsel %vm27, %v1321, %v1520
    %v1706 = vsel %vm27, %v1322, %v1522
    %v1707 = vsel %vm27, %v1323, %v1524
    %v1708 = vsel %vm27, %v1324, %v1526
    %v1709 = vsel %vm27, %v1325, %v1528
    %v1710 = vsel %vm27, %v1326, %v1530
    %v1711 = vsel %vm27, %v1327, %v1532
    %v1712 = vsel %vm27, %v1328, %v1534
    %v1713 = vsel %vm27, %v1329, %v1536
    %v1714 = vsel %vm27, %v1330, %v1538
    %v1715 = vsel %vm27, %v1347, %v1572
    %v1716 = vsel %vm27, %v1348, %v1574
    %v1717 = vsel %vm27, %v1349, %v1576
    %v1718 = vsel %vm27, %v1350, %v1578
    %v1719 = vsel %vm27, %v1351, %v1580
    %v1720 = vsel %vm27, %v1352, %v1582
    %v1721 = vsel %vm27, %v1353, %v1584
    %v1722 = vsel %vm27, %v1354, %v1586
    %v1723 = vsel %vm27, %v1355, %v1588
    %v1724 = vsel %vm27, %v1356, %v1590
    %v1725 = vsel %vm27, %v1357, %v1592
    %v1726 = vsel %vm27, %v1358, %v1594
    %v1727 = vsel %vm27, %v1359, %v1596
    %v1728 = vsel %vm27, %v1360, %v1598
    %v1729 = vsel %vm27, %v1361, %v1600
    %v1730 = vsel %vm27, %v1362, %v1602
    %v1731 = vsel %vm27, %v1379, %v1636
    %v1732 = vsel %vm27, %v1380, %v1638
    %v1733 = vsel %vm27, %v1381, %v1640
    %v1734 = vsel %vm27, %v1382, %v1642
    %v1735 = vsel %vm27, %v1383, %v1644
    %v1736 = vsel %vm27, %v1384, %v1646
    %v1737 = vsel %vm27, %v1385, %v1648
    %v1738 = vsel %vm27, %v1386, %v1650
    %v1739 = vsel %vm27, %v1387, %v1652
    %v1740 = vsel %vm27, %v1388, %v1654
    %v1741 = vsel %vm27, %v1389, %v1656
    %v1742 = vsel %vm27, %v1390, %v1658
    %v1743 = vsel %vm27, %v1391, %v1660
    %v1744 = vsel %vm27, %v1392, %v1662
    %v1745 = vsel %vm27, %v1393, %v1664
    %v1746 = vsel %vm27, %v1394, %v1666
    %v1747 = vld [vmem:[%s2] sm:$0xff]
    %v1748 = vld [vmem:[%s2 + $0x8] sm:$0xff]
    %v1749 = vld [vmem:[%s2 + $0x10] sm:$0xff]
    %v1750 = vld [vmem:[%s2 + $0x18] sm:$0xff]
    %v1751 = vld [vmem:[%s2 + $0x20] sm:$0xff]
    %v1752 = vld [vmem:[%s2 + $0x28] sm:$0xff]
    %v1753 = vld [vmem:[%s2 + $0x30] sm:$0xff]
    %v1754 = vld [vmem:[%s2 + $0x38] sm:$0xff]
    %v1755 = vld [vmem:[%s2 + $0x40] sm:$0xff]
    %v1756 = vld [vmem:[%s2 + $0x48] sm:$0xff]
    %v1757 = vld [vmem:[%s2 + $0x50] sm:$0xff]
    %v1758 = vld [vmem:[%s2 + $0x58] sm:$0xff]
    %v1759 = vld [vmem:[%s2 + $0x60] sm:$0xff]
    %v1760 = vld [vmem:[%s2 + $0x68] sm:$0xff]
    %v1761 = vld [vmem:[%s2 + $0x70] sm:$0xff]
    %v1762 = vld [vmem:[%s2 + $0x78] sm:$0xff]
    %v1763 = vld [vmem:[%s2 + $0x80] sm:$0xff]
    %v1764 = vld [vmem:[%s2 + $0x88] sm:$0xff]
    %v1765 = vld [vmem:[%s2 + $0x90] sm:$0xff]
    %v1766 = vld [vmem:[%s2 + $0x98] sm:$0xff]
    %v1767 = vld [vmem:[%s2 + $0xa0] sm:$0xff]
    %v1768 = vld [vmem:[%s2 + $0xa8] sm:$0xff]
    %v1769 = vld [vmem:[%s2 + $0xb0] sm:$0xff]
    %v1770 = vld [vmem:[%s2 + $0xb8] sm:$0xff]
    %v1771 = vld [vmem:[%s2 + $0xc0] sm:$0xff]
    %v1772 = vld [vmem:[%s2 + $0xc8] sm:$0xff]
    %v1773 = vld [vmem:[%s2 + $0xd0] sm:$0xff]
    %v1774 = vld [vmem:[%s2 + $0xd8] sm:$0xff]
    %v1775 = vld [vmem:[%s2 + $0xe0] sm:$0xff]
    %v1776 = vld [vmem:[%s2 + $0xe8] sm:$0xff]
    %v1777 = vld [vmem:[%s2 + $0xf0] sm:$0xff]
    %v1778 = vld [vmem:[%s2 + $0xf8] sm:$0xff]
    %v1779 = vld [vmem:[%s2 + $0x100] sm:$0xff]
    %v1780 = vld [vmem:[%s2 + $0x108] sm:$0xff]
    %v1781 = vld [vmem:[%s2 + $0x110] sm:$0xff]
    %v1782 = vld [vmem:[%s2 + $0x118] sm:$0xff]
    %v1783 = vld [vmem:[%s2 + $0x120] sm:$0xff]
    %v1784 = vld [vmem:[%s2 + $0x128] sm:$0xff]
    %v1785 = vld [vmem:[%s2 + $0x130] sm:$0xff]
    %v1786 = vld [vmem:[%s2 + $0x138] sm:$0xff]
    %v1787 = vld [vmem:[%s2 + $0x140] sm:$0xff]
    %v1788 = vld [vmem:[%s2 + $0x148] sm:$0xff]
    %v1789 = vld [vmem:[%s2 + $0x150] sm:$0xff]
    %v1790 = vld [vmem:[%s2 + $0x158] sm:$0xff]
    %v1791 = vld [vmem:[%s2 + $0x160] sm:$0xff]
    %v1792 = vld [vmem:[%s2 + $0x168] sm:$0xff]
    %v1793 = vld [vmem:[%s2 + $0x170] sm:$0xff]
    %v1794 = vld [vmem:[%s2 + $0x178] sm:$0xff]
    %v1795 = vld [vmem:[%s2 + $0x180] sm:$0xff]
    %v1796 = vld [vmem:[%s2 + $0x188] sm:$0xff]
    %v1797 = vld [vmem:[%s2 + $0x190] sm:$0xff]
    %v1798 = vld [vmem:[%s2 + $0x198] sm:$0xff]
    %v1799 = vld [vmem:[%s2 + $0x1a0] sm:$0xff]
    %v1800 = vld [vmem:[%s2 + $0x1a8] sm:$0xff]
    %v1801 = vld [vmem:[%s2 + $0x1b0] sm:$0xff]
    %v1802 = vld [vmem:[%s2 + $0x1b8] sm:$0xff]
    %v1803 = vld [vmem:[%s2 + $0x1c0] sm:$0xff]
    %v1804 = vld [vmem:[%s2 + $0x1c8] sm:$0xff]
    %v1805 = vld [vmem:[%s2 + $0x1d0] sm:$0xff]
    %v1806 = vld [vmem:[%s2 + $0x1d8] sm:$0xff]
    %v1807 = vld [vmem:[%s2 + $0x1e0] sm:$0xff]
    %v1808 = vld [vmem:[%s2 + $0x1e8] sm:$0xff]
    %v1809 = vld [vmem:[%s2 + $0x1f0] sm:$0xff]
    %v1810 = vld [vmem:[%s2 + $0x1f8] sm:$0xff]
    %v1811 = vld [vmem:[%s2 + $0x200] sm:$0xff]
    %v1812 = vld [vmem:[%s2 + $0x208] sm:$0xff]
    %v1813 = vld [vmem:[%s2 + $0x210] sm:$0xff]
    %v1814 = vld [vmem:[%s2 + $0x218] sm:$0xff]
    %v1815 = vld [vmem:[%s2 + $0x220] sm:$0xff]
    %v1816 = vld [vmem:[%s2 + $0x228] sm:$0xff]
    %v1817 = vld [vmem:[%s2 + $0x230] sm:$0xff]
    %v1818 = vld [vmem:[%s2 + $0x238] sm:$0xff]
    %v1820 = vsel %vm27, %v1411, 0
    %v1823 = vsel %vm27, %v1412, 0
    %v1826 = vsel %vm27, %v1413, 0
    %v1829 = vsel %vm27, %v1414, 0
    %v1832 = vsel %vm27, %v1415, 0
    %v1835 = vsel %vm27, %v1416, 0
    %v1838 = vsel %vm27, %v1417, 0
    %v1841 = vsel %vm27, %v1418, 0
    %v1844 = vsel %vm27, %v1419, 0
    %v1847 = vsel %vm27, %v1420, 0
    %v1850 = vsel %vm27, %v1421, 0
    %v1853 = vsel %vm27, %v1422, 0
    %v1856 = vsel %vm27, %v1423, 0
    %v1859 = vsel %vm27, %v1424, 0
    %v1862 = vsel %vm27, %v1425, 0
    %v1865 = vsel %vm27, %v1426, 0
    %1867 = vmatprep.subr.mxu0 0.0
    %1868 = vmatpush1.msra.mxu0 %v1747
    %1869 = vmatprep.subr.mxu0 0.0
    %1870 = vmatpush1.msra.mxu0 %v1748
    %1871 = vmatprep.subr.mxu0 0.0
    %1872 = vmatpush1.msra.mxu0 %v1749
    %1873 = vmatprep.subr.mxu0 0.0
    %1874 = vmatpush1.msra.mxu0 %v1750
    %1875 = vmatprep.subr.mxu0 0.0
    %1876 = vmatpush1.msra.mxu0 %v1751
    %1877 = vmatprep.subr.mxu0 0.0
    %1878 = vmatpush1.msra.mxu0 %v1752
    %1879 = vmatprep.subr.mxu0 0.0
    %1880 = vmatpush1.msra.mxu0 %v1753
    %1881 = vmatprep.subr.mxu0 0.0
    %1882 = vmatpush1.msra.mxu0 %v1754
    %1883 = vmatprep.subr.mxu0 0.0
    %1884 = vmatpush1.msra.mxu0 %v1755
    %1885 = vmatprep.subr.mxu0 0.0
    %1886 = vmatpush1.msra.mxu0 %v1756
    %1887 = vmatprep.subr.mxu0 0.0
    %1888 = vmatpush1.msra.mxu0 %v1757
    %1889 = vmatprep.subr.mxu0 0.0
    %1890 = vmatpush1.msra.mxu0 %v1758
    %1891 = vmatprep.subr.mxu0 0.0
    %1892 = vmatpush1.msra.mxu0 %v1759
    %1893 = vmatprep.subr.mxu0 0.0
    %1894 = vmatpush1.msra.mxu0 %v1760
    %1895 = vmatprep.subr.mxu0 0.0
    %1896 = vmatpush1.msra.mxu0 %v1761
    %1897 = vmatprep.subr.mxu0 0.0
    %1898 = vmatpush1.msra.mxu0 %v1762
    %1899 = vmatprep.subr.mxu0 0.0
    %1900 = vmatpush1.msra.mxu0 %v1763
    %1901 = vmatprep.subr.mxu0 0.0
    %1902 = vmatpush1.msra.mxu0 %v1764
    %1903 = vmatprep.subr.mxu0 0.0
    %1904 = vmatpush1.msra.mxu0 %v1765
    %1905 = vmatprep.subr.mxu0 0.0
    %1906 = vmatpush1.msra.mxu0 %v1766
    %1907 = vmatprep.subr.mxu0 0.0
    %1908 = vmatpush1.msra.mxu0 %v1767
    %1909 = vmatprep.subr.mxu0 0.0
    %1910 = vmatpush1.msra.mxu0 %v1768
    %1911 = vmatprep.subr.mxu0 0.0
    %1912 = vmatpush1.msra.mxu0 %v1769
    %1913 = vmatprep.subr.mxu0 0.0
    %1914 = vmatpush1.msra.mxu0 %v1770
    %1915 = vmatprep.subr.mxu0 0.0
    %1916 = vmatpush1.msra.mxu0 %v1771
    %1917 = vmatprep.subr.mxu0 0.0
    %1918 = vmatpush1.msra.mxu0 %v1772
    %1919 = vmatprep.subr.mxu0 0.0
    %1920 = vmatpush1.msra.mxu0 %v1773
    %1921 = vmatprep.subr.mxu0 0.0
    %1922 = vmatpush1.msra.mxu0 %v1774
    %1923 = vmatprep.subr.mxu0 0.0
    %1924 = vmatpush1.msra.mxu0 %v1775
    %1925 = vmatprep.subr.mxu0 0.0
    %1926 = vmatpush1.msra.mxu0 %v1776
    %1927 = vmatprep.subr.mxu0 0.0
    %1928 = vmatpush1.msra.mxu0 %v1777
    %1929 = vmatprep.subr.mxu0 0.0
    %1930 = vmatpush1.msra.mxu0 %v1778
    %1931 = vmatprep.mubr.f32.mxu0 %v1699
    %1932 = vmatmul.mubr.f32.gmra.mrb[0].mxu0 %v1683
    %v1933 = vpop.f32.mrb[0].mxu0
    %v1934 = vadd.f32 0.0, %v1933
    %v1935 = vpop.f32.mrb[0].mxu0
    %1936 = vmatprep.mubr.f32.mxu0 %v1700
    %1937 = vmatmul.mubr.f32.gmra.mrb[0].mxu0 %v1684
    %v1938 = vpop.f32.mrb[0].mxu0
    %v1939 = vadd.f32 0.0, %v1938
    %v1940 = vpop.f32.mrb[0].mxu0
    %1941 = vmatprep.mubr.f32.mxu0 %v1701
    %1942 = vmatmul.mubr.f32.gmra.mrb[0].mxu0 %v1685
    %v1943 = vpop.f32.mrb[0].mxu0
    %v1944 = vadd.f32 0.0, %v1943
    %v1945 = vpop.f32.mrb[0].mxu0
    %1946 = vmatprep.mubr.f32.mxu0 %v1702
    %1947 = vmatmul.mubr.f32.gmra.mrb[0].mxu0 %v1686
    %v1948 = vpop.f32.mrb[0].mxu0
    %v1949 = vadd.f32 0.0, %v1948
    %v1950 = vpop.f32.mrb[0].mxu0
    %1951 = vmatprep.mubr.f32.mxu0 %v1703
    %1952 = vmatmul.mubr.f32.gmra.mrb[0].mxu0 %v1687
    %v1953 = vpop.f32.mrb[0].mxu0
    %v1954 = vadd.f32 0.0, %v1953
    %v1955 = vpop.f32.mrb[0].mxu0
    %1956 = vmatprep.mubr.f32.mxu0 %v1704
    %1957 = vmatmul.mubr.f32.gmra.mrb[0].mxu0 %v1688
    %v1958 = vpop.f32.mrb[0].mxu0
    %v1959 = vadd.f32 0.0, %v1958
    %v1960 = vpop.f32.mrb[0].mxu0
    %1961 = vmatprep.mubr.f32.mxu0 %v1705
    %1962 = vmatmul.mubr.f32.gmra.mrb[0].mxu0 %v1689
    %v1963 = vpop.f32.mrb[0].mxu0
    %v1964 = vadd.f32 0.0, %v1963
    %v1965 = vpop.f32.mrb[0].mxu0
    %1966 = vmatprep.mubr.f32.mxu0 %v1706
    %1967 = vmatmul.mubr.f32.gmra.mrb[0].mxu0 %v1690
    %v1968 = vpop.f32.mrb[0].mxu0
    %v1969 = vadd.f32 0.0, %v1968
    %v1970 = vpop.f32.mrb[0].mxu0
    %1971 = vmatprep.mubr.f32.mxu0 %v1707
    %1972 = vmatmul.mubr.f32.gmra.mrb[0].mxu0 %v1691
    %v1973 = vpop.f32.mrb[0].mxu0
    %v1974 = vadd.f32 0.0, %v1973
    %v1975 = vpop.f32.mrb[0].mxu0
    %1976 = vmatprep.mubr.f32.mxu0 %v1708
    %1977 = vmatmul.mubr.f32.gmra.mrb[0].mxu0 %v1692
    %v1978 = vpop.f32.mrb[0].mxu0
    %v1979 = vadd.f32 0.0, %v1978
    %v1980 = vpop.f32.mrb[0].mxu0
    %1981 = vmatprep.mubr.f32.mxu0 %v1709
    %1982 = vmatmul.mubr.f32.gmra.mrb[0].mxu0 %v1693
    %v1983 = vpop.f32.mrb[0].mxu0
    %v1984 = vadd.f32 0.0, %v1983
    %v1985 = vpop.f32.mrb[0].mxu0
    %1986 = vmatprep.mubr.f32.mxu0 %v1710
    %1987 = vmatmul.mubr.f32.gmra.mrb[0].mxu0 %v1694
    %v1988 = vpop.f32.mrb[0].mxu0
    %v1989 = vadd.f32 0.0, %v1988
    %v1990 = vpop.f32.mrb[0].mxu0
    %1991 = vmatprep.mubr.f32.mxu0 %v1711
    %1992 = vmatmul.mubr.f32.gmra.mrb[0].mxu0 %v1695
    %v1993 = vpop.f32.mrb[0].mxu0
    %v1994 = vadd.f32 0.0, %v1993
    %v1995 = vpop.f32.mrb[0].mxu0
    %1996 = vmatprep.mubr.f32.mxu0 %v1712
    %1997 = vmatmul.mubr.f32.gmra.mrb[0].mxu0 %v1696
    %v1998 = vpop.f32.mrb[0].mxu0
    %v1999 = vadd.f32 0.0, %v1998
    %v2000 = vpop.f32.mrb[0].mxu0
    %2001 = vmatprep.mubr.f32.mxu0 %v1713
    %2002 = vmatmul.mubr.f32.gmra.mrb[0].mxu0 %v1697
    %v2003 = vpop.f32.mrb[0].mxu0
    %v2004 = vadd.f32 0.0, %v2003
    %v2005 = vpop.f32.mrb[0].mxu0
    %2006 = vmatprep.mubr.f32.mxu0 %v1714
    %2007 = vmatmul.mubr.f32.gmra.mrb[0].mxu0 %v1698
    %v2008 = vpop.f32.mrb[0].mxu0
    %v2009 = vadd.f32 0.0, %v2008
    %v2010 = vpop.f32.mrb[0].mxu0
    %2011 = vdwg.mxu0
    %2012 = vmatprep.subr.mxu0 0.0
    %2013 = vmatpush1.msra.mxu0 %v1779
    %2014 = vmatprep.subr.mxu0 0.0
    %2015 = vmatpush1.msra.mxu0 %v1780
    %2016 = vmatprep.subr.mxu0 0.0
    %2017 = vmatpush1.msra.mxu0 %v1781
    %2018 = vmatprep.subr.mxu0 0.0
    %2019 = vmatpush1.msra.mxu0 %v1782
    %2020 = vmatprep.subr.mxu0 0.0
    %2021 = vmatpush1.msra.mxu0 %v1783
    %2022 = vmatprep.subr.mxu0 0.0
    %2023 = vmatpush1.msra.mxu0 %v1784
    %2024 = vmatprep.subr.mxu0 0.0
    %2025 = vmatpush1.msra.mxu0 %v1785
    %2026 = vmatprep.subr.mxu0 0.0
    %2027 = vmatpush1.msra.mxu0 %v1786
    %2028 = vmatprep.subr.mxu0 0.0
    %2029 = vmatpush1.msra.mxu0 %v1787
    %2030 = vmatprep.subr.mxu0 0.0
    %2031 = vmatpush1.msra.mxu0 %v1788
    %2032 = vmatprep.subr.mxu0 0.0
    %2033 = vmatpush1.msra.mxu0 %v1789
    %2034 = vmatprep.subr.mxu0 0.0
    %2035 = vmatpush1.msra.mxu0 %v1790
    %2036 = vmatprep.subr.mxu0 0.0
    %2037 = vmatpush1.msra.mxu0 %v1791
    %2038 = vmatprep.subr.mxu0 0.0
    %2039 = vmatpush1.msra.mxu0 %v1792
    %2040 = vmatprep.subr.mxu0 0.0
    %2041 = vmatpush1.msra.mxu0 %v1793
    %2042 = vmatprep.subr.mxu0 0.0
    %2043 = vmatpush1.msra.mxu0 %v1794
    %2044 = vmatprep.subr.mxu0 0.0
    %2045 = vmatpush1.msra.mxu0 %v1795
    %2046 = vmatprep.subr.mxu0 0.0
    %2047 = vmatpush1.msra.mxu0 %v1796
    %2048 = vmatprep.subr.mxu0 0.0
    %2049 = vmatpush1.msra.mxu0 %v1797
    %2050 = vmatprep.subr.mxu0 0.0
    %2051 = vmatpush1.msra.mxu0 %v1798
    %2052 = vmatprep.subr.mxu0 0.0
    %2053 = vmatpush1.msra.mxu0 %v1799
    %2054 = vmatprep.subr.mxu0 0.0
    %2055 = vmatpush1.msra.mxu0 %v1800
    %2056 = vmatprep.subr.mxu0 0.0
    %2057 = vmatpush1.msra.mxu0 %v1801
    %2058 = vmatprep.subr.mxu0 0.0
    %2059 = vmatpush1.msra.mxu0 %v1802
    %2060 = vmatprep.subr.mxu0 0.0
    %2061 = vmatpush1.msra.mxu0 %v1803
    %2062 = vmatprep.subr.mxu0 0.0
    %2063 = vmatpush1.msra.mxu0 %v1804
    %2064 = vmatprep.subr.mxu0 0.0
    %2065 = vmatpush1.msra.mxu0 %v1805
    %2066 = vmatprep.subr.mxu0 0.0
    %2067 = vmatpush1.msra.mxu0 %v1806
    %2068 = vmatprep.subr.mxu0 0.0
    %2069 = vmatpush1.msra.mxu0 %v1807
    %2070 = vmatprep.subr.mxu0 0.0
    %2071 = vmatpush1.msra.mxu0 %v1808
    %2072 = vmatprep.subr.mxu0 0.0
    %2073 = vmatpush1.msra.mxu0 %v1809
    %2074 = vmatprep.subr.mxu0 0.0
    %2075 = vmatpush1.msra.mxu0 %v1810
    %2076 = vmatprep.mubr.f32.mxu0 %v1731
    %2077 = vmatmul.mubr.f32.gmra.mrb[0].mxu0 %v1715
    %v2078 = vpop.f32.mrb[0].mxu0
    %v2079 = vadd.f32 %v1934, %v2078
    %v2080 = vpop.f32.mrb[0].mxu0
    %2081 = vmatprep.mubr.f32.mxu0 %v1732
    %2082 = vmatmul.mubr.f32.gmra.mrb[0].mxu0 %v1716
    %v2083 = vpop.f32.mrb[0].mxu0
    %v2084 = vadd.f32 %v1939, %v2083
    %v2085 = vpop.f32.mrb[0].mxu0
    %2086 = vmatprep.mubr.f32.mxu0 %v1733
    %2087 = vmatmul.mubr.f32.gmra.mrb[0].mxu0 %v1717
    %v2088 = vpop.f32.mrb[0].mxu0
    %v2089 = vadd.f32 %v1944, %v2088
    %v2090 = vpop.f32.mrb[0].mxu0
    %2091 = vmatprep.mubr.f32.mxu0 %v1734
    %2092 = vmatmul.mubr.f32.gmra.mrb[0].mxu0 %v1718
    %v2093 = vpop.f32.mrb[0].mxu0
    %v2094 = vadd.f32 %v1949, %v2093
    %v2095 = vpop.f32.mrb[0].mxu0
    %2096 = vmatprep.mubr.f32.mxu0 %v1735
    %2097 = vmatmul.mubr.f32.gmra.mrb[0].mxu0 %v1719
    %v2098 = vpop.f32.mrb[0].mxu0
    %v2099 = vadd.f32 %v1954, %v2098
    %v2100 = vpop.f32.mrb[0].mxu0
    %2101 = vmatprep.mubr.f32.mxu0 %v1736
    %2102 = vmatmul.mubr.f32.gmra.mrb[0].mxu0 %v1720
    %v2103 = vpop.f32.mrb[0].mxu0
    %v2104 = vadd.f32 %v1959, %v2103
    %v2105 = vpop.f32.mrb[0].mxu0
    %2106 = vmatprep.mubr.f32.mxu0 %v1737
    %2107 = vmatmul.mubr.f32.gmra.mrb[0].mxu0 %v1721
    %v2108 = vpop.f32.mrb[0].mxu0
    %v2109 = vadd.f32 %v1964, %v2108
    %v2110 = vpop.f32.mrb[0].mxu0
    %2111 = vmatprep.mubr.f32.mxu0 %v1738
    %2112 = vmatmul.mubr.f32.gmra.mrb[0].mxu0 %v1722
    %v2113 = vpop.f32.mrb[0].mxu0
    %v2114 = vadd.f32 %v1969, %v2113
    %v2115 = vpop.f32.mrb[0].mxu0
    %2116 = vmatprep.mubr.f32.mxu0 %v1739
    %2117 = vmatmul.mubr.f32.gmra.mrb[0].mxu0 %v1723
    %v2118 = vpop.f32.mrb[0].mxu0
    %v2119 = vadd.f32 %v1974, %v2118
    %v2120 = vpop.f32.mrb[0].mxu0
    %2121 = vmatprep.mubr.f32.mxu0 %v1740
    %2122 = vmatmul.mubr.f32.gmra.mrb[0].mxu0 %v1724
    %v2123 = vpop.f32.mrb[0].mxu0
    %v2124 = vadd.f32 %v1979, %v2123
    %v2125 = vpop.f32.mrb[0].mxu0
    %2126 = vmatprep.mubr.f32.mxu0 %v1741
    %2127 = vmatmul.mubr.f32.gmra.mrb[0].mxu0 %v1725
    %v2128 = vpop.f32.mrb[0].mxu0
    %v2129 = vadd.f32 %v1984, %v2128
    %v2130 = vpop.f32.mrb[0].mxu0
    %2131 = vmatprep.mubr.f32.mxu0 %v1742
    %2132 = vmatmul.mubr.f32.gmra.mrb[0].mxu0 %v1726
    %v2133 = vpop.f32.mrb[0].mxu0
    %v2134 = vadd.f32 %v1989, %v2133
    %v2135 = vpop.f32.mrb[0].mxu0
    %2136 = vmatprep.mubr.f32.mxu0 %v1743
    %2137 = vmatmul.mubr.f32.gmra.mrb[0].mxu0 %v1727
    %v2138 = vpop.f32.mrb[0].mxu0
    %v2139 = vadd.f32 %v1994, %v2138
    %v2140 = vpop.f32.mrb[0].mxu0
    %2141 = vmatprep.mubr.f32.mxu0 %v1744
    %2142 = vmatmul.mubr.f32.gmra.mrb[0].mxu0 %v1728
    %v2143 = vpop.f32.mrb[0].mxu0
    %v2144 = vadd.f32 %v1999, %v2143
    %v2145 = vpop.f32.mrb[0].mxu0
    %2146 = vmatprep.mubr.f32.mxu0 %v1745
    %2147 = vmatmul.mubr.f32.gmra.mrb[0].mxu0 %v1729
    %v2148 = vpop.f32.mrb[0].mxu0
    %v2149 = vadd.f32 %v2004, %v2148
    %v2150 = vpop.f32.mrb[0].mxu0
    %2151 = vmatprep.mubr.f32.mxu0 %v1746
    %2152 = vmatmul.mubr.f32.gmra.mrb[0].mxu0 %v1730
    %v2153 = vpop.f32.mrb[0].mxu0
    %v2154 = vadd.f32 %v2009, %v2153
    %v2155 = vpop.f32.mrb[0].mxu0
    %2156 = vdwg.mxu0
    %2157 = vmatprep.subr.mxu0 0.0
    %2158 = vmatpush1.msra.mxu0 %v1811
    %2159 = vmatprep.subr.mxu0 0.0
    %2160 = vmatpush1.msra.mxu0 %v1812
    %2161 = vmatprep.subr.mxu0 0.0
    %2162 = vmatpush1.msra.mxu0 %v1813
    %2163 = vmatprep.subr.mxu0 0.0
    %2164 = vmatpush1.msra.mxu0 %v1814
    %2165 = vmatprep.subr.mxu0 0.0
    %2166 = vmatpush1.msra.mxu0 %v1815
    %2167 = vmatprep.subr.mxu0 0.0
    %2168 = vmatpush1.msra.mxu0 %v1816
    %2169 = vmatprep.subr.mxu0 0.0
    %2170 = vmatpush1.msra.mxu0 %v1817
    %2171 = vmatprep.subr.mxu0 0.0
    %2172 = vmatpush1.msra.mxu0 %v1818
    %2173 = vmatprep.subr.mxu0 0.0
    %2174 = vmatpush1.msra.mxu0 0.0
    %2175 = vmatprep.subr.mxu0 0.0
    %2176 = vmatpush1.msra.mxu0 0.0
    %2177 = vmatprep.subr.mxu0 0.0
    %2178 = vmatpush1.msra.mxu0 0.0
    %2179 = vmatprep.subr.mxu0 0.0
    %2180 = vmatpush1.msra.mxu0 0.0
    %2181 = vmatprep.subr.mxu0 0.0
    %2182 = vmatpush1.msra.mxu0 0.0
    %2183 = vmatprep.subr.mxu0 0.0
    %2184 = vmatpush1.msra.mxu0 0.0
    %2185 = vmatprep.subr.mxu0 0.0
    %2186 = vmatpush1.msra.mxu0 0.0
    %2187 = vmatprep.subr.mxu0 0.0
    %2188 = vmatpush1.msra.mxu0 0.0
    %2189 = vmatprep.subr.mxu0 0.0
    %2190 = vmatpush1.msra.mxu0 0.0
    %2191 = vmatprep.subr.mxu0 0.0
    %2192 = vmatpush1.msra.mxu0 0.0
    %2193 = vmatprep.subr.mxu0 0.0
    %2194 = vmatpush1.msra.mxu0 0.0
    %2195 = vmatprep.subr.mxu0 0.0
    %2196 = vmatpush1.msra.mxu0 0.0
    %2197 = vmatprep.subr.mxu0 0.0
    %2198 = vmatpush1.msra.mxu0 0.0
    %2199 = vmatprep.subr.mxu0 0.0
    %2200 = vmatpush1.msra.mxu0 0.0
    %2201 = vmatprep.subr.mxu0 0.0
    %2202 = vmatpush1.msra.mxu0 0.0
    %2203 = vmatprep.subr.mxu0 0.0
    %2204 = vmatpush1.msra.mxu0 0.0
    %2205 = vmatprep.subr.mxu0 0.0
    %2206 = vmatpush1.msra.mxu0 0.0
    %2207 = vmatprep.subr.mxu0 0.0
    %2208 = vmatpush1.msra.mxu0 0.0
    %2209 = vmatprep.subr.mxu0 0.0
    %2210 = vmatpush1.msra.mxu0 0.0
    %2211 = vmatprep.subr.mxu0 0.0
    %2212 = vmatpush1.msra.mxu0 0.0
    %2213 = vmatprep.subr.mxu0 0.0
    %2214 = vmatpush1.msra.mxu0 0.0
    %2215 = vmatprep.subr.mxu0 0.0
    %2216 = vmatpush1.msra.mxu0 0.0
    %2217 = vmatprep.subr.mxu0 0.0
    %2218 = vmatpush1.msra.mxu0 0.0
    %2219 = vmatprep.subr.mxu0 0.0
    %2220 = vmatpush1.msra.mxu0 0.0
    %2221 = vmatprep.mubr.f32.mxu0 0.0
    %2222 = vmatmul.mubr.f32.gmra.mrb[0].mxu0 %v1820
    %v2223 = vpop.f32.mrb[0].mxu0
    %v2224 = vadd.f32 %v2079, %v2223
    %v2225 = vpop.f32.mrb[0].mxu0
    %2226 = vmatprep.mubr.f32.mxu0 0.0
    %2227 = vmatmul.mubr.f32.gmra.mrb[0].mxu0 %v1823
    %v2228 = vpop.f32.mrb[0].mxu0
    %v2229 = vadd.f32 %v2084, %v2228
    %v2230 = vpop.f32.mrb[0].mxu0
    %2231 = vmatprep.mubr.f32.mxu0 0.0
    %2232 = vmatmul.mubr.f32.gmra.mrb[0].mxu0 %v1826
    %v2233 = vpop.f32.mrb[0].mxu0
    %v2234 = vadd.f32 %v2089, %v2233
    %v2235 = vpop.f32.mrb[0].mxu0
    %2236 = vmatprep.mubr.f32.mxu0 0.0
    %2237 = vmatmul.mubr.f32.gmra.mrb[0].mxu0 %v1829
    %v2238 = vpop.f32.mrb[0].mxu0
    %v2239 = vadd.f32 %v2094, %v2238
    %v2240 = vpop.f32.mrb[0].mxu0
    %2241 = vmatprep.mubr.f32.mxu0 0.0
    %2242 = vmatmul.mubr.f32.gmra.mrb[0].mxu0 %v1832
    %v2243 = vpop.f32.mrb[0].mxu0
    %v2244 = vadd.f32 %v2099, %v2243
    %v2245 = vpop.f32.mrb[0].mxu0
    %2246 = vmatprep.mubr.f32.mxu0 0.0
    %2247 = vmatmul.mubr.f32.gmra.mrb[0].mxu0 %v1835
    %v2248 = vpop.f32.mrb[0].mxu0
    %v2249 = vadd.f32 %v2104, %v2248
    %v2250 = vpop.f32.mrb[0].mxu0
    %2251 = vmatprep.mubr.f32.mxu0 0.0
    %2252 = vmatmul.mubr.f32.gmra.mrb[0].mxu0 %v1838
    %v2253 = vpop.f32.mrb[0].mxu0
    %v2254 = vadd.f32 %v2109, %v2253
    %v2255 = vpop.f32.mrb[0].mxu0
    %2256 = vmatprep.mubr.f32.mxu0 0.0
    %2257 = vmatmul.mubr.f32.gmra.mrb[0].mxu0 %v1841
    %v2258 = vpop.f32.mrb[0].mxu0
    %v2259 = vadd.f32 %v2114, %v2258
    %v2260 = vpop.f32.mrb[0].mxu0
    %2261 = vmatprep.mubr.f32.mxu0 0.0
    %2262 = vmatmul.mubr.f32.gmra.mrb[0].mxu0 %v1844
    %v2263 = vpop.f32.mrb[0].mxu0
    %v2264 = vadd.f32 %v2119, %v2263
    %v2265 = vpop.f32.mrb[0].mxu0
    %2266 = vmatprep.mubr.f32.mxu0 0.0
    %2267 = vmatmul.mubr.f32.gmra.mrb[0].mxu0 %v1847
    %v2268 = vpop.f32.mrb[0].mxu0
    %v2269 = vadd.f32 %v2124, %v2268
    %v2270 = vpop.f32.mrb[0].mxu0
    %2271 = vmatprep.mubr.f32.mxu0 0.0
    %2272 = vmatmul.mubr.f32.gmra.mrb[0].mxu0 %v1850
    %v2273 = vpop.f32.mrb[0].mxu0
    %v2274 = vadd.f32 %v2129, %v2273
    %v2275 = vpop.f32.mrb[0].mxu0
    %2276 = vmatprep.mubr.f32.mxu0 0.0
    %2277 = vmatmul.mubr.f32.gmra.mrb[0].mxu0 %v1853
    %v2278 = vpop.f32.mrb[0].mxu0
    %v2279 = vadd.f32 %v2134, %v2278
    %v2280 = vpop.f32.mrb[0].mxu0
    %2281 = vmatprep.mubr.f32.mxu0 0.0
    %2282 = vmatmul.mubr.f32.gmra.mrb[0].mxu0 %v1856
    %v2283 = vpop.f32.mrb[0].mxu0
    %v2284 = vadd.f32 %v2139, %v2283
    %v2285 = vpop.f32.mrb[0].mxu0
    %2286 = vmatprep.mubr.f32.mxu0 0.0
    %2287 = vmatmul.mubr.f32.gmra.mrb[0].mxu0 %v1859
    %v2288 = vpop.f32.mrb[0].mxu0
    %v2289 = vadd.f32 %v2144, %v2288
    %v2290 = vpop.f32.mrb[0].mxu0
    %2291 = vmatprep.mubr.f32.mxu0 0.0
    %2292 = vmatmul.mubr.f32.gmra.mrb[0].mxu0 %v1862
    %v2293 = vpop.f32.mrb[0].mxu0
    %v2294 = vadd.f32 %v2149, %v2293
    %v2295 = vpop.f32.mrb[0].mxu0
    %2296 = vmatprep.mubr.f32.mxu0 0.0
    %2297 = vmatmul.mubr.f32.gmra.mrb[0].mxu0 %v1865
    %v2298 = vpop.f32.mrb[0].mxu0
    %v2299 = vadd.f32 %v2154, %v2298
    %v2300 = vpop.f32.mrb[0].mxu0
    %2301 = vdwg.mxu0
    %vm2302 = vcmask 261120
    %2303 = vst.msk [vmem:[#allocation3] sm:$0xff] %vm2302, %v2224
    %2304 = vst.msk [vmem:[#allocation3 + $0x8] sm:$0xff] %vm2302, %v2229
    %2305 = vst.msk [vmem:[#allocation3 + $0x10] sm:$0xff] %vm2302, %v2234
    %2306 = vst.msk [vmem:[#allocation3 + $0x18] sm:$0xff] %vm2302, %v2239
    %2307 = vst.msk [vmem:[#allocation3 + $0x20] sm:$0xff] %vm2302, %v2244
    %2308 = vst.msk [vmem:[#allocation3 + $0x28] sm:$0xff] %vm2302, %v2249
    %2309 = vst.msk [vmem:[#allocation3 + $0x30] sm:$0xff] %vm2302, %v2254
    %2310 = vst.msk [vmem:[#allocation3 + $0x38] sm:$0xff] %vm2302, %v2259
    %2311 = vst.msk [vmem:[#allocation3 + $0x40] sm:$0xff] %vm2302, %v2264
    %2312 = vst.msk [vmem:[#allocation3 + $0x48] sm:$0xff] %vm2302, %v2269
    %2313 = vst.msk [vmem:[#allocation3 + $0x50] sm:$0xff] %vm2302, %v2274
    %2314 = vst.msk [vmem:[#allocation3 + $0x58] sm:$0xff] %vm2302, %v2279
    %2315 = vst.msk [vmem:[#allocation3 + $0x60] sm:$0xff] %vm2302, %v2284
    %2316 = vst.msk [vmem:[#allocation3 + $0x68] sm:$0xff] %vm2302, %v2289
    %2317 = vst.msk [vmem:[#allocation3 + $0x70] sm:$0xff] %vm2302, %v2294
    %2318 = vst.msk [vmem:[#allocation3 + $0x78] sm:$0xff] %vm2302, %v2299
    %v2319 = vsel %vm2302, %v2224, 0.0
    %v2320 = vsel %vm2302, %v2229, 0.0
    %v2321 = vadd.f32 %v2319, %v2320
    %v2322 = vsel %vm2302, %v2234, 0.0
    %v2323 = vadd.f32 %v2321, %v2322
    %v2324 = vsel %vm2302, %v2239, 0.0
    %v2325 = vadd.f32 %v2323, %v2324
    %v2326 = vsel %vm2302, %v2244, 0.0
    %v2327 = vadd.f32 %v2325, %v2326
    %v2328 = vsel %vm2302, %v2249, 0.0
    %v2329 = vadd.f32 %v2327, %v2328
    %v2330 = vsel %vm2302, %v2254, 0.0
    %v2331 = vadd.f32 %v2329, %v2330
    %v2332 = vsel %vm2302, %v2259, 0.0
    %v2333 = vadd.f32 %v2331, %v2332
    %v2334 = vsel %vm2302, %v2264, 0.0
    %v2335 = vadd.f32 %v2333, %v2334
    %v2336 = vsel %vm2302, %v2269, 0.0
    %v2337 = vadd.f32 %v2335, %v2336
    %v2338 = vsel %vm2302, %v2274, 0.0
    %v2339 = vadd.f32 %v2337, %v2338
    %v2340 = vsel %vm2302, %v2279, 0.0
    %v2341 = vadd.f32 %v2339, %v2340
    %v2342 = vsel %vm2302, %v2284, 0.0
    %v2343 = vadd.f32 %v2341, %v2342
    %v2344 = vsel %vm2302, %v2289, 0.0
    %v2345 = vadd.f32 %v2343, %v2344
    %v2346 = vsel %vm2302, %v2294, 0.0
    %v2347 = vadd.f32 %v2345, %v2346
    %v2348 = vsel %vm2302, %v2299, 0.0
    %v2349 = vadd.f32 %v2347, %v2348
    %v2350 = vrot.slane %v2349, 4
    %v2351 = vadd.f32 %v2349, %v2350
    %v2352 = vrot.slane %v2351, 2
    %v2353 = vadd.f32 %v2351, %v2352
    %v2354 = vrot.slane %v2353, 1
    %v2355 = vadd.f32 %v2353, %v2354
    %v2356 = vmul.f32 %v2355, 0.0078125
    %v2357 = vmul.f32 %v2224, %v2224
    %v2358 = vmul.f32 %v2229, %v2229
    %v2359 = vmul.f32 %v2234, %v2234
    %v2360 = vmul.f32 %v2239, %v2239
    %v2361 = vmul.f32 %v2244, %v2244
    %v2362 = vmul.f32 %v2249, %v2249
    %v2363 = vmul.f32 %v2254, %v2254
    %v2364 = vmul.f32 %v2259, %v2259
    %v2365 = vmul.f32 %v2264, %v2264
    %v2366 = vmul.f32 %v2269, %v2269
    %v2367 = vmul.f32 %v2274, %v2274
    %v2368 = vmul.f32 %v2279, %v2279
    %v2369 = vmul.f32 %v2284, %v2284
    %v2370 = vmul.f32 %v2289, %v2289
    %v2371 = vmul.f32 %v2294, %v2294
    %v2372 = vmul.f32 %v2299, %v2299
    %v2373 = vsel %vm2302, %v2357, 0.0
    %v2374 = vsel %vm2302, %v2358, 0.0
    %v2375 = vadd.f32 %v2373, %v2374
    %v2376 = vsel %vm2302, %v2359, 0.0
    %v2377 = vadd.f32 %v2375, %v2376
    %v2378 = vsel %vm2302, %v2360, 0.0
    %v2379 = vadd.f32 %v2377, %v2378
    %v2380 = vsel %vm2302, %v2361, 0.0
    %v2381 = vadd.f32 %v2379, %v2380
    %v2382 = vsel %vm2302, %v2362, 0.0
    %v2383 = vadd.f32 %v2381, %v2382
    %v2384 = vsel %vm2302, %v2363, 0.0
    %v2385 = vadd.f32 %v2383, %v2384
    %v2386 = vsel %vm2302, %v2364, 0.0
    %v2387 = vadd.f32 %v2385, %v2386
    %v2388 = vsel %vm2302, %v2365, 0.0
    %v2389 = vadd.f32 %v2387, %v2388
    %v2390 = vsel %vm2302, %v2366, 0.0
    %v2391 = vadd.f32 %v2389, %v2390
    %v2392 = vsel %vm2302, %v2367, 0.0
    %v2393 = vadd.f32 %v2391, %v2392
    %v2394 = vsel %vm2302, %v2368, 0.0
    %v2395 = vadd.f32 %v2393, %v2394
    %v2396 = vsel %vm2302, %v2369, 0.0
    %v2397 = vadd.f32 %v2395, %v2396
    %v2398 = vsel %vm2302, %v2370, 0.0
    %v2399 = vadd.f32 %v2397, %v2398
    %v2400 = vsel %vm2302, %v2371, 0.0
    %v2401 = vadd.f32 %v2399, %v2400
    %v2402 = vsel %vm2302, %v2372, 0.0
    %v2403 = vadd.f32 %v2401, %v2402
    %v2404 = vrot.slane %v2403, 4
    %v2405 = vadd.f32 %v2403, %v2404
    %v2406 = vrot.slane %v2405, 2
    %v2407 = vadd.f32 %v2405, %v2406
    %v2408 = vrot.slane %v2407, 1
    %v2409 = vadd.f32 %v2407, %v2408
    %v2410 = vmul.f32 %v2409, 0.0078125
    %v2411 = vmul.f32 %v2356, %v2356
    %v2412 = vsub.f32 %v2410, %v2411
    %v2413 = vmax.f32 %v2412, 0.0
    %v2414 = vsub.f32 %v2224, %v2356
    %v2415 = vsub.f32 %v2229, %v2356
    %v2416 = vsub.f32 %v2234, %v2356
    %v2417 = vsub.f32 %v2239, %v2356
    %v2418 = vsub.f32 %v2244, %v2356
    %v2419 = vsub.f32 %v2249, %v2356
    %v2420 = vsub.f32 %v2254, %v2356
    %v2421 = vsub.f32 %v2259, %v2356
    %v2422 = vsub.f32 %v2264, %v2356
    %v2423 = vsub.f32 %v2269, %v2356
    %v2424 = vsub.f32 %v2274, %v2356
    %v2425 = vsub.f32 %v2279, %v2356
    %v2426 = vsub.f32 %v2284, %v2356
    %v2427 = vsub.f32 %v2289, %v2356
    %v2428 = vsub.f32 %v2294, %v2356
    %v2429 = vsub.f32 %v2299, %v2356
    %v2430 = vadd.f32 %v2413, 1e-05
    %v2431 = vrsqrt.pop %v2430
    %v2432 = vmul.f32 %v2414, %v2431
    %v2433 = vmul.f32 %v2415, %v2431
    %v2434 = vmul.f32 %v2416, %v2431
    %v2435 = vmul.f32 %v2417, %v2431
    %v2436 = vmul.f32 %v2418, %v2431
    %v2437 = vmul.f32 %v2419, %v2431
    %v2438 = vmul.f32 %v2420, %v2431
    %v2439 = vmul.f32 %v2421, %v2431
    %v2440 = vmul.f32 %v2422, %v2431
    %v2441 = vmul.f32 %v2423, %v2431
    %v2442 = vmul.f32 %v2424, %v2431
    %v2443 = vmul.f32 %v2425, %v2431
    %v2444 = vmul.f32 %v2426, %v2431
    %v2445 = vmul.f32 %v2427, %v2431
    %v2446 = vmul.f32 %v2428, %v2431
    %v2447 = vmul.f32 %v2429, %v2431
    %v2448 = vmax.f32 %v2432, 0.0
    %v2449 = vmax.f32 %v2433, 0.0
    %v2450 = vmax.f32 %v2434, 0.0
    %v2451 = vmax.f32 %v2435, 0.0
    %v2452 = vmax.f32 %v2436, 0.0
    %v2453 = vmax.f32 %v2437, 0.0
    %v2454 = vmax.f32 %v2438, 0.0
    %v2455 = vmax.f32 %v2439, 0.0
    %v2456 = vmax.f32 %v2440, 0.0
    %v2457 = vmax.f32 %v2441, 0.0
    %v2458 = vmax.f32 %v2442, 0.0
    %v2459 = vmax.f32 %v2443, 0.0
    %v2460 = vmax.f32 %v2444, 0.0
    %v2461 = vmax.f32 %v2445, 0.0
    %v2462 = vmax.f32 %v2446, 0.0
    %v2463 = vmax.f32 %v2447, 0.0
    %2464 = vst.msk [vmem:[%s85 + $0x1] sm:$0xff] %vm2302, %v2448
    %2465 = vst.msk [vmem:[%s85 + $0x11] sm:$0xff] %vm2302, %v2449
    %2466 = vst.msk [vmem:[%s85 + $0x21] sm:$0xff] %vm2302, %v2450
    %2467 = vst.msk [vmem:[%s85 + $0x31] sm:$0xff] %vm2302, %v2451
    %2468 = vst.msk [vmem:[%s85 + $0x41] sm:$0xff] %vm2302, %v2452
    %2469 = vst.msk [vmem:[%s85 + $0x51] sm:$0xff] %vm2302, %v2453
    %2470 = vst.msk [vmem:[%s85 + $0x61] sm:$0xff] %vm2302, %v2454
    %2471 = vst.msk [vmem:[%s85 + $0x71] sm:$0xff] %vm2302, %v2455
    %2472 = vst.msk [vmem:[%s85 + $0xa1] sm:$0xff] %vm2302, %v2456
    %2473 = vst.msk [vmem:[%s85 + $0xb1] sm:$0xff] %vm2302, %v2457
    %2474 = vst.msk [vmem:[%s85 + $0xc1] sm:$0xff] %vm2302, %v2458
    %2475 = vst.msk [vmem:[%s85 + $0xd1] sm:$0xff] %vm2302, %v2459
    %2476 = vst.msk [vmem:[%s85 + $0xe1] sm:$0xff] %vm2302, %v2460
    %2477 = vst.msk [vmem:[%s85 + $0xf1] sm:$0xff] %vm2302, %v2461
    %2478 = vst.msk [vmem:[%s85 + $0x101] sm:$0xff] %vm2302, %v2462
    %2479 = vst.msk [vmem:[%s85 + $0x111] sm:$0xff] %vm2302, %v2463
    %v2480 = vld [vmem:[#allocation2] sm:$0xff]
    %v2481 = vld [vmem:[#allocation2 + $0x10] sm:$0xff]
    %v2482 = vld [vmem:[#allocation2 + $0x20] sm:$0xff]
    %v2483 = vld [vmem:[#allocation2 + $0x30] sm:$0xff]
    %v2484 = vld [vmem:[#allocation2 + $0x40] sm:$0xff]
    %v2485 = vld [vmem:[#allocation2 + $0x50] sm:$0xff]
    %v2486 = vld [vmem:[#allocation2 + $0x60] sm:$0xff]
    %v2487 = vld [vmem:[#allocation2 + $0x70] sm:$0xff]
    %v2488 = vld [vmem:[#allocation2 + $0xa0] sm:$0xff]
    %v2489 = vld [vmem:[#allocation2 + $0xb0] sm:$0xff]
    %v2490 = vld [vmem:[#allocation2 + $0xc0] sm:$0xff]
    %v2491 = vld [vmem:[#allocation2 + $0xd0] sm:$0xff]
    %v2492 = vld [vmem:[#allocation2 + $0xe0] sm:$0xff]
    %v2493 = vld [vmem:[#allocation2 + $0xf0] sm:$0xff]
    %v2494 = vld [vmem:[#allocation2 + $0x100] sm:$0xff]
    %v2495 = vld [vmem:[#allocation2 + $0x110] sm:$0xff]
    %v2496 = vld [vmem:[#allocation2 + $0x1] sm:$0xff]
    %v2497 = vld [vmem:[#allocation2 + $0x11] sm:$0xff]
    %v2498 = vld [vmem:[#allocation2 + $0x21] sm:$0xff]
    %v2499 = vld [vmem:[#allocation2 + $0x31] sm:$0xff]
    %v2500 = vld [vmem:[#allocation2 + $0x41] sm:$0xff]
    %v2501 = vld [vmem:[#allocation2 + $0x51] sm:$0xff]
    %v2502 = vld [vmem:[#allocation2 + $0x61] sm:$0xff]
    %v2503 = vld [vmem:[#allocation2 + $0x71] sm:$0xff]
    %v2504 = vld [vmem:[#allocation2 + $0xa1] sm:$0xff]
    %v2505 = vld [vmem:[#allocation2 + $0xb1] sm:$0xff]
    %v2506 = vld [vmem:[#allocation2 + $0xc1] sm:$0xff]
    %v2507 = vld [vmem:[#allocation2 + $0xd1] sm:$0xff]
    %v2508 = vld [vmem:[#allocation2 + $0xe1] sm:$0xff]
    %v2509 = vld [vmem:[#allocation2 + $0xf1] sm:$0xff]
    %v2510 = vld [vmem:[#allocation2 + $0x101] sm:$0xff]
    %v2511 = vld [vmem:[#allocation2 + $0x111] sm:$0xff]
    %v2512 = vld [vmem:[#allocation2 + $0x2] sm:$0xff]
    %v2513 = vld [vmem:[#allocation2 + $0x12] sm:$0xff]
    %v2514 = vld [vmem:[#allocation2 + $0x22] sm:$0xff]
    %v2515 = vld [vmem:[#allocation2 + $0x32] sm:$0xff]
    %v2516 = vld [vmem:[#allocation2 + $0x42] sm:$0xff]
    %v2517 = vld [vmem:[#allocation2 + $0x52] sm:$0xff]
    %v2518 = vld [vmem:[#allocation2 + $0x62] sm:$0xff]
    %v2519 = vld [vmem:[#allocation2 + $0x72] sm:$0xff]
    %v2520 = vld [vmem:[#allocation2 + $0xa2] sm:$0xff]
    %v2521 = vld [vmem:[#allocation2 + $0xb2] sm:$0xff]
    %v2522 = vld [vmem:[#allocation2 + $0xc2] sm:$0xff]
    %v2523 = vld [vmem:[#allocation2 + $0xd2] sm:$0xff]
    %v2524 = vld [vmem:[#allocation2 + $0xe2] sm:$0xff]
    %v2525 = vld [vmem:[#allocation2 + $0xf2] sm:$0xff]
    %v2526 = vld [vmem:[#allocation2 + $0x102] sm:$0xff]
    %v2527 = vld [vmem:[#allocation2 + $0x112] sm:$0xff]
    %v2528 = vld [vmem:[%s85] sm:$0xff]
    %v2529 = vld [vmem:[%s85 + $0x10] sm:$0xff]
    %v2530 = vld [vmem:[%s85 + $0x20] sm:$0xff]
    %v2531 = vld [vmem:[%s85 + $0x30] sm:$0xff]
    %v2532 = vld [vmem:[%s85 + $0x40] sm:$0xff]
    %v2533 = vld [vmem:[%s85 + $0x50] sm:$0xff]
    %v2534 = vld [vmem:[%s85 + $0x60] sm:$0xff]
    %v2535 = vld [vmem:[%s85 + $0x70] sm:$0xff]
    %v2536 = vld [vmem:[%s85 + $0xa0] sm:$0xff]
    %v2537 = vld [vmem:[%s85 + $0xb0] sm:$0xff]
    %v2538 = vld [vmem:[%s85 + $0xc0] sm:$0xff]
    %v2539 = vld [vmem:[%s85 + $0xd0] sm:$0xff]
    %v2540 = vld [vmem:[%s85 + $0xe0] sm:$0xff]
    %v2541 = vld [vmem:[%s85 + $0xf0] sm:$0xff]
    %v2542 = vld [vmem:[%s85 + $0x100] sm:$0xff]
    %v2543 = vld [vmem:[%s85 + $0x110] sm:$0xff]
    %v2544 = vld [vmem:[%s85 + $0x1] sm:$0xff]
    %v2545 = vld [vmem:[%s85 + $0x11] sm:$0xff]
    %v2546 = vld [vmem:[%s85 + $0x21] sm:$0xff]
    %v2547 = vld [vmem:[%s85 + $0x31] sm:$0xff]
    %v2548 = vld [vmem:[%s85 + $0x41] sm:$0xff]
    %v2549 = vld [vmem:[%s85 + $0x51] sm:$0xff]
    %v2550 = vld [vmem:[%s85 + $0x61] sm:$0xff]
    %v2551 = vld [vmem:[%s85 + $0x71] sm:$0xff]
    %v2552 = vld [vmem:[%s85 + $0xa1] sm:$0xff]
    %v2553 = vld [vmem:[%s85 + $0xb1] sm:$0xff]
    %v2554 = vld [vmem:[%s85 + $0xc1] sm:$0xff]
    %v2555 = vld [vmem:[%s85 + $0xd1] sm:$0xff]
    %v2556 = vld [vmem:[%s85 + $0xe1] sm:$0xff]
    %v2557 = vld [vmem:[%s85 + $0xf1] sm:$0xff]
    %v2558 = vld [vmem:[%s85 + $0x101] sm:$0xff]
    %v2559 = vld [vmem:[%s85 + $0x111] sm:$0xff]
    %v2560 = vld [vmem:[%s85 + $0x2] sm:$0xff]
    %v2561 = vld [vmem:[%s85 + $0x12] sm:$0xff]
    %v2562 = vld [vmem:[%s85 + $0x22] sm:$0xff]
    %v2563 = vld [vmem:[%s85 + $0x32] sm:$0xff]
    %v2564 = vld [vmem:[%s85 + $0x42] sm:$0xff]
    %v2565 = vld [vmem:[%s85 + $0x52] sm:$0xff]
    %v2566 = vld [vmem:[%s85 + $0x62] sm:$0xff]
    %v2567 = vld [vmem:[%s85 + $0x72] sm:$0xff]
    %v2568 = vld [vmem:[%s85 + $0xa2] sm:$0xff]
    %v2569 = vld [vmem:[%s85 + $0xb2] sm:$0xff]
    %v2570 = vld [vmem:[%s85 + $0xc2] sm:$0xff]
    %v2571 = vld [vmem:[%s85 + $0xd2] sm:$0xff]
    %v2572 = vld [vmem:[%s85 + $0xe2] sm:$0xff]
    %v2573 = vld [vmem:[%s85 + $0xf2] sm:$0xff]
    %v2574 = vld [vmem:[%s85 + $0x102] sm:$0xff]
    %v2575 = vld [vmem:[%s85 + $0x112] sm:$0xff]
    %v2576 = vld [vmem:[%s198] sm:$0xff]
    %v2577 = vld [vmem:[%s198 + $0x10] sm:$0xff]
    %v2578 = vld [vmem:[%s198 + $0x20] sm:$0xff]
    %v2579 = vld [vmem:[%s198 + $0x30] sm:$0xff]
    %v2580 = vld [vmem:[%s198 + $0x40] sm:$0xff]
    %v2581 = vld [vmem:[%s198 + $0x50] sm:$0xff]
    %v2582 = vld [vmem:[%s198 + $0x60] sm:$0xff]
    %v2583 = vld [vmem:[%s198 + $0x70] sm:$0xff]
    %v2584 = vld [vmem:[%s198 + $0xa0] sm:$0xff]
    %v2585 = vld [vmem:[%s198 + $0xb0] sm:$0xff]
    %v2586 = vld [vmem:[%s198 + $0xc0] sm:$0xff]
    %v2587 = vld [vmem:[%s198 + $0xd0] sm:$0xff]
    %v2588 = vld [vmem:[%s198 + $0xe0] sm:$0xff]
    %v2589 = vld [vmem:[%s198 + $0xf0] sm:$0xff]
    %v2590 = vld [vmem:[%s198 + $0x100] sm:$0xff]
    %v2591 = vld [vmem:[%s198 + $0x110] sm:$0xff]
    %v2592 = vld [vmem:[%s198 + $0x1] sm:$0xff]
    %v2593 = vld [vmem:[%s198 + $0x11] sm:$0xff]
    %v2594 = vld [vmem:[%s198 + $0x21] sm:$0xff]
    %v2595 = vld [vmem:[%s198 + $0x31] sm:$0xff]
    %v2596 = vld [vmem:[%s198 + $0x41] sm:$0xff]
    %v2597 = vld [vmem:[%s198 + $0x51] sm:$0xff]
    %v2598 = vld [vmem:[%s198 + $0x61] sm:$0xff]
    %v2599 = vld [vmem:[%s198 + $0x71] sm:$0xff]
    %v2600 = vld [vmem:[%s198 + $0xa1] sm:$0xff]
    %v2601 = vld [vmem:[%s198 + $0xb1] sm:$0xff]
    %v2602 = vld [vmem:[%s198 + $0xc1] sm:$0xff]
    %v2603 = vld [vmem:[%s198 + $0xd1] sm:$0xff]
    %v2604 = vld [vmem:[%s198 + $0xe1] sm:$0xff]
    %v2605 = vld [vmem:[%s198 + $0xf1] sm:$0xff]
    %v2606 = vld [vmem:[%s198 + $0x101] sm:$0xff]
    %v2607 = vld [vmem:[%s198 + $0x111] sm:$0xff]
    %v2608 = vld [vmem:[%s198 + $0x2] sm:$0xff]
    %v2609 = vld [vmem:[%s198 + $0x12] sm:$0xff]
    %v2610 = vld [vmem:[%s198 + $0x22] sm:$0xff]
    %v2611 = vld [vmem:[%s198 + $0x32] sm:$0xff]
    %v2612 = vld [vmem:[%s198 + $0x42] sm:$0xff]
    %v2613 = vld [vmem:[%s198 + $0x52] sm:$0xff]
    %v2614 = vld [vmem:[%s198 + $0x62] sm:$0xff]
    %v2615 = vld [vmem:[%s198 + $0x72] sm:$0xff]
    %v2616 = vld [vmem:[%s198 + $0xa2] sm:$0xff]
    %v2617 = vld [vmem:[%s198 + $0xb2] sm:$0xff]
    %v2618 = vld [vmem:[%s198 + $0xc2] sm:$0xff]
    %v2619 = vld [vmem:[%s198 + $0xd2] sm:$0xff]
    %v2620 = vld [vmem:[%s198 + $0xe2] sm:$0xff]
    %v2621 = vld [vmem:[%s198 + $0xf2] sm:$0xff]
    %v2622 = vld [vmem:[%s198 + $0x102] sm:$0xff]
    %v2623 = vld [vmem:[%s198 + $0x112] sm:$0xff]
    %2640 = vrot.lane.b32.xlu0 %v2496, 32
    %v2641 = vpop.permute.xlu0 %2640
    %2642 = vrot.lane.b32.xlu0 %v2497, 32
    %v2643 = vpop.permute.xlu0 %2642
    %2644 = vrot.lane.b32.xlu0 %v2498, 32
    %v2645 = vpop.permute.xlu0 %2644
    %2646 = vrot.lane.b32.xlu0 %v2499, 32
    %v2647 = vpop.permute.xlu0 %2646
    %2648 = vrot.lane.b32.xlu0 %v2500, 32
    %v2649 = vpop.permute.xlu0 %2648
    %2650 = vrot.lane.b32.xlu0 %v2501, 32
    %v2651 = vpop.permute.xlu0 %2650
    %2652 = vrot.lane.b32.xlu0 %v2502, 32
    %v2653 = vpop.permute.xlu0 %2652
    %2654 = vrot.lane.b32.xlu0 %v2503, 32
    %v2655 = vpop.permute.xlu0 %2654
    %2656 = vrot.lane.b32.xlu0 %v2504, 32
    %v2657 = vpop.permute.xlu0 %2656
    %2658 = vrot.lane.b32.xlu0 %v2505, 32
    %v2659 = vpop.permute.xlu0 %2658
    %2660 = vrot.lane.b32.xlu0 %v2506, 32
    %v2661 = vpop.permute.xlu0 %2660
    %2662 = vrot.lane.b32.xlu0 %v2507, 32
    %v2663 = vpop.permute.xlu0 %2662
    %2664 = vrot.lane.b32.xlu0 %v2508, 32
    %v2665 = vpop.permute.xlu0 %2664
    %2666 = vrot.lane.b32.xlu0 %v2509, 32
    %v2667 = vpop.permute.xlu0 %2666
    %2668 = vrot.lane.b32.xlu0 %v2510, 32
    %v2669 = vpop.permute.xlu0 %2668
    %2670 = vrot.lane.b32.xlu0 %v2511, 32
    %v2671 = vpop.permute.xlu0 %2670
    %2704 = vrot.lane.b32.xlu0 %v2512, 64
    %v2705 = vpop.permute.xlu0 %2704
    %2706 = vrot.lane.b32.xlu0 %v2513, 64
    %v2707 = vpop.permute.xlu0 %2706
    %2708 = vrot.lane.b32.xlu0 %v2514, 64
    %v2709 = vpop.permute.xlu0 %2708
    %2710 = vrot.lane.b32.xlu0 %v2515, 64
    %v2711 = vpop.permute.xlu0 %2710
    %2712 = vrot.lane.b32.xlu0 %v2516, 64
    %v2713 = vpop.permute.xlu0 %2712
    %2714 = vrot.lane.b32.xlu0 %v2517, 64
    %v2715 = vpop.permute.xlu0 %2714
    %2716 = vrot.lane.b32.xlu0 %v2518, 64
    %v2717 = vpop.permute.xlu0 %2716
    %2718 = vrot.lane.b32.xlu0 %v2519, 64
    %v2719 = vpop.permute.xlu0 %2718
    %2720 = vrot.lane.b32.xlu0 %v2520, 64
    %v2721 = vpop.permute.xlu0 %2720
    %2722 = vrot.lane.b32.xlu0 %v2521, 64
    %v2723 = vpop.permute.xlu0 %2722
    %2724 = vrot.lane.b32.xlu0 %v2522, 64
    %v2725 = vpop.permute.xlu0 %2724
    %2726 = vrot.lane.b32.xlu0 %v2523, 64
    %v2727 = vpop.permute.xlu0 %2726
    %2728 = vrot.lane.b32.xlu0 %v2524, 64
    %v2729 = vpop.permute.xlu0 %2728
    %2730 = vrot.lane.b32.xlu0 %v2525, 64
    %v2731 = vpop.permute.xlu0 %2730
    %2732 = vrot.lane.b32.xlu0 %v2526, 64
    %v2733 = vpop.permute.xlu0 %2732
    %2734 = vrot.lane.b32.xlu0 %v2527, 64
    %v2735 = vpop.permute.xlu0 %2734
    %2768 = vrot.lane.b32.xlu0 %v2528, 96
    %v2769 = vpop.permute.xlu0 %2768
    %2770 = vrot.lane.b32.xlu0 %v2529, 96
    %v2771 = vpop.permute.xlu0 %2770
    %2772 = vrot.lane.b32.xlu0 %v2530, 96
    %v2773 = vpop.permute.xlu0 %2772
    %2774 = vrot.lane.b32.xlu0 %v2531, 96
    %v2775 = vpop.permute.xlu0 %2774
    %2776 = vrot.lane.b32.xlu0 %v2532, 96
    %v2777 = vpop.permute.xlu0 %2776
    %2778 = vrot.lane.b32.xlu0 %v2533, 96
    %v2779 = vpop.permute.xlu0 %2778
    %2780 = vrot.lane.b32.xlu0 %v2534, 96
    %v2781 = vpop.permute.xlu0 %2780
    %2782 = vrot.lane.b32.xlu0 %v2535, 96
    %v2783 = vpop.permute.xlu0 %2782
    %2784 = vrot.lane.b32.xlu0 %v2536, 96
    %v2785 = vpop.permute.xlu0 %2784
    %2786 = vrot.lane.b32.xlu0 %v2537, 96
    %v2787 = vpop.permute.xlu0 %2786
    %2788 = vrot.lane.b32.xlu0 %v2538, 96
    %v2789 = vpop.permute.xlu0 %2788
    %2790 = vrot.lane.b32.xlu0 %v2539, 96
    %v2791 = vpop.permute.xlu0 %2790
    %2792 = vrot.lane.b32.xlu0 %v2540, 96
    %v2793 = vpop.permute.xlu0 %2792
    %2794 = vrot.lane.b32.xlu0 %v2541, 96
    %v2795 = vpop.permute.xlu0 %2794
    %2796 = vrot.lane.b32.xlu0 %v2542, 96
    %v2797 = vpop.permute.xlu0 %2796
    %2798 = vrot.lane.b32.xlu0 %v2543, 96
    %v2799 = vpop.permute.xlu0 %2798
    %2832 = vrot.lane.b32.xlu0 %v2560, 32
    %v2833 = vpop.permute.xlu0 %2832
    %2834 = vrot.lane.b32.xlu0 %v2561, 32
    %v2835 = vpop.permute.xlu0 %2834
    %2836 = vrot.lane.b32.xlu0 %v2562, 32
    %v2837 = vpop.permute.xlu0 %2836
    %2838 = vrot.lane.b32.xlu0 %v2563, 32
    %v2839 = vpop.permute.xlu0 %2838
    %2840 = vrot.lane.b32.xlu0 %v2564, 32
    %v2841 = vpop.permute.xlu0 %2840
    %2842 = vrot.lane.b32.xlu0 %v2565, 32
    %v2843 = vpop.permute.xlu0 %2842
    %2844 = vrot.lane.b32.xlu0 %v2566, 32
    %v2845 = vpop.permute.xlu0 %2844
    %2846 = vrot.lane.b32.xlu0 %v2567, 32
    %v2847 = vpop.permute.xlu0 %2846
    %2848 = vrot.lane.b32.xlu0 %v2568, 32
    %v2849 = vpop.permute.xlu0 %2848
    %2850 = vrot.lane.b32.xlu0 %v2569, 32
    %v2851 = vpop.permute.xlu0 %2850
    %2852 = vrot.lane.b32.xlu0 %v2570, 32
    %v2853 = vpop.permute.xlu0 %2852
    %2854 = vrot.lane.b32.xlu0 %v2571, 32
    %v2855 = vpop.permute.xlu0 %2854
    %2856 = vrot.lane.b32.xlu0 %v2572, 32
    %v2857 = vpop.permute.xlu0 %2856
    %2858 = vrot.lane.b32.xlu0 %v2573, 32
    %v2859 = vpop.permute.xlu0 %2858
    %2860 = vrot.lane.b32.xlu0 %v2574, 32
    %v2861 = vpop.permute.xlu0 %2860
    %2862 = vrot.lane.b32.xlu0 %v2575, 32
    %v2863 = vpop.permute.xlu0 %2862
    %2896 = vrot.lane.b32.xlu0 %v2576, 64
    %v2897 = vpop.permute.xlu0 %2896
    %2898 = vrot.lane.b32.xlu0 %v2577, 64
    %v2899 = vpop.permute.xlu0 %2898
    %2900 = vrot.lane.b32.xlu0 %v2578, 64
    %v2901 = vpop.permute.xlu0 %2900
    %2902 = vrot.lane.b32.xlu0 %v2579, 64
    %v2903 = vpop.permute.xlu0 %2902
    %2904 = vrot.lane.b32.xlu0 %v2580, 64
    %v2905 = vpop.permute.xlu0 %2904
    %2906 = vrot.lane.b32.xlu0 %v2581, 64
    %v2907 = vpop.permute.xlu0 %2906
    %2908 = vrot.lane.b32.xlu0 %v2582, 64
    %v2909 = vpop.permute.xlu0 %2908
    %2910 = vrot.lane.b32.xlu0 %v2583, 64
    %v2911 = vpop.permute.xlu0 %2910
    %2912 = vrot.lane.b32.xlu0 %v2584, 64
    %v2913 = vpop.permute.xlu0 %2912
    %2914 = vrot.lane.b32.xlu0 %v2585, 64
    %v2915 = vpop.permute.xlu0 %2914
    %2916 = vrot.lane.b32.xlu0 %v2586, 64
    %v2917 = vpop.permute.xlu0 %2916
    %2918 = vrot.lane.b32.xlu0 %v2587, 64
    %v2919 = vpop.permute.xlu0 %2918
    %2920 = vrot.lane.b32.xlu0 %v2588, 64
    %v2921 = vpop.permute.xlu0 %2920
    %2922 = vrot.lane.b32.xlu0 %v2589, 64
    %v2923 = vpop.permute.xlu0 %2922
    %2924 = vrot.lane.b32.xlu0 %v2590, 64
    %v2925 = vpop.permute.xlu0 %2924
    %2926 = vrot.lane.b32.xlu0 %v2591, 64
    %v2927 = vpop.permute.xlu0 %2926
    %2960 = vrot.lane.b32.xlu0 %v2592, 96
    %v2961 = vpop.permute.xlu0 %2960
    %2962 = vrot.lane.b32.xlu0 %v2593, 96
    %v2963 = vpop.permute.xlu0 %2962
    %2964 = vrot.lane.b32.xlu0 %v2594, 96
    %v2965 = vpop.permute.xlu0 %2964
    %2966 = vrot.lane.b32.xlu0 %v2595, 96
    %v2967 = vpop.permute.xlu0 %2966
    %2968 = vrot.lane.b32.xlu0 %v2596, 96
    %v2969 = vpop.permute.xlu0 %2968
    %2970 = vrot.lane.b32.xlu0 %v2597, 96
    %v2971 = vpop.permute.xlu0 %2970
    %2972 = vrot.lane.b32.xlu0 %v2598, 96
    %v2973 = vpop.permute.xlu0 %2972
    %2974 = vrot.lane.b32.xlu0 %v2599, 96
    %v2975 = vpop.permute.xlu0 %2974
    %2976 = vrot.lane.b32.xlu0 %v2600, 96
    %v2977 = vpop.permute.xlu0 %2976
    %2978 = vrot.lane.b32.xlu0 %v2601, 96
    %v2979 = vpop.permute.xlu0 %2978
    %2980 = vrot.lane.b32.xlu0 %v2602, 96
    %v2981 = vpop.permute.xlu0 %2980
    %2982 = vrot.lane.b32.xlu0 %v2603, 96
    %v2983 = vpop.permute.xlu0 %2982
    %2984 = vrot.lane.b32.xlu0 %v2604, 96
    %v2985 = vpop.permute.xlu0 %2984
    %2986 = vrot.lane.b32.xlu0 %v2605, 96
    %v2987 = vpop.permute.xlu0 %2986
    %2988 = vrot.lane.b32.xlu0 %v2606, 96
    %v2989 = vpop.permute.xlu0 %2988
    %2990 = vrot.lane.b32.xlu0 %v2607, 96
    %v2991 = vpop.permute.xlu0 %2990
    %v3008 = vsel %vm2302, %v2480, %v2641
    %v3009 = vsel %vm2302, %v2481, %v2643
    %v3010 = vsel %vm2302, %v2482, %v2645
    %v3011 = vsel %vm2302, %v2483, %v2647
    %v3012 = vsel %vm2302, %v2484, %v2649
    %v3013 = vsel %vm2302, %v2485, %v2651
    %v3014 = vsel %vm2302, %v2486, %v2653
    %v3015 = vsel %vm2302, %v2487, %v2655
    %v3016 = vsel %vm2302, %v2488, %v2657
    %v3017 = vsel %vm2302, %v2489, %v2659
    %v3018 = vsel %vm2302, %v2490, %v2661
    %v3019 = vsel %vm2302, %v2491, %v2663
    %v3020 = vsel %vm2302, %v2492, %v2665
    %v3021 = vsel %vm2302, %v2493, %v2667
    %v3022 = vsel %vm2302, %v2494, %v2669
    %v3023 = vsel %vm2302, %v2495, %v2671
    %v3024 = vsel %vm27, %v3008, %v2705
    %v3025 = vsel %vm27, %v3009, %v2707
    %v3026 = vsel %vm27, %v3010, %v2709
    %v3027 = vsel %vm27, %v3011, %v2711
    %v3028 = vsel %vm27, %v3012, %v2713
    %v3029 = vsel %vm27, %v3013, %v2715
    %v3030 = vsel %vm27, %v3014, %v2717
    %v3031 = vsel %vm27, %v3015, %v2719
    %v3032 = vsel %vm27, %v3016, %v2721
    %v3033 = vsel %vm27, %v3017, %v2723
    %v3034 = vsel %vm27, %v3018, %v2725
    %v3035 = vsel %vm27, %v3019, %v2727
    %v3036 = vsel %vm27, %v3020, %v2729
    %v3037 = vsel %vm27, %v3021, %v2731
    %v3038 = vsel %vm27, %v3022, %v2733
    %v3039 = vsel %vm27, %v3023, %v2735
    %vm3040 = vcmask 785408
    %v3041 = vsel %vm3040, %v3024, %v2769
    %v3042 = vsel %vm3040, %v3025, %v2771
    %v3043 = vsel %vm3040, %v3026, %v2773
    %v3044 = vsel %vm3040, %v3027, %v2775
    %v3045 = vsel %vm3040, %v3028, %v2777
    %v3046 = vsel %vm3040, %v3029, %v2779
    %v3047 = vsel %vm3040, %v3030, %v2781
    %v3048 = vsel %vm3040, %v3031, %v2783
    %v3049 = vsel %vm3040, %v3032, %v2785
    %v3050 = vsel %vm3040, %v3033, %v2787
    %v3051 = vsel %vm3040, %v3034, %v2789
    %v3052 = vsel %vm3040, %v3035, %v2791
    %v3053 = vsel %vm3040, %v3036, %v2793
    %v3054 = vsel %vm3040, %v3037, %v2795
    %v3055 = vsel %vm3040, %v3038, %v2797
    %v3056 = vsel %vm3040, %v3039, %v2799
    %v3057 = vsel %vm2302, %v2544, %v2833
    %v3058 = vsel %vm2302, %v2545, %v2835
    %v3059 = vsel %vm2302, %v2546, %v2837
    %v3060 = vsel %vm2302, %v2547, %v2839
    %v3061 = vsel %vm2302, %v2548, %v2841
    %v3062 = vsel %vm2302, %v2549, %v2843
    %v3063 = vsel %vm2302, %v2550, %v2845
    %v3064 = vsel %vm2302, %v2551, %v2847
    %v3065 = vsel %vm2302, %v2552, %v2849
    %v3066 = vsel %vm2302, %v2553, %v2851
    %v3067 = vsel %vm2302, %v2554, %v2853
    %v3068 = vsel %vm2302, %v2555, %v2855
    %v3069 = vsel %vm2302, %v2556, %v2857
    %v3070 = vsel %vm2302, %v2557, %v2859
    %v3071 = vsel %vm2302, %v2558, %v2861
    %v3072 = vsel %vm2302, %v2559, %v2863
    %v3073 = vsel %vm27, %v3057, %v2897
    %v3074 = vsel %vm27, %v3058, %v2899
    %v3075 = vsel %vm27, %v3059, %v2901
    %v3076 = vsel %vm27, %v3060, %v2903
    %v3077 = vsel %vm27, %v3061, %v2905
    %v3078 = vsel %vm27, %v3062, %v2907
    %v3079 = vsel %vm27, %v3063, %v2909
    %v3080 = vsel %vm27, %v3064, %v2911
    %v3081 = vsel %vm27, %v3065, %v2913
    %v3082 = vsel %vm27, %v3066, %v2915
    %v3083 = vsel %vm27, %v3067, %v2917
    %v3084 = vsel %vm27, %v3068, %v2919
    %v3085 = vsel %vm27, %v3069, %v2921
    %v3086 = vsel %vm27, %v3070, %v2923
    %v3087 = vsel %vm27, %v3071, %v2925
    %v3088 = vsel %vm27, %v3072, %v2927
    %v3089 = vsel %vm3040, %v3073, %v2961
    %v3090 = vsel %vm3040, %v3074, %v2963
    %v3091 = vsel %vm3040, %v3075, %v2965
    %v3092 = vsel %vm3040, %v3076, %v2967
    %v3093 = vsel %vm3040, %v3077, %v2969
    %v3094 = vsel %vm3040, %v3078, %v2971
    %v3095 = vsel %vm3040, %v3079, %v2973
    %v3096 = vsel %vm3040, %v3080, %v2975
    %v3097 = vsel %vm3040, %v3081, %v2977
    %v3098 = vsel %vm3040, %v3082, %v2979
    %v3099 = vsel %vm3040, %v3083, %v2981
    %v3100 = vsel %vm3040, %v3084, %v2983
    %v3101 = vsel %vm3040, %v3085, %v2985
    %v3102 = vsel %vm3040, %v3086, %v2987
    %v3103 = vsel %vm3040, %v3087, %v2989
    %v3104 = vsel %vm3040, %v3088, %v2991
    %v3105 = vld [vmem:[%s3] sm:$0xff]
    %v3106 = vld [vmem:[%s3 + $0x8] sm:$0xff]
    %v3107 = vld [vmem:[%s3 + $0x10] sm:$0xff]
    %v3108 = vld [vmem:[%s3 + $0x18] sm:$0xff]
    %v3109 = vld [vmem:[%s3 + $0x20] sm:$0xff]
    %v3110 = vld [vmem:[%s3 + $0x28] sm:$0xff]
    %v3111 = vld [vmem:[%s3 + $0x30] sm:$0xff]
    %v3112 = vld [vmem:[%s3 + $0x38] sm:$0xff]
    %v3113 = vld [vmem:[%s3 + $0x40] sm:$0xff]
    %v3114 = vld [vmem:[%s3 + $0x48] sm:$0xff]
    %v3115 = vld [vmem:[%s3 + $0x50] sm:$0xff]
    %v3116 = vld [vmem:[%s3 + $0x58] sm:$0xff]
    %v3117 = vld [vmem:[%s3 + $0x60] sm:$0xff]
    %v3118 = vld [vmem:[%s3 + $0x68] sm:$0xff]
    %v3119 = vld [vmem:[%s3 + $0x70] sm:$0xff]
    %v3120 = vld [vmem:[%s3 + $0x78] sm:$0xff]
    %v3121 = vld [vmem:[%s3 + $0x80] sm:$0xff]
    %v3122 = vld [vmem:[%s3 + $0x88] sm:$0xff]
    %v3123 = vld [vmem:[%s3 + $0x90] sm:$0xff]
    %v3124 = vld [vmem:[%s3 + $0x98] sm:$0xff]
    %v3125 = vld [vmem:[%s3 + $0xa0] sm:$0xff]
    %v3126 = vld [vmem:[%s3 + $0xa8] sm:$0xff]
    %v3127 = vld [vmem:[%s3 + $0xb0] sm:$0xff]
    %v3128 = vld [vmem:[%s3 + $0xb8] sm:$0xff]
    %v3129 = vld [vmem:[%s3 + $0xc0] sm:$0xff]
    %v3130 = vld [vmem:[%s3 + $0xc8] sm:$0xff]
    %v3131 = vld [vmem:[%s3 + $0xd0] sm:$0xff]
    %v3132 = vld [vmem:[%s3 + $0xd8] sm:$0xff]
    %v3133 = vld [vmem:[%s3 + $0xe0] sm:$0xff]
    %v3134 = vld [vmem:[%s3 + $0xe8] sm:$0xff]
    %v3135 = vld [vmem:[%s3 + $0xf0] sm:$0xff]
    %v3136 = vld [vmem:[%s3 + $0xf8] sm:$0xff]
    %v3137 = vld [vmem:[%s3 + $0x100] sm:$0xff]
    %v3138 = vld [vmem:[%s3 + $0x108] sm:$0xff]
    %v3139 = vld [vmem:[%s3 + $0x110] sm:$0xff]
    %v3140 = vld [vmem:[%s3 + $0x118] sm:$0xff]
    %v3142 = vsel %vm2302, %v2608, 0
    %v3145 = vsel %vm2302, %v2609, 0
    %v3148 = vsel %vm2302, %v2610, 0
    %v3151 = vsel %vm2302, %v2611, 0
    %v3154 = vsel %vm2302, %v2612, 0
    %v3157 = vsel %vm2302, %v2613, 0
    %v3160 = vsel %vm2302, %v2614, 0
    %v3163 = vsel %vm2302, %v2615, 0
    %v3166 = vsel %vm2302, %v2616, 0
    %v3169 = vsel %vm2302, %v2617, 0
    %v3172 = vsel %vm2302, %v2618, 0
    %v3175 = vsel %vm2302, %v2619, 0
    %v3178 = vsel %vm2302, %v2620, 0
    %v3181 = vsel %vm2302, %v2621, 0
    %v3184 = vsel %vm2302, %v2622, 0
    %v3187 = vsel %vm2302, %v2623, 0
    %3189 = vmatprep.subr.mxu0 0.0
    %3190 = vmatpush1.msra.mxu0 %v3105
    %3191 = vmatprep.subr.mxu0 0.0
    %3192 = vmatpush1.msra.mxu0 %v3106
    %3193 = vmatprep.subr.mxu0 0.0
    %3194 = vmatpush1.msra.mxu0 %v3107
    %3195 = vmatprep.subr.mxu0 0.0
    %3196 = vmatpush1.msra.mxu0 %v3108
    %3197 = vmatprep.subr.mxu0 0.0
    %3198 = vmatpush1.msra.mxu0 %v3109
    %3199 = vmatprep.subr.mxu0 0.0
    %3200 = vmatpush1.msra.mxu0 %v3110
    %3201 = vmatprep.subr.mxu0 0.0
    %3202 = vmatpush1.msra.mxu0 %v3111
    %3203 = vmatprep.subr.mxu0 0.0
    %3204 = vmatpush1.msra.mxu0 %v3112
    %3205 = vmatprep.subr.mxu0 0.0
    %3206 = vmatpush1.msra.mxu0 %v3113
    %3207 = vmatprep.subr.mxu0 0.0
    %3208 = vmatpush1.msra.mxu0 %v3114
    %3209 = vmatprep.subr.mxu0 0.0
    %3210 = vmatpush1.msra.mxu0 %v3115
    %3211 = vmatprep.subr.mxu0 0.0
    %3212 = vmatpush1.msra.mxu0 %v3116
    %3213 = vmatprep.subr.mxu0 0.0
    %3214 = vmatpush1.msra.mxu0 %v3117
    %3215 = vmatprep.subr.mxu0 0.0
    %3216 = vmatpush1.msra.mxu0 %v3118
    %3217 = vmatprep.subr.mxu0 0.0
    %3218 = vmatpush1.msra.mxu0 %v3119
    %3219 = vmatprep.subr.mxu0 0.0
    %3220 = vmatpush1.msra.mxu0 %v3120
    %3221 = vmatprep.subr.mxu0 0.0
    %3222 = vmatpush1.msra.mxu0 %v3121
    %3223 = vmatprep.subr.mxu0 0.0
    %3224 = vmatpush1.msra.mxu0 %v3122
    %3225 = vmatprep.subr.mxu0 0.0
    %3226 = vmatpush1.msra.mxu0 %v3123
    %3227 = vmatprep.subr.mxu0 0.0
    %3228 = vmatpush1.msra.mxu0 %v3124
    %3229 = vmatprep.subr.mxu0 0.0
    %3230 = vmatpush1.msra.mxu0 %v3125
    %3231 = vmatprep.subr.mxu0 0.0
    %3232 = vmatpush1.msra.mxu0 %v3126
    %3233 = vmatprep.subr.mxu0 0.0
    %3234 = vmatpush1.msra.mxu0 %v3127
    %3235 = vmatprep.subr.mxu0 0.0
    %3236 = vmatpush1.msra.mxu0 %v3128
    %3237 = vmatprep.subr.mxu0 0.0
    %3238 = vmatpush1.msra.mxu0 %v3129
    %3239 = vmatprep.subr.mxu0 0.0
    %3240 = vmatpush1.msra.mxu0 %v3130
    %3241 = vmatprep.subr.mxu0 0.0
    %3242 = vmatpush1.msra.mxu0 %v3131
    %3243 = vmatprep.subr.mxu0 0.0
    %3244 = vmatpush1.msra.mxu0 %v3132
    %3245 = vmatprep.subr.mxu0 0.0
    %3246 = vmatpush1.msra.mxu0 %v3133
    %3247 = vmatprep.subr.mxu0 0.0
    %3248 = vmatpush1.msra.mxu0 %v3134
    %3249 = vmatprep.subr.mxu0 0.0
    %3250 = vmatpush1.msra.mxu0 %v3135
    %3251 = vmatprep.subr.mxu0 0.0
    %3252 = vmatpush1.msra.mxu0 %v3136
    %3253 = vmatprep.mubr.f32.mxu0 %v3089
    %3254 = vmatmul.mubr.f32.gmra.mrb[0].mxu0 %v3041
    %v3255 = vpop.f32.mrb[0].mxu0
    %v3256 = vadd.f32 0.0, %v3255
    %v3257 = vpop.f32.mrb[0].mxu0
    %3258 = vmatprep.mubr.f32.mxu0 %v3090
    %3259 = vmatmul.mubr.f32.gmra.mrb[0].mxu0 %v3042
    %v3260 = vpop.f32.mrb[0].mxu0
    %v3261 = vadd.f32 0.0, %v3260
    %v3262 = vpop.f32.mrb[0].mxu0
    %3263 = vmatprep.mubr.f32.mxu0 %v3091
    %3264 = vmatmul.mubr.f32.gmra.mrb[0].mxu0 %v3043
    %v3265 = vpop.f32.mrb[0].mxu0
    %v3266 = vadd.f32 0.0, %v3265
    %v3267 = vpop.f32.mrb[0].mxu0
    %3268 = vmatprep.mubr.f32.mxu0 %v3092
    %3269 = vmatmul.mubr.f32.gmra.mrb[0].mxu0 %v3044
    %v3270 = vpop.f32.mrb[0].mxu0
    %v3271 = vadd.f32 0.0, %v3270
    %v3272 = vpop.f32.mrb[0].mxu0
    %3273 = vmatprep.mubr.f32.mxu0 %v3093
    %3274 = vmatmul.mubr.f32.gmra.mrb[0].mxu0 %v3045
    %v3275 = vpop.f32.mrb[0].mxu0
    %v3276 = vadd.f32 0.0, %v3275
    %v3277 = vpop.f32.mrb[0].mxu0
    %3278 = vmatprep.mubr.f32.mxu0 %v3094
    %3279 = vmatmul.mubr.f32.gmra.mrb[0].mxu0 %v3046
    %v3280 = vpop.f32.mrb[0].mxu0
    %v3281 = vadd.f32 0.0, %v3280
    %v3282 = vpop.f32.mrb[0].mxu0
    %3283 = vmatprep.mubr.f32.mxu0 %v3095
    %3284 = vmatmul.mubr.f32.gmra.mrb[0].mxu0 %v3047
    %v3285 = vpop.f32.mrb[0].mxu0
    %v3286 = vadd.f32 0.0, %v3285
    %v3287 = vpop.f32.mrb[0].mxu0
    %3288 = vmatprep.mubr.f32.mxu0 %v3096
    %3289 = vmatmul.mubr.f32.gmra.mrb[0].mxu0 %v3048
    %v3290 = vpop.f32.mrb[0].mxu0
    %v3291 = vadd.f32 0.0, %v3290
    %v3292 = vpop.f32.mrb[0].mxu0
    %3293 = vmatprep.mubr.f32.mxu0 %v3097
    %3294 = vmatmul.mubr.f32.gmra.mrb[0].mxu0 %v3049
    %v3295 = vpop.f32.mrb[0].mxu0
    %v3296 = vadd.f32 0.0, %v3295
    %v3297 = vpop.f32.mrb[0].mxu0
    %3298 = vmatprep.mubr.f32.mxu0 %v3098
    %3299 = vmatmul.mubr.f32.gmra.mrb[0].mxu0 %v3050
    %v3300 = vpop.f32.mrb[0].mxu0
    %v3301 = vadd.f32 0.0, %v3300
    %v3302 = vpop.f32.mrb[0].mxu0
    %3303 = vmatprep.mubr.f32.mxu0 %v3099
    %3304 = vmatmul.mubr.f32.gmra.mrb[0].mxu0 %v3051
    %v3305 = vpop.f32.mrb[0].mxu0
    %v3306 = vadd.f32 0.0, %v3305
    %v3307 = vpop.f32.mrb[0].mxu0
    %3308 = vmatprep.mubr.f32.mxu0 %v3100
    %3309 = vmatmul.mubr.f32.gmra.mrb[0].mxu0 %v3052
    %v3310 = vpop.f32.mrb[0].mxu0
    %v3311 = vadd.f32 0.0, %v3310
    %v3312 = vpop.f32.mrb[0].mxu0
    %3313 = vmatprep.mubr.f32.mxu0 %v3101
    %3314 = vmatmul.mubr.f32.gmra.mrb[0].mxu0 %v3053
    %v3315 = vpop.f32.mrb[0].mxu0
    %v3316 = vadd.f32 0.0, %v3315
    %v3317 = vpop.f32.mrb[0].mxu0
    %3318 = vmatprep.mubr.f32.mxu0 %v3102
    %3319 = vmatmul.mubr.f32.gmra.mrb[0].mxu0 %v3054
    %v3320 = vpop.f32.mrb[0].mxu0
    %v3321 = vadd.f32 0.0, %v3320
    %v3322 = vpop.f32.mrb[0].mxu0
    %3323 = vmatprep.mubr.f32.mxu0 %v3103
    %3324 = vmatmul.mubr.f32.gmra.mrb[0].mxu0 %v3055
    %v3325 = vpop.f32.mrb[0].mxu0
    %v3326 = vadd.f32 0.0, %v3325
    %v3327 = vpop.f32.mrb[0].mxu0
    %3328 = vmatprep.mubr.f32.mxu0 %v3104
    %3329 = vmatmul.mubr.f32.gmra.mrb[0].mxu0 %v3056
    %v3330 = vpop.f32.mrb[0].mxu0
    %v3331 = vadd.f32 0.0, %v3330
    %v3332 = vpop.f32.mrb[0].mxu0
    %3333 = vdwg.mxu0
    %3334 = vmatprep.subr.mxu0 0.0
    %3335 = vmatpush1.msra.mxu0 %v3137
    %3336 = vmatprep.subr.mxu0 0.0
    %3337 = vmatpush1.msra.mxu0 %v3138
    %3338 = vmatprep.subr.mxu0 0.0
    %3339 = vmatpush1.msra.mxu0 %v3139
    %3340 = vmatprep.subr.mxu0 0.0
    %3341 = vmatpush1.msra.mxu0 %v3140
    %3342 = vmatprep.subr.mxu0 0.0
    %3343 = vmatpush1.msra.mxu0 0.0
    %3344 = vmatprep.subr.mxu0 0.0
    %3345 = vmatpush1.msra.mxu0 0.0
    %3346 = vmatprep.subr.mxu0 0.0
    %3347 = vmatpush1.msra.mxu0 0.0
    %3348 = vmatprep.subr.mxu0 0.0
    %3349 = vmatpush1.msra.mxu0 0.0
    %3350 = vmatprep.subr.mxu0 0.0
    %3351 = vmatpush1.msra.mxu0 0.0
    %3352 = vmatprep.subr.mxu0 0.0
    %3353 = vmatpush1.msra.mxu0 0.0
    %3354 = vmatprep.subr.mxu0 0.0
    %3355 = vmatpush1.msra.mxu0 0.0
    %3356 = vmatprep.subr.mxu0 0.0
    %3357 = vmatpush1.msra.mxu0 0.0
    %3358 = vmatprep.subr.mxu0 0.0
    %3359 = vmatpush1.msra.mxu0 0.0
    %3360 = vmatprep.subr.mxu0 0.0
    %3361 = vmatpush1.msra.mxu0 0.0
    %3362 = vmatprep.subr.mxu0 0.0
    %3363 = vmatpush1.msra.mxu0 0.0
    %3364 = vmatprep.subr.mxu0 0.0
    %3365 = vmatpush1.msra.mxu0 0.0
    %3366 = vmatprep.subr.mxu0 0.0
    %3367 = vmatpush1.msra.mxu0 0.0
    %3368 = vmatprep.subr.mxu0 0.0
    %3369 = vmatpush1.msra.mxu0 0.0
    %3370 = vmatprep.subr.mxu0 0.0
    %3371 = vmatpush1.msra.mxu0 0.0
    %3372 = vmatprep.subr.mxu0 0.0
    %3373 = vmatpush1.msra.mxu0 0.0
    %3374 = vmatprep.subr.mxu0 0.0
    %3375 = vmatpush1.msra.mxu0 0.0
    %3376 = vmatprep.subr.mxu0 0.0
    %3377 = vmatpush1.msra.mxu0 0.0
    %3378 = vmatprep.subr.mxu0 0.0
    %3379 = vmatpush1.msra.mxu0 0.0
    %3380 = vmatprep.subr.mxu0 0.0
    %3381 = vmatpush1.msra.mxu0 0.0
    %3382 = vmatprep.subr.mxu0 0.0
    %3383 = vmatpush1.msra.mxu0 0.0
    %3384 = vmatprep.subr.mxu0 0.0
    %3385 = vmatpush1.msra.mxu0 0.0
    %3386 = vmatprep.subr.mxu0 0.0
    %3387 = vmatpush1.msra.mxu0 0.0
    %3388 = vmatprep.subr.mxu0 0.0
    %3389 = vmatpush1.msra.mxu0 0.0
    %3390 = vmatprep.subr.mxu0 0.0
    %3391 = vmatpush1.msra.mxu0 0.0
    %3392 = vmatprep.subr.mxu0 0.0
    %3393 = vmatpush1.msra.mxu0 0.0
    %3394 = vmatprep.subr.mxu0 0.0
    %3395 = vmatpush1.msra.mxu0 0.0
    %3396 = vmatprep.subr.mxu0 0.0
    %3397 = vmatpush1.msra.mxu0 0.0
    %3398 = vmatprep.mubr.f32.mxu0 0.0
    %3399 = vmatmul.mubr.f32.gmra.mrb[0].mxu0 %v3142
    %v3400 = vpop.f32.mrb[0].mxu0
    %v3401 = vadd.f32 %v3256, %v3400
    %v3402 = vpop.f32.mrb[0].mxu0
    %3403 = vmatprep.mubr.f32.mxu0 0.0
    %3404 = vmatmul.mubr.f32.gmra.mrb[0].mxu0 %v3145
    %v3405 = vpop.f32.mrb[0].mxu0
    %v3406 = vadd.f32 %v3261, %v3405
    %v3407 = vpop.f32.mrb[0].mxu0
    %3408 = vmatprep.mubr.f32.mxu0 0.0
    %3409 = vmatmul.mubr.f32.gmra.mrb[0].mxu0 %v3148
    %v3410 = vpop.f32.mrb[0].mxu0
    %v3411 = vadd.f32 %v3266, %v3410
    %v3412 = vpop.f32.mrb[0].mxu0
    %3413 = vmatprep.mubr.f32.mxu0 0.0
    %3414 = vmatmul.mubr.f32.gmra.mrb[0].mxu0 %v3151
    %v3415 = vpop.f32.mrb[0].mxu0
    %v3416 = vadd.f32 %v3271, %v3415
    %v3417 = vpop.f32.mrb[0].mxu0
    %3418 = vmatprep.mubr.f32.mxu0 0.0
    %3419 = vmatmul.mubr.f32.gmra.mrb[0].mxu0 %v3154
    %v3420 = vpop.f32.mrb[0].mxu0
    %v3421 = vadd.f32 %v3276, %v3420
    %v3422 = vpop.f32.mrb[0].mxu0
    %3423 = vmatprep.mubr.f32.mxu0 0.0
    %3424 = vmatmul.mubr.f32.gmra.mrb[0].mxu0 %v3157
    %v3425 = vpop.f32.mrb[0].mxu0
    %v3426 = vadd.f32 %v3281, %v3425
    %v3427 = vpop.f32.mrb[0].mxu0
    %3428 = vmatprep.mubr.f32.mxu0 0.0
    %3429 = vmatmul.mubr.f32.gmra.mrb[0].mxu0 %v3160
    %v3430 = vpop.f32.mrb[0].mxu0
    %v3431 = vadd.f32 %v3286, %v3430
    %v3432 = vpop.f32.mrb[0].mxu0
    %3433 = vmatprep.mubr.f32.mxu0 0.0
    %3434 = vmatmul.mubr.f32.gmra.mrb[0].mxu0 %v3163
    %v3435 = vpop.f32.mrb[0].mxu0
    %v3436 = vadd.f32 %v3291, %v3435
    %v3437 = vpop.f32.mrb[0].mxu0
    %3438 = vmatprep.mubr.f32.mxu0 0.0
    %3439 = vmatmul.mubr.f32.gmra.mrb[0].mxu0 %v3166
    %v3440 = vpop.f32.mrb[0].mxu0
    %v3441 = vadd.f32 %v3296, %v3440
    %v3442 = vpop.f32.mrb[0].mxu0
    %3443 = vmatprep.mubr.f32.mxu0 0.0
    %3444 = vmatmul.mubr.f32.gmra.mrb[0].mxu0 %v3169
    %v3445 = vpop.f32.mrb[0].mxu0
    %v3446 = vadd.f32 %v3301, %v3445
    %v3447 = vpop.f32.mrb[0].mxu0
    %3448 = vmatprep.mubr.f32.mxu0 0.0
    %3449 = vmatmul.mubr.f32.gmra.mrb[0].mxu0 %v3172
    %v3450 = vpop.f32.mrb[0].mxu0
    %v3451 = vadd.f32 %v3306, %v3450
    %v3452 = vpop.f32.mrb[0].mxu0
    %3453 = vmatprep.mubr.f32.mxu0 0.0
    %3454 = vmatmul.mubr.f32.gmra.mrb[0].mxu0 %v3175
    %v3455 = vpop.f32.mrb[0].mxu0
    %v3456 = vadd.f32 %v3311, %v3455
    %v3457 = vpop.f32.mrb[0].mxu0
    %3458 = vmatprep.mubr.f32.mxu0 0.0
    %3459 = vmatmul.mubr.f32.gmra.mrb[0].mxu0 %v3178
    %v3460 = vpop.f32.mrb[0].mxu0
    %v3461 = vadd.f32 %v3316, %v3460
    %v3462 = vpop.f32.mrb[0].mxu0
    %3463 = vmatprep.mubr.f32.mxu0 0.0
    %3464 = vmatmul.mubr.f32.gmra.mrb[0].mxu0 %v3181
    %v3465 = vpop.f32.mrb[0].mxu0
    %v3466 = vadd.f32 %v3321, %v3465
    %v3467 = vpop.f32.mrb[0].mxu0
    %3468 = vmatprep.mubr.f32.mxu0 0.0
    %3469 = vmatmul.mubr.f32.gmra.mrb[0].mxu0 %v3184
    %v3470 = vpop.f32.mrb[0].mxu0
    %v3471 = vadd.f32 %v3326, %v3470
    %v3472 = vpop.f32.mrb[0].mxu0
    %3473 = vmatprep.mubr.f32.mxu0 0.0
    %3474 = vmatmul.mubr.f32.gmra.mrb[0].mxu0 %v3187
    %v3475 = vpop.f32.mrb[0].mxu0
    %v3476 = vadd.f32 %v3331, %v3475
    %v3477 = vpop.f32.mrb[0].mxu0
    %3478 = vdwg.mxu0
    %v3479 = vsel %vm27, %v3401, 0.0
    %v3480 = vsel %vm27, %v3406, 0.0
    %v3481 = vadd.f32 %v3479, %v3480
    %v3482 = vsel %vm27, %v3411, 0.0
    %v3483 = vadd.f32 %v3481, %v3482
    %v3484 = vsel %vm27, %v3416, 0.0
    %v3485 = vadd.f32 %v3483, %v3484
    %v3486 = vsel %vm27, %v3421, 0.0
    %v3487 = vadd.f32 %v3485, %v3486
    %v3488 = vsel %vm27, %v3426, 0.0
    %v3489 = vadd.f32 %v3487, %v3488
    %v3490 = vsel %vm27, %v3431, 0.0
    %v3491 = vadd.f32 %v3489, %v3490
    %v3492 = vsel %vm27, %v3436, 0.0
    %v3493 = vadd.f32 %v3491, %v3492
    %v3494 = vsel %vm27, %v3441, 0.0
    %v3495 = vadd.f32 %v3493, %v3494
    %v3496 = vsel %vm27, %v3446, 0.0
    %v3497 = vadd.f32 %v3495, %v3496
    %v3498 = vsel %vm27, %v3451, 0.0
    %v3499 = vadd.f32 %v3497, %v3498
    %v3500 = vsel %vm27, %v3456, 0.0
    %v3501 = vadd.f32 %v3499, %v3500
    %v3502 = vsel %vm27, %v3461, 0.0
    %v3503 = vadd.f32 %v3501, %v3502
    %v3504 = vsel %vm27, %v3466, 0.0
    %v3505 = vadd.f32 %v3503, %v3504
    %v3506 = vsel %vm27, %v3471, 0.0
    %v3507 = vadd.f32 %v3505, %v3506
    %v3508 = vsel %vm27, %v3476, 0.0
    %v3509 = vadd.f32 %v3507, %v3508
    %v3510 = vrot.slane %v3509, 4
    %v3511 = vadd.f32 %v3509, %v3510
    %v3512 = vrot.slane %v3511, 2
    %v3513 = vadd.f32 %v3511, %v3512
    %v3514 = vrot.slane %v3513, 1
    %v3515 = vadd.f32 %v3513, %v3514
    %v3516 = vmul.f32 %v3515, 0.0078125
    %v3517 = vmul.f32 %v3401, %v3401
    %v3518 = vmul.f32 %v3406, %v3406
    %v3519 = vmul.f32 %v3411, %v3411
    %v3520 = vmul.f32 %v3416, %v3416
    %v3521 = vmul.f32 %v3421, %v3421
    %v3522 = vmul.f32 %v3426, %v3426
    %v3523 = vmul.f32 %v3431, %v3431
    %v3524 = vmul.f32 %v3436, %v3436
    %v3525 = vmul.f32 %v3441, %v3441
    %v3526 = vmul.f32 %v3446, %v3446
    %v3527 = vmul.f32 %v3451, %v3451
    %v3528 = vmul.f32 %v3456, %v3456
    %v3529 = vmul.f32 %v3461, %v3461
    %v3530 = vmul.f32 %v3466, %v3466
    %v3531 = vmul.f32 %v3471, %v3471
    %v3532 = vmul.f32 %v3476, %v3476
    %v3533 = vsel %vm27, %v3517, 0.0
    %v3534 = vsel %vm27, %v3518, 0.0
    %v3535 = vadd.f32 %v3533, %v3534
    %v3536 = vsel %vm27, %v3519, 0.0
    %v3537 = vadd.f32 %v3535, %v3536
    %v3538 = vsel %vm27, %v3520, 0.0
    %v3539 = vadd.f32 %v3537, %v3538
    %v3540 = vsel %vm27, %v3521, 0.0
    %v3541 = vadd.f32 %v3539, %v3540
    %v3542 = vsel %vm27, %v3522, 0.0
    %v3543 = vadd.f32 %v3541, %v3542
    %v3544 = vsel %vm27, %v3523, 0.0
    %v3545 = vadd.f32 %v3543, %v3544
    %v3546 = vsel %vm27, %v3524, 0.0
    %v3547 = vadd.f32 %v3545, %v3546
    %v3548 = vsel %vm27, %v3525, 0.0
    %v3549 = vadd.f32 %v3547, %v3548
    %v3550 = vsel %vm27, %v3526, 0.0
    %v3551 = vadd.f32 %v3549, %v3550
    %v3552 = vsel %vm27, %v3527, 0.0
    %v3553 = vadd.f32 %v3551, %v3552
    %v3554 = vsel %vm27, %v3528, 0.0
    %v3555 = vadd.f32 %v3553, %v3554
    %v3556 = vsel %vm27, %v3529, 0.0
    %v3557 = vadd.f32 %v3555, %v3556
    %v3558 = vsel %vm27, %v3530, 0.0
    %v3559 = vadd.f32 %v3557, %v3558
    %v3560 = vsel %vm27, %v3531, 0.0
    %v3561 = vadd.f32 %v3559, %v3560
    %v3562 = vsel %vm27, %v3532, 0.0
    %v3563 = vadd.f32 %v3561, %v3562
    %v3564 = vrot.slane %v3563, 4
    %v3565 = vadd.f32 %v3563, %v3564
    %v3566 = vrot.slane %v3565, 2
    %v3567 = vadd.f32 %v3565, %v3566
    %v3568 = vrot.slane %v3567, 1
    %v3569 = vadd.f32 %v3567, %v3568
    %v3570 = vmul.f32 %v3569, 0.0078125
    %v3571 = vmul.f32 %v3516, %v3516
    %v3572 = vsub.f32 %v3570, %v3571
    %v3573 = vmax.f32 %v3572, 0.0
    %v3574 = vsub.f32 %v3401, %v3516
    %v3575 = vsub.f32 %v3406, %v3516
    %v3576 = vsub.f32 %v3411, %v3516
    %v3577 = vsub.f32 %v3416, %v3516
    %v3578 = vsub.f32 %v3421, %v3516
    %v3579 = vsub.f32 %v3426, %v3516
    %v3580 = vsub.f32 %v3431, %v3516
    %v3581 = vsub.f32 %v3436, %v3516
    %v3582 = vsub.f32 %v3441, %v3516
    %v3583 = vsub.f32 %v3446, %v3516
    %v3584 = vsub.f32 %v3451, %v3516
    %v3585 = vsub.f32 %v3456, %v3516
    %v3586 = vsub.f32 %v3461, %v3516
    %v3587 = vsub.f32 %v3466, %v3516
    %v3588 = vsub.f32 %v3471, %v3516
    %v3589 = vsub.f32 %v3476, %v3516
    %v3590 = vadd.f32 %v3573, 1e-05
    %v3591 = vrsqrt.pop %v3590
    %v3592 = vmul.f32 %v3574, %v3591
    %v3593 = vmul.f32 %v3575, %v3591
    %v3594 = vmul.f32 %v3576, %v3591
    %v3595 = vmul.f32 %v3577, %v3591
    %v3596 = vmul.f32 %v3578, %v3591
    %v3597 = vmul.f32 %v3579, %v3591
    %v3598 = vmul.f32 %v3580, %v3591
    %v3599 = vmul.f32 %v3581, %v3591
    %v3600 = vmul.f32 %v3582, %v3591
    %v3601 = vmul.f32 %v3583, %v3591
    %v3602 = vmul.f32 %v3584, %v3591
    %v3603 = vmul.f32 %v3585, %v3591
    %v3604 = vmul.f32 %v3586, %v3591
    %v3605 = vmul.f32 %v3587, %v3591
    %v3606 = vmul.f32 %v3588, %v3591
    %v3607 = vmul.f32 %v3589, %v3591
    %v3608 = vmax.f32 %v3592, 0.0
    %v3609 = vmax.f32 %v3593, 0.0
    %v3610 = vmax.f32 %v3594, 0.0
    %v3611 = vmax.f32 %v3595, 0.0
    %v3612 = vmax.f32 %v3596, 0.0
    %v3613 = vmax.f32 %v3597, 0.0
    %v3614 = vmax.f32 %v3598, 0.0
    %v3615 = vmax.f32 %v3599, 0.0
    %v3616 = vmax.f32 %v3600, 0.0
    %v3617 = vmax.f32 %v3601, 0.0
    %v3618 = vmax.f32 %v3602, 0.0
    %v3619 = vmax.f32 %v3603, 0.0
    %v3620 = vmax.f32 %v3604, 0.0
    %v3621 = vmax.f32 %v3605, 0.0
    %v3622 = vmax.f32 %v3606, 0.0
    %v3623 = vmax.f32 %v3607, 0.0
    %3624 = vst.msk [vmem:[%s85 + $0x1] sm:$0xff] %vm27, %v3608
    %3625 = vst.msk [vmem:[%s85 + $0x11] sm:$0xff] %vm27, %v3609
    %3626 = vst.msk [vmem:[%s85 + $0x21] sm:$0xff] %vm27, %v3610
    %3627 = vst.msk [vmem:[%s85 + $0x31] sm:$0xff] %vm27, %v3611
    %3628 = vst.msk [vmem:[%s85 + $0x41] sm:$0xff] %vm27, %v3612
    %3629 = vst.msk [vmem:[%s85 + $0x51] sm:$0xff] %vm27, %v3613
    %3630 = vst.msk [vmem:[%s85 + $0x61] sm:$0xff] %vm27, %v3614
    %3631 = vst.msk [vmem:[%s85 + $0x71] sm:$0xff] %vm27, %v3615
    %3632 = vst.msk [vmem:[%s85 + $0xa1] sm:$0xff] %vm27, %v3616
    %3633 = vst.msk [vmem:[%s85 + $0xb1] sm:$0xff] %vm27, %v3617
    %3634 = vst.msk [vmem:[%s85 + $0xc1] sm:$0xff] %vm27, %v3618
    %3635 = vst.msk [vmem:[%s85 + $0xd1] sm:$0xff] %vm27, %v3619
    %3636 = vst.msk [vmem:[%s85 + $0xe1] sm:$0xff] %vm27, %v3620
    %3637 = vst.msk [vmem:[%s85 + $0xf1] sm:$0xff] %vm27, %v3621
    %3638 = vst.msk [vmem:[%s85 + $0x101] sm:$0xff] %vm27, %v3622
    %3639 = vst.msk [vmem:[%s85 + $0x111] sm:$0xff] %vm27, %v3623
    %v3640 = vld [vmem:[#allocation2] sm:$0xff]
    %v3641 = vld [vmem:[#allocation2 + $0x10] sm:$0xff]
    %v3642 = vld [vmem:[#allocation2 + $0x20] sm:$0xff]
    %v3643 = vld [vmem:[#allocation2 + $0x30] sm:$0xff]
    %v3644 = vld [vmem:[#allocation2 + $0x40] sm:$0xff]
    %v3645 = vld [vmem:[#allocation2 + $0x50] sm:$0xff]
    %v3646 = vld [vmem:[#allocation2 + $0x60] sm:$0xff]
    %v3647 = vld [vmem:[#allocation2 + $0x70] sm:$0xff]
    %v3648 = vld [vmem:[#allocation2 + $0xa0] sm:$0xff]
    %v3649 = vld [vmem:[#allocation2 + $0xb0] sm:$0xff]
    %v3650 = vld [vmem:[#allocation2 + $0xc0] sm:$0xff]
    %v3651 = vld [vmem:[#allocation2 + $0xd0] sm:$0xff]
    %v3652 = vld [vmem:[#allocation2 + $0xe0] sm:$0xff]
    %v3653 = vld [vmem:[#allocation2 + $0xf0] sm:$0xff]
    %v3654 = vld [vmem:[#allocation2 + $0x100] sm:$0xff]
    %v3655 = vld [vmem:[#allocation2 + $0x110] sm:$0xff]
    %v3656 = vld [vmem:[#allocation2 + $0x1] sm:$0xff]
    %v3657 = vld [vmem:[#allocation2 + $0x11] sm:$0xff]
    %v3658 = vld [vmem:[#allocation2 + $0x21] sm:$0xff]
    %v3659 = vld [vmem:[#allocation2 + $0x31] sm:$0xff]
    %v3660 = vld [vmem:[#allocation2 + $0x41] sm:$0xff]
    %v3661 = vld [vmem:[#allocation2 + $0x51] sm:$0xff]
    %v3662 = vld [vmem:[#allocation2 + $0x61] sm:$0xff]
    %v3663 = vld [vmem:[#allocation2 + $0x71] sm:$0xff]
    %v3664 = vld [vmem:[#allocation2 + $0xa1] sm:$0xff]
    %v3665 = vld [vmem:[#allocation2 + $0xb1] sm:$0xff]
    %v3666 = vld [vmem:[#allocation2 + $0xc1] sm:$0xff]
    %v3667 = vld [vmem:[#allocation2 + $0xd1] sm:$0xff]
    %v3668 = vld [vmem:[#allocation2 + $0xe1] sm:$0xff]
    %v3669 = vld [vmem:[#allocation2 + $0xf1] sm:$0xff]
    %v3670 = vld [vmem:[#allocation2 + $0x101] sm:$0xff]
    %v3671 = vld [vmem:[#allocation2 + $0x111] sm:$0xff]
    %v3672 = vld [vmem:[#allocation2 + $0x2] sm:$0xff]
    %v3673 = vld [vmem:[#allocation2 + $0x12] sm:$0xff]
    %v3674 = vld [vmem:[#allocation2 + $0x22] sm:$0xff]
    %v3675 = vld [vmem:[#allocation2 + $0x32] sm:$0xff]
    %v3676 = vld [vmem:[#allocation2 + $0x42] sm:$0xff]
    %v3677 = vld [vmem:[#allocation2 + $0x52] sm:$0xff]
    %v3678 = vld [vmem:[#allocation2 + $0x62] sm:$0xff]
    %v3679 = vld [vmem:[#allocation2 + $0x72] sm:$0xff]
    %v3680 = vld [vmem:[#allocation2 + $0xa2] sm:$0xff]
    %v3681 = vld [vmem:[#allocation2 + $0xb2] sm:$0xff]
    %v3682 = vld [vmem:[#allocation2 + $0xc2] sm:$0xff]
    %v3683 = vld [vmem:[#allocation2 + $0xd2] sm:$0xff]
    %v3684 = vld [vmem:[#allocation2 + $0xe2] sm:$0xff]
    %v3685 = vld [vmem:[#allocation2 + $0xf2] sm:$0xff]
    %v3686 = vld [vmem:[#allocation2 + $0x102] sm:$0xff]
    %v3687 = vld [vmem:[#allocation2 + $0x112] sm:$0xff]
    %v3688 = vld [vmem:[%s85] sm:$0xff]
    %v3689 = vld [vmem:[%s85 + $0x10] sm:$0xff]
    %v3690 = vld [vmem:[%s85 + $0x20] sm:$0xff]
    %v3691 = vld [vmem:[%s85 + $0x30] sm:$0xff]
    %v3692 = vld [vmem:[%s85 + $0x40] sm:$0xff]
    %v3693 = vld [vmem:[%s85 + $0x50] sm:$0xff]
    %v3694 = vld [vmem:[%s85 + $0x60] sm:$0xff]
    %v3695 = vld [vmem:[%s85 + $0x70] sm:$0xff]
    %v3696 = vld [vmem:[%s85 + $0xa0] sm:$0xff]
    %v3697 = vld [vmem:[%s85 + $0xb0] sm:$0xff]
    %v3698 = vld [vmem:[%s85 + $0xc0] sm:$0xff]
    %v3699 = vld [vmem:[%s85 + $0xd0] sm:$0xff]
    %v3700 = vld [vmem:[%s85 + $0xe0] sm:$0xff]
    %v3701 = vld [vmem:[%s85 + $0xf0] sm:$0xff]
    %v3702 = vld [vmem:[%s85 + $0x100] sm:$0xff]
    %v3703 = vld [vmem:[%s85 + $0x110] sm:$0xff]
    %v3704 = vld [vmem:[%s85 + $0x1] sm:$0xff]
    %v3705 = vld [vmem:[%s85 + $0x11] sm:$0xff]
    %v3706 = vld [vmem:[%s85 + $0x21] sm:$0xff]
    %v3707 = vld [vmem:[%s85 + $0x31] sm:$0xff]
    %v3708 = vld [vmem:[%s85 + $0x41] sm:$0xff]
    %v3709 = vld [vmem:[%s85 + $0x51] sm:$0xff]
    %v3710 = vld [vmem:[%s85 + $0x61] sm:$0xff]
    %v3711 = vld [vmem:[%s85 + $0x71] sm:$0xff]
    %v3712 = vld [vmem:[%s85 + $0xa1] sm:$0xff]
    %v3713 = vld [vmem:[%s85 + $0xb1] sm:$0xff]
    %v3714 = vld [vmem:[%s85 + $0xc1] sm:$0xff]
    %v3715 = vld [vmem:[%s85 + $0xd1] sm:$0xff]
    %v3716 = vld [vmem:[%s85 + $0xe1] sm:$0xff]
    %v3717 = vld [vmem:[%s85 + $0xf1] sm:$0xff]
    %v3718 = vld [vmem:[%s85 + $0x101] sm:$0xff]
    %v3719 = vld [vmem:[%s85 + $0x111] sm:$0xff]
    %v3720 = vld [vmem:[%s85 + $0x2] sm:$0xff]
    %v3721 = vld [vmem:[%s85 + $0x12] sm:$0xff]
    %v3722 = vld [vmem:[%s85 + $0x22] sm:$0xff]
    %v3723 = vld [vmem:[%s85 + $0x32] sm:$0xff]
    %v3724 = vld [vmem:[%s85 + $0x42] sm:$0xff]
    %v3725 = vld [vmem:[%s85 + $0x52] sm:$0xff]
    %v3726 = vld [vmem:[%s85 + $0x62] sm:$0xff]
    %v3727 = vld [vmem:[%s85 + $0x72] sm:$0xff]
    %v3728 = vld [vmem:[%s85 + $0xa2] sm:$0xff]
    %v3729 = vld [vmem:[%s85 + $0xb2] sm:$0xff]
    %v3730 = vld [vmem:[%s85 + $0xc2] sm:$0xff]
    %v3731 = vld [vmem:[%s85 + $0xd2] sm:$0xff]
    %v3732 = vld [vmem:[%s85 + $0xe2] sm:$0xff]
    %v3733 = vld [vmem:[%s85 + $0xf2] sm:$0xff]
    %v3734 = vld [vmem:[%s85 + $0x102] sm:$0xff]
    %v3735 = vld [vmem:[%s85 + $0x112] sm:$0xff]
    %v3736 = vld [vmem:[%s198] sm:$0xff]
    %v3737 = vld [vmem:[%s198 + $0x10] sm:$0xff]
    %v3738 = vld [vmem:[%s198 + $0x20] sm:$0xff]
    %v3739 = vld [vmem:[%s198 + $0x30] sm:$0xff]
    %v3740 = vld [vmem:[%s198 + $0x40] sm:$0xff]
    %v3741 = vld [vmem:[%s198 + $0x50] sm:$0xff]
    %v3742 = vld [vmem:[%s198 + $0x60] sm:$0xff]
    %v3743 = vld [vmem:[%s198 + $0x70] sm:$0xff]
    %v3744 = vld [vmem:[%s198 + $0xa0] sm:$0xff]
    %v3745 = vld [vmem:[%s198 + $0xb0] sm:$0xff]
    %v3746 = vld [vmem:[%s198 + $0xc0] sm:$0xff]
    %v3747 = vld [vmem:[%s198 + $0xd0] sm:$0xff]
    %v3748 = vld [vmem:[%s198 + $0xe0] sm:$0xff]
    %v3749 = vld [vmem:[%s198 + $0xf0] sm:$0xff]
    %v3750 = vld [vmem:[%s198 + $0x100] sm:$0xff]
    %v3751 = vld [vmem:[%s198 + $0x110] sm:$0xff]
    %v3752 = vld [vmem:[%s198 + $0x1] sm:$0xff]
    %v3753 = vld [vmem:[%s198 + $0x11] sm:$0xff]
    %v3754 = vld [vmem:[%s198 + $0x21] sm:$0xff]
    %v3755 = vld [vmem:[%s198 + $0x31] sm:$0xff]
    %v3756 = vld [vmem:[%s198 + $0x41] sm:$0xff]
    %v3757 = vld [vmem:[%s198 + $0x51] sm:$0xff]
    %v3758 = vld [vmem:[%s198 + $0x61] sm:$0xff]
    %v3759 = vld [vmem:[%s198 + $0x71] sm:$0xff]
    %v3760 = vld [vmem:[%s198 + $0xa1] sm:$0xff]
    %v3761 = vld [vmem:[%s198 + $0xb1] sm:$0xff]
    %v3762 = vld [vmem:[%s198 + $0xc1] sm:$0xff]
    %v3763 = vld [vmem:[%s198 + $0xd1] sm:$0xff]
    %v3764 = vld [vmem:[%s198 + $0xe1] sm:$0xff]
    %v3765 = vld [vmem:[%s198 + $0xf1] sm:$0xff]
    %v3766 = vld [vmem:[%s198 + $0x101] sm:$0xff]
    %v3767 = vld [vmem:[%s198 + $0x111] sm:$0xff]
    %v3768 = vld [vmem:[%s198 + $0x2] sm:$0xff]
    %v3769 = vld [vmem:[%s198 + $0x12] sm:$0xff]
    %v3770 = vld [vmem:[%s198 + $0x22] sm:$0xff]
    %v3771 = vld [vmem:[%s198 + $0x32] sm:$0xff]
    %v3772 = vld [vmem:[%s198 + $0x42] sm:$0xff]
    %v3773 = vld [vmem:[%s198 + $0x52] sm:$0xff]
    %v3774 = vld [vmem:[%s198 + $0x62] sm:$0xff]
    %v3775 = vld [vmem:[%s198 + $0x72] sm:$0xff]
    %v3776 = vld [vmem:[%s198 + $0xa2] sm:$0xff]
    %v3777 = vld [vmem:[%s198 + $0xb2] sm:$0xff]
    %v3778 = vld [vmem:[%s198 + $0xc2] sm:$0xff]
    %v3779 = vld [vmem:[%s198 + $0xd2] sm:$0xff]
    %v3780 = vld [vmem:[%s198 + $0xe2] sm:$0xff]
    %v3781 = vld [vmem:[%s198 + $0xf2] sm:$0xff]
    %v3782 = vld [vmem:[%s198 + $0x102] sm:$0xff]
    %v3783 = vld [vmem:[%s198 + $0x112] sm:$0xff]
    %3800 = vrot.lane.b32.xlu0 %v3656, 64
    %v3801 = vpop.permute.xlu0 %3800
    %3802 = vrot.lane.b32.xlu0 %v3657, 64
    %v3803 = vpop.permute.xlu0 %3802
    %3804 = vrot.lane.b32.xlu0 %v3658, 64
    %v3805 = vpop.permute.xlu0 %3804
    %3806 = vrot.lane.b32.xlu0 %v3659, 64
    %v3807 = vpop.permute.xlu0 %3806
    %3808 = vrot.lane.b32.xlu0 %v3660, 64
    %v3809 = vpop.permute.xlu0 %3808
    %3810 = vrot.lane.b32.xlu0 %v3661, 64
    %v3811 = vpop.permute.xlu0 %3810
    %3812 = vrot.lane.b32.xlu0 %v3662, 64
    %v3813 = vpop.permute.xlu0 %3812
    %3814 = vrot.lane.b32.xlu0 %v3663, 64
    %v3815 = vpop.permute.xlu0 %3814
    %3816 = vrot.lane.b32.xlu0 %v3664, 64
    %v3817 = vpop.permute.xlu0 %3816
    %3818 = vrot.lane.b32.xlu0 %v3665, 64
    %v3819 = vpop.permute.xlu0 %3818
    %3820 = vrot.lane.b32.xlu0 %v3666, 64
    %v3821 = vpop.permute.xlu0 %3820
    %3822 = vrot.lane.b32.xlu0 %v3667, 64
    %v3823 = vpop.permute.xlu0 %3822
    %3824 = vrot.lane.b32.xlu0 %v3668, 64
    %v3825 = vpop.permute.xlu0 %3824
    %3826 = vrot.lane.b32.xlu0 %v3669, 64
    %v3827 = vpop.permute.xlu0 %3826
    %3828 = vrot.lane.b32.xlu0 %v3670, 64
    %v3829 = vpop.permute.xlu0 %3828
    %3830 = vrot.lane.b32.xlu0 %v3671, 64
    %v3831 = vpop.permute.xlu0 %3830
    %3864 = vrot.lane.b32.xlu0 %v3688, 64
    %v3865 = vpop.permute.xlu0 %3864
    %3866 = vrot.lane.b32.xlu0 %v3689, 64
    %v3867 = vpop.permute.xlu0 %3866
    %3868 = vrot.lane.b32.xlu0 %v3690, 64
    %v3869 = vpop.permute.xlu0 %3868
    %3870 = vrot.lane.b32.xlu0 %v3691, 64
    %v3871 = vpop.permute.xlu0 %3870
    %3872 = vrot.lane.b32.xlu0 %v3692, 64
    %v3873 = vpop.permute.xlu0 %3872
    %3874 = vrot.lane.b32.xlu0 %v3693, 64
    %v3875 = vpop.permute.xlu0 %3874
    %3876 = vrot.lane.b32.xlu0 %v3694, 64
    %v3877 = vpop.permute.xlu0 %3876
    %3878 = vrot.lane.b32.xlu0 %v3695, 64
    %v3879 = vpop.permute.xlu0 %3878
    %3880 = vrot.lane.b32.xlu0 %v3696, 64
    %v3881 = vpop.permute.xlu0 %3880
    %3882 = vrot.lane.b32.xlu0 %v3697, 64
    %v3883 = vpop.permute.xlu0 %3882
    %3884 = vrot.lane.b32.xlu0 %v3698, 64
    %v3885 = vpop.permute.xlu0 %3884
    %3886 = vrot.lane.b32.xlu0 %v3699, 64
    %v3887 = vpop.permute.xlu0 %3886
    %3888 = vrot.lane.b32.xlu0 %v3700, 64
    %v3889 = vpop.permute.xlu0 %3888
    %3890 = vrot.lane.b32.xlu0 %v3701, 64
    %v3891 = vpop.permute.xlu0 %3890
    %3892 = vrot.lane.b32.xlu0 %v3702, 64
    %v3893 = vpop.permute.xlu0 %3892
    %3894 = vrot.lane.b32.xlu0 %v3703, 64
    %v3895 = vpop.permute.xlu0 %3894
    %3928 = vrot.lane.b32.xlu0 %v3720, 64
    %v3929 = vpop.permute.xlu0 %3928
    %3930 = vrot.lane.b32.xlu0 %v3721, 64
    %v3931 = vpop.permute.xlu0 %3930
    %3932 = vrot.lane.b32.xlu0 %v3722, 64
    %v3933 = vpop.permute.xlu0 %3932
    %3934 = vrot.lane.b32.xlu0 %v3723, 64
    %v3935 = vpop.permute.xlu0 %3934
    %3936 = vrot.lane.b32.xlu0 %v3724, 64
    %v3937 = vpop.permute.xlu0 %3936
    %3938 = vrot.lane.b32.xlu0 %v3725, 64
    %v3939 = vpop.permute.xlu0 %3938
    %3940 = vrot.lane.b32.xlu0 %v3726, 64
    %v3941 = vpop.permute.xlu0 %3940
    %3942 = vrot.lane.b32.xlu0 %v3727, 64
    %v3943 = vpop.permute.xlu0 %3942
    %3944 = vrot.lane.b32.xlu0 %v3728, 64
    %v3945 = vpop.permute.xlu0 %3944
    %3946 = vrot.lane.b32.xlu0 %v3729, 64
    %v3947 = vpop.permute.xlu0 %3946
    %3948 = vrot.lane.b32.xlu0 %v3730, 64
    %v3949 = vpop.permute.xlu0 %3948
    %3950 = vrot.lane.b32.xlu0 %v3731, 64
    %v3951 = vpop.permute.xlu0 %3950
    %3952 = vrot.lane.b32.xlu0 %v3732, 64
    %v3953 = vpop.permute.xlu0 %3952
    %3954 = vrot.lane.b32.xlu0 %v3733, 64
    %v3955 = vpop.permute.xlu0 %3954
    %3956 = vrot.lane.b32.xlu0 %v3734, 64
    %v3957 = vpop.permute.xlu0 %3956
    %3958 = vrot.lane.b32.xlu0 %v3735, 64
    %v3959 = vpop.permute.xlu0 %3958
    %3992 = vrot.lane.b32.xlu0 %v3752, 64
    %v3993 = vpop.permute.xlu0 %3992
    %3994 = vrot.lane.b32.xlu0 %v3753, 64
    %v3995 = vpop.permute.xlu0 %3994
    %3996 = vrot.lane.b32.xlu0 %v3754, 64
    %v3997 = vpop.permute.xlu0 %3996
    %3998 = vrot.lane.b32.xlu0 %v3755, 64
    %v3999 = vpop.permute.xlu0 %3998
    %4000 = vrot.lane.b32.xlu0 %v3756, 64
    %v4001 = vpop.permute.xlu0 %4000
    %4002 = vrot.lane.b32.xlu0 %v3757, 64
    %v4003 = vpop.permute.xlu0 %4002
    %4004 = vrot.lane.b32.xlu0 %v3758, 64
    %v4005 = vpop.permute.xlu0 %4004
    %4006 = vrot.lane.b32.xlu0 %v3759, 64
    %v4007 = vpop.permute.xlu0 %4006
    %4008 = vrot.lane.b32.xlu0 %v3760, 64
    %v4009 = vpop.permute.xlu0 %4008
    %4010 = vrot.lane.b32.xlu0 %v3761, 64
    %v4011 = vpop.permute.xlu0 %4010
    %4012 = vrot.lane.b32.xlu0 %v3762, 64
    %v4013 = vpop.permute.xlu0 %4012
    %4014 = vrot.lane.b32.xlu0 %v3763, 64
    %v4015 = vpop.permute.xlu0 %4014
    %4016 = vrot.lane.b32.xlu0 %v3764, 64
    %v4017 = vpop.permute.xlu0 %4016
    %4018 = vrot.lane.b32.xlu0 %v3765, 64
    %v4019 = vpop.permute.xlu0 %4018
    %4020 = vrot.lane.b32.xlu0 %v3766, 64
    %v4021 = vpop.permute.xlu0 %4020
    %4022 = vrot.lane.b32.xlu0 %v3767, 64
    %v4023 = vpop.permute.xlu0 %4022
    %v4040 = vsel %vm27, %v3640, %v3801
    %v4041 = vsel %vm27, %v3641, %v3803
    %v4042 = vsel %vm27, %v3642, %v3805
    %v4043 = vsel %vm27, %v3643, %v3807
    %v4044 = vsel %vm27, %v3644, %v3809
    %v4045 = vsel %vm27, %v3645, %v3811
    %v4046 = vsel %vm27, %v3646, %v3813
    %v4047 = vsel %vm27, %v3647, %v3815
    %v4048 = vsel %vm27, %v3648, %v3817
    %v4049 = vsel %vm27, %v3649, %v3819
    %v4050 = vsel %vm27, %v3650, %v3821
    %v4051 = vsel %vm27, %v3651, %v3823
    %v4052 = vsel %vm27, %v3652, %v3825
    %v4053 = vsel %vm27, %v3653, %v3827
    %v4054 = vsel %vm27, %v3654, %v3829
    %v4055 = vsel %vm27, %v3655, %v3831
    %v4056 = vsel %vm27, %v3672, %v3865
    %v4057 = vsel %vm27, %v3673, %v3867
    %v4058 = vsel %vm27, %v3674, %v3869
    %v4059 = vsel %vm27, %v3675, %v3871
    %v4060 = vsel %vm27, %v3676, %v3873
    %v4061 = vsel %vm27, %v3677, %v3875
    %v4062 = vsel %vm27, %v3678, %v3877
    %v4063 = vsel %vm27, %v3679, %v3879
    %v4064 = vsel %vm27, %v3680, %v3881
    %v4065 = vsel %vm27, %v3681, %v3883
    %v4066 = vsel %vm27, %v3682, %v3885
    %v4067 = vsel %vm27, %v3683, %v3887
    %v4068 = vsel %vm27, %v3684, %v3889
    %v4069 = vsel %vm27, %v3685, %v3891
    %v4070 = vsel %vm27, %v3686, %v3893
    %v4071 = vsel %vm27, %v3687, %v3895
    %v4072 = vsel %vm27, %v3704, %v3929
    %v4073 = vsel %vm27, %v3705, %v3931
    %v4074 = vsel %vm27, %v3706, %v3933
    %v4075 = vsel %vm27, %v3707, %v3935
    %v4076 = vsel %vm27, %v3708, %v3937
    %v4077 = vsel %vm27, %v3709, %v3939
    %v4078 = vsel %vm27, %v3710, %v3941
    %v4079 = vsel %vm27, %v3711, %v3943
    %v4080 = vsel %vm27, %v3712, %v3945
    %v4081 = vsel %vm27, %v3713, %v3947
    %v4082 = vsel %vm27, %v3714, %v3949
    %v4083 = vsel %vm27, %v3715, %v3951
    %v4084 = vsel %vm27, %v3716, %v3953
    %v4085 = vsel %vm27, %v3717, %v3955
    %v4086 = vsel %vm27, %v3718, %v3957
    %v4087 = vsel %vm27, %v3719, %v3959
    %v4088 = vsel %vm27, %v3736, %v3993
    %v4089 = vsel %vm27, %v3737, %v3995
    %v4090 = vsel %vm27, %v3738, %v3997
    %v4091 = vsel %vm27, %v3739, %v3999
    %v4092 = vsel %vm27, %v3740, %v4001
    %v4093 = vsel %vm27, %v3741, %v4003
    %v4094 = vsel %vm27, %v3742, %v4005
    %v4095 = vsel %vm27, %v3743, %v4007
    %v4096 = vsel %vm27, %v3744, %v4009
    %v4097 = vsel %vm27, %v3745, %v4011
    %v4098 = vsel %vm27, %v3746, %v4013
    %v4099 = vsel %vm27, %v3747, %v4015
    %v4100 = vsel %vm27, %v3748, %v4017
    %v4101 = vsel %vm27, %v3749, %v4019
    %v4102 = vsel %vm27, %v3750, %v4021
    %v4103 = vsel %vm27, %v3751, %v4023
    %v4104 = vld [vmem:[%s4] sm:$0xff]
    %v4105 = vld [vmem:[%s4 + $0x8] sm:$0xff]
    %v4106 = vld [vmem:[%s4 + $0x10] sm:$0xff]
    %v4107 = vld [vmem:[%s4 + $0x18] sm:$0xff]
    %v4108 = vld [vmem:[%s4 + $0x20] sm:$0xff]
    %v4109 = vld [vmem:[%s4 + $0x28] sm:$0xff]
    %v4110 = vld [vmem:[%s4 + $0x30] sm:$0xff]
    %v4111 = vld [vmem:[%s4 + $0x38] sm:$0xff]
    %v4112 = vld [vmem:[%s4 + $0x40] sm:$0xff]
    %v4113 = vld [vmem:[%s4 + $0x48] sm:$0xff]
    %v4114 = vld [vmem:[%s4 + $0x50] sm:$0xff]
    %v4115 = vld [vmem:[%s4 + $0x58] sm:$0xff]
    %v4116 = vld [vmem:[%s4 + $0x60] sm:$0xff]
    %v4117 = vld [vmem:[%s4 + $0x68] sm:$0xff]
    %v4118 = vld [vmem:[%s4 + $0x70] sm:$0xff]
    %v4119 = vld [vmem:[%s4 + $0x78] sm:$0xff]
    %v4120 = vld [vmem:[%s4 + $0x80] sm:$0xff]
    %v4121 = vld [vmem:[%s4 + $0x88] sm:$0xff]
    %v4122 = vld [vmem:[%s4 + $0x90] sm:$0xff]
    %v4123 = vld [vmem:[%s4 + $0x98] sm:$0xff]
    %v4124 = vld [vmem:[%s4 + $0xa0] sm:$0xff]
    %v4125 = vld [vmem:[%s4 + $0xa8] sm:$0xff]
    %v4126 = vld [vmem:[%s4 + $0xb0] sm:$0xff]
    %v4127 = vld [vmem:[%s4 + $0xb8] sm:$0xff]
    %v4128 = vld [vmem:[%s4 + $0xc0] sm:$0xff]
    %v4129 = vld [vmem:[%s4 + $0xc8] sm:$0xff]
    %v4130 = vld [vmem:[%s4 + $0xd0] sm:$0xff]
    %v4131 = vld [vmem:[%s4 + $0xd8] sm:$0xff]
    %v4132 = vld [vmem:[%s4 + $0xe0] sm:$0xff]
    %v4133 = vld [vmem:[%s4 + $0xe8] sm:$0xff]
    %v4134 = vld [vmem:[%s4 + $0xf0] sm:$0xff]
    %v4135 = vld [vmem:[%s4 + $0xf8] sm:$0xff]
    %v4136 = vld [vmem:[%s4 + $0x100] sm:$0xff]
    %v4137 = vld [vmem:[%s4 + $0x108] sm:$0xff]
    %v4138 = vld [vmem:[%s4 + $0x110] sm:$0xff]
    %v4139 = vld [vmem:[%s4 + $0x118] sm:$0xff]
    %v4140 = vld [vmem:[%s4 + $0x120] sm:$0xff]
    %v4141 = vld [vmem:[%s4 + $0x128] sm:$0xff]
    %v4142 = vld [vmem:[%s4 + $0x130] sm:$0xff]
    %v4143 = vld [vmem:[%s4 + $0x138] sm:$0xff]
    %v4144 = vld [vmem:[%s4 + $0x140] sm:$0xff]
    %v4145 = vld [vmem:[%s4 + $0x148] sm:$0xff]
    %v4146 = vld [vmem:[%s4 + $0x150] sm:$0xff]
    %v4147 = vld [vmem:[%s4 + $0x158] sm:$0xff]
    %v4148 = vld [vmem:[%s4 + $0x160] sm:$0xff]
    %v4149 = vld [vmem:[%s4 + $0x168] sm:$0xff]
    %v4150 = vld [vmem:[%s4 + $0x170] sm:$0xff]
    %v4151 = vld [vmem:[%s4 + $0x178] sm:$0xff]
    %v4152 = vld [vmem:[%s4 + $0x180] sm:$0xff]
    %v4153 = vld [vmem:[%s4 + $0x188] sm:$0xff]
    %v4154 = vld [vmem:[%s4 + $0x190] sm:$0xff]
    %v4155 = vld [vmem:[%s4 + $0x198] sm:$0xff]
    %v4156 = vld [vmem:[%s4 + $0x1a0] sm:$0xff]
    %v4157 = vld [vmem:[%s4 + $0x1a8] sm:$0xff]
    %v4158 = vld [vmem:[%s4 + $0x1b0] sm:$0xff]
    %v4159 = vld [vmem:[%s4 + $0x1b8] sm:$0xff]
    %v4160 = vld [vmem:[%s4 + $0x1c0] sm:$0xff]
    %v4161 = vld [vmem:[%s4 + $0x1c8] sm:$0xff]
    %v4162 = vld [vmem:[%s4 + $0x1d0] sm:$0xff]
    %v4163 = vld [vmem:[%s4 + $0x1d8] sm:$0xff]
    %v4164 = vld [vmem:[%s4 + $0x1e0] sm:$0xff]
    %v4165 = vld [vmem:[%s4 + $0x1e8] sm:$0xff]
    %v4166 = vld [vmem:[%s4 + $0x1f0] sm:$0xff]
    %v4167 = vld [vmem:[%s4 + $0x1f8] sm:$0xff]
    %v4168 = vld [vmem:[%s4 + $0x200] sm:$0xff]
    %v4169 = vld [vmem:[%s4 + $0x208] sm:$0xff]
    %v4170 = vld [vmem:[%s4 + $0x210] sm:$0xff]
    %v4171 = vld [vmem:[%s4 + $0x218] sm:$0xff]
    %v4172 = vld [vmem:[%s4 + $0x220] sm:$0xff]
    %v4173 = vld [vmem:[%s4 + $0x228] sm:$0xff]
    %v4174 = vld [vmem:[%s4 + $0x230] sm:$0xff]
    %v4175 = vld [vmem:[%s4 + $0x238] sm:$0xff]
    %v4176 = vld [vmem:[%s5] sm:$0x1]
    %v4178 = vlaneseq
    %v4179 = vshrl.u32 %v4178, 7
    %v4180 = vsub.s32 0, %v4179
    %v4181 = vrot.slane %v4176, %v4180
    %v4184 = vsel %vm27, %v3768, 0
    %v4187 = vsel %vm27, %v3769, 0
    %v4190 = vsel %vm27, %v3770, 0
    %v4193 = vsel %vm27, %v3771, 0
    %v4196 = vsel %vm27, %v3772, 0
    %v4199 = vsel %vm27, %v3773, 0
    %v4202 = vsel %vm27, %v3774, 0
    %v4205 = vsel %vm27, %v3775, 0
    %v4208 = vsel %vm27, %v3776, 0
    %v4211 = vsel %vm27, %v3777, 0
    %v4214 = vsel %vm27, %v3778, 0
    %v4217 = vsel %vm27, %v3779, 0
    %v4220 = vsel %vm27, %v3780, 0
    %v4223 = vsel %vm27, %v3781, 0
    %v4226 = vsel %vm27, %v3782, 0
    %v4229 = vsel %vm27, %v3783, 0
    %4231 = vmatprep.subr.mxu0 0.0
    %4232 = vmatpush1.msra.mxu0 %v4104
    %4233 = vmatprep.subr.mxu0 0.0
    %4234 = vmatpush1.msra.mxu0 %v4105
    %4235 = vmatprep.subr.mxu0 0.0
    %4236 = vmatpush1.msra.mxu0 %v4106
    %4237 = vmatprep.subr.mxu0 0.0
    %4238 = vmatpush1.msra.mxu0 %v4107
    %4239 = vmatprep.subr.mxu0 0.0
    %4240 = vmatpush1.msra.mxu0 %v4108
    %4241 = vmatprep.subr.mxu0 0.0
    %4242 = vmatpush1.msra.mxu0 %v4109
    %4243 = vmatprep.subr.mxu0 0.0
    %4244 = vmatpush1.msra.mxu0 %v4110
    %4245 = vmatprep.subr.mxu0 0.0
    %4246 = vmatpush1.msra.mxu0 %v4111
    %4247 = vmatprep.subr.mxu0 0.0
    %4248 = vmatpush1.msra.mxu0 %v4112
    %4249 = vmatprep.subr.mxu0 0.0
    %4250 = vmatpush1.msra.mxu0 %v4113
    %4251 = vmatprep.subr.mxu0 0.0
    %4252 = vmatpush1.msra.mxu0 %v4114
    %4253 = vmatprep.subr.mxu0 0.0
    %4254 = vmatpush1.msra.mxu0 %v4115
    %4255 = vmatprep.subr.mxu0 0.0
    %4256 = vmatpush1.msra.mxu0 %v4116
    %4257 = vmatprep.subr.mxu0 0.0
    %4258 = vmatpush1.msra.mxu0 %v4117
    %4259 = vmatprep.subr.mxu0 0.0
    %4260 = vmatpush1.msra.mxu0 %v4118
    %4261 = vmatprep.subr.mxu0 0.0
    %4262 = vmatpush1.msra.mxu0 %v4119
    %4263 = vmatprep.subr.mxu0 0.0
    %4264 = vmatpush1.msra.mxu0 %v4120
    %4265 = vmatprep.subr.mxu0 0.0
    %4266 = vmatpush1.msra.mxu0 %v4121
    %4267 = vmatprep.subr.mxu0 0.0
    %4268 = vmatpush1.msra.mxu0 %v4122
    %4269 = vmatprep.subr.mxu0 0.0
    %4270 = vmatpush1.msra.mxu0 %v4123
    %4271 = vmatprep.subr.mxu0 0.0
    %4272 = vmatpush1.msra.mxu0 %v4124
    %4273 = vmatprep.subr.mxu0 0.0
    %4274 = vmatpush1.msra.mxu0 %v4125
    %4275 = vmatprep.subr.mxu0 0.0
    %4276 = vmatpush1.msra.mxu0 %v4126
    %4277 = vmatprep.subr.mxu0 0.0
    %4278 = vmatpush1.msra.mxu0 %v4127
    %4279 = vmatprep.subr.mxu0 0.0
    %4280 = vmatpush1.msra.mxu0 %v4128
    %4281 = vmatprep.subr.mxu0 0.0
    %4282 = vmatpush1.msra.mxu0 %v4129
    %4283 = vmatprep.subr.mxu0 0.0
    %4284 = vmatpush1.msra.mxu0 %v4130
    %4285 = vmatprep.subr.mxu0 0.0
    %4286 = vmatpush1.msra.mxu0 %v4131
    %4287 = vmatprep.subr.mxu0 0.0
    %4288 = vmatpush1.msra.mxu0 %v4132
    %4289 = vmatprep.subr.mxu0 0.0
    %4290 = vmatpush1.msra.mxu0 %v4133
    %4291 = vmatprep.subr.mxu0 0.0
    %4292 = vmatpush1.msra.mxu0 %v4134
    %4293 = vmatprep.subr.mxu0 0.0
    %4294 = vmatpush1.msra.mxu0 %v4135
    %4295 = vmatprep.mubr.f32.mxu0 %v4056
    %4296 = vmatmul.mubr.f32.gmra.mrb[0].mxu0 %v4040
    %v4297 = vpop.f32.mrb[0].mxu0
    %v4298 = vadd.f32 %v4181, %v4297
    %v4299 = vpop.f32.mrb[0].mxu0
    %4300 = vmatprep.mubr.f32.mxu0 %v4057
    %4301 = vmatmul.mubr.f32.gmra.mrb[0].mxu0 %v4041
    %v4302 = vpop.f32.mrb[0].mxu0
    %v4303 = vadd.f32 %v4181, %v4302
    %v4304 = vpop.f32.mrb[0].mxu0
    %4305 = vmatprep.mubr.f32.mxu0 %v4058
    %4306 = vmatmul.mubr.f32.gmra.mrb[0].mxu0 %v4042
    %v4307 = vpop.f32.mrb[0].mxu0
    %v4308 = vadd.f32 %v4181, %v4307
    %v4309 = vpop.f32.mrb[0].mxu0
    %4310 = vmatprep.mubr.f32.mxu0 %v4059
    %4311 = vmatmul.mubr.f32.gmra.mrb[0].mxu0 %v4043
    %v4312 = vpop.f32.mrb[0].mxu0
    %v4313 = vadd.f32 %v4181, %v4312
    %v4314 = vpop.f32.mrb[0].mxu0
    %4315 = vmatprep.mubr.f32.mxu0 %v4060
    %4316 = vmatmul.mubr.f32.gmra.mrb[0].mxu0 %v4044
    %v4317 = vpop.f32.mrb[0].mxu0
    %v4318 = vadd.f32 %v4181, %v4317
    %v4319 = vpop.f32.mrb[0].mxu0
    %4320 = vmatprep.mubr.f32.mxu0 %v4061
    %4321 = vmatmul.mubr.f32.gmra.mrb[0].mxu0 %v4045
    %v4322 = vpop.f32.mrb[0].mxu0
    %v4323 = vadd.f32 %v4181, %v4322
    %v4324 = vpop.f32.mrb[0].mxu0
    %4325 = vmatprep.mubr.f32.mxu0 %v4062
    %4326 = vmatmul.mubr.f32.gmra.mrb[0].mxu0 %v4046
    %v4327 = vpop.f32.mrb[0].mxu0
    %v4328 = vadd.f32 %v4181, %v4327
    %v4329 = vpop.f32.mrb[0].mxu0
    %4330 = vmatprep.mubr.f32.mxu0 %v4063
    %4331 = vmatmul.mubr.f32.gmra.mrb[0].mxu0 %v4047
    %v4332 = vpop.f32.mrb[0].mxu0
    %v4333 = vadd.f32 %v4181, %v4332
    %v4334 = vpop.f32.mrb[0].mxu0
    %4335 = vmatprep.mubr.f32.mxu0 %v4064
    %4336 = vmatmul.mubr.f32.gmra.mrb[0].mxu0 %v4048
    %v4337 = vpop.f32.mrb[0].mxu0
    %v4338 = vadd.f32 %v4181, %v4337
    %v4339 = vpop.f32.mrb[0].mxu0
    %4340 = vmatprep.mubr.f32.mxu0 %v4065
    %4341 = vmatmul.mubr.f32.gmra.mrb[0].mxu0 %v4049
    %v4342 = vpop.f32.mrb[0].mxu0
    %v4343 = vadd.f32 %v4181, %v4342
    %v4344 = vpop.f32.mrb[0].mxu0
    %4345 = vmatprep.mubr.f32.mxu0 %v4066
    %4346 = vmatmul.mubr.f32.gmra.mrb[0].mxu0 %v4050
    %v4347 = vpop.f32.mrb[0].mxu0
    %v4348 = vadd.f32 %v4181, %v4347
    %v4349 = vpop.f32.mrb[0].mxu0
    %4350 = vmatprep.mubr.f32.mxu0 %v4067
    %4351 = vmatmul.mubr.f32.gmra.mrb[0].mxu0 %v4051
    %v4352 = vpop.f32.mrb[0].mxu0
    %v4353 = vadd.f32 %v4181, %v4352
    %v4354 = vpop.f32.mrb[0].mxu0
    %4355 = vmatprep.mubr.f32.mxu0 %v4068
    %4356 = vmatmul.mubr.f32.gmra.mrb[0].mxu0 %v4052
    %v4357 = vpop.f32.mrb[0].mxu0
    %v4358 = vadd.f32 %v4181, %v4357
    %v4359 = vpop.f32.mrb[0].mxu0
    %4360 = vmatprep.mubr.f32.mxu0 %v4069
    %4361 = vmatmul.mubr.f32.gmra.mrb[0].mxu0 %v4053
    %v4362 = vpop.f32.mrb[0].mxu0
    %v4363 = vadd.f32 %v4181, %v4362
    %v4364 = vpop.f32.mrb[0].mxu0
    %4365 = vmatprep.mubr.f32.mxu0 %v4070
    %4366 = vmatmul.mubr.f32.gmra.mrb[0].mxu0 %v4054
    %v4367 = vpop.f32.mrb[0].mxu0
    %v4368 = vadd.f32 %v4181, %v4367
    %v4369 = vpop.f32.mrb[0].mxu0
    %4370 = vmatprep.mubr.f32.mxu0 %v4071
    %4371 = vmatmul.mubr.f32.gmra.mrb[0].mxu0 %v4055
    %v4372 = vpop.f32.mrb[0].mxu0
    %v4373 = vadd.f32 %v4181, %v4372
    %v4374 = vpop.f32.mrb[0].mxu0
    %4375 = vdwg.mxu0
    %4376 = vmatprep.subr.mxu0 0.0
    %4377 = vmatpush1.msra.mxu0 %v4136
    %4378 = vmatprep.subr.mxu0 0.0
    %4379 = vmatpush1.msra.mxu0 %v4137
    %4380 = vmatprep.subr.mxu0 0.0
    %4381 = vmatpush1.msra.mxu0 %v4138
    %4382 = vmatprep.subr.mxu0 0.0
    %4383 = vmatpush1.msra.mxu0 %v4139
    %4384 = vmatprep.subr.mxu0 0.0
    %4385 = vmatpush1.msra.mxu0 %v4140
    %4386 = vmatprep.subr.mxu0 0.0
    %4387 = vmatpush1.msra.mxu0 %v4141
    %4388 = vmatprep.subr.mxu0 0.0
    %4389 = vmatpush1.msra.mxu0 %v4142
    %4390 = vmatprep.subr.mxu0 0.0
    %4391 = vmatpush1.msra.mxu0 %v4143
    %4392 = vmatprep.subr.mxu0 0.0
    %4393 = vmatpush1.msra.mxu0 %v4144
    %4394 = vmatprep.subr.mxu0 0.0
    %4395 = vmatpush1.msra.mxu0 %v4145
    %4396 = vmatprep.subr.mxu0 0.0
    %4397 = vmatpush1.msra.mxu0 %v4146
    %4398 = vmatprep.subr.mxu0 0.0
    %4399 = vmatpush1.msra.mxu0 %v4147
    %4400 = vmatprep.subr.mxu0 0.0
    %4401 = vmatpush1.msra.mxu0 %v4148
    %4402 = vmatprep.subr.mxu0 0.0
    %4403 = vmatpush1.msra.mxu0 %v4149
    %4404 = vmatprep.subr.mxu0 0.0
    %4405 = vmatpush1.msra.mxu0 %v4150
    %4406 = vmatprep.subr.mxu0 0.0
    %4407 = vmatpush1.msra.mxu0 %v4151
    %4408 = vmatprep.subr.mxu0 0.0
    %4409 = vmatpush1.msra.mxu0 %v4152
    %4410 = vmatprep.subr.mxu0 0.0
    %4411 = vmatpush1.msra.mxu0 %v4153
    %4412 = vmatprep.subr.mxu0 0.0
    %4413 = vmatpush1.msra.mxu0 %v4154
    %4414 = vmatprep.subr.mxu0 0.0
    %4415 = vmatpush1.msra.mxu0 %v4155
    %4416 = vmatprep.subr.mxu0 0.0
    %4417 = vmatpush1.msra.mxu0 %v4156
    %4418 = vmatprep.subr.mxu0 0.0
    %4419 = vmatpush1.msra.mxu0 %v4157
    %4420 = vmatprep.subr.mxu0 0.0
    %4421 = vmatpush1.msra.mxu0 %v4158
    %4422 = vmatprep.subr.mxu0 0.0
    %4423 = vmatpush1.msra.mxu0 %v4159
    %4424 = vmatprep.subr.mxu0 0.0
    %4425 = vmatpush1.msra.mxu0 %v4160
    %4426 = vmatprep.subr.mxu0 0.0
    %4427 = vmatpush1.msra.mxu0 %v4161
    %4428 = vmatprep.subr.mxu0 0.0
    %4429 = vmatpush1.msra.mxu0 %v4162
    %4430 = vmatprep.subr.mxu0 0.0
    %4431 = vmatpush1.msra.mxu0 %v4163
    %4432 = vmatprep.subr.mxu0 0.0
    %4433 = vmatpush1.msra.mxu0 %v4164
    %4434 = vmatprep.subr.mxu0 0.0
    %4435 = vmatpush1.msra.mxu0 %v4165
    %4436 = vmatprep.subr.mxu0 0.0
    %4437 = vmatpush1.msra.mxu0 %v4166
    %4438 = vmatprep.subr.mxu0 0.0
    %4439 = vmatpush1.msra.mxu0 %v4167
    %4440 = vmatprep.mubr.f32.mxu0 %v4088
    %4441 = vmatmul.mubr.f32.gmra.mrb[0].mxu0 %v4072
    %v4442 = vpop.f32.mrb[0].mxu0
    %v4443 = vadd.f32 %v4298, %v4442
    %v4444 = vpop.f32.mrb[0].mxu0
    %4445 = vmatprep.mubr.f32.mxu0 %v4089
    %4446 = vmatmul.mubr.f32.gmra.mrb[0].mxu0 %v4073
    %v4447 = vpop.f32.mrb[0].mxu0
    %v4448 = vadd.f32 %v4303, %v4447
    %v4449 = vpop.f32.mrb[0].mxu0
    %4450 = vmatprep.mubr.f32.mxu0 %v4090
    %4451 = vmatmul.mubr.f32.gmra.mrb[0].mxu0 %v4074
    %v4452 = vpop.f32.mrb[0].mxu0
    %v4453 = vadd.f32 %v4308, %v4452
    %v4454 = vpop.f32.mrb[0].mxu0
    %4455 = vmatprep.mubr.f32.mxu0 %v4091
    %4456 = vmatmul.mubr.f32.gmra.mrb[0].mxu0 %v4075
    %v4457 = vpop.f32.mrb[0].mxu0
    %v4458 = vadd.f32 %v4313, %v4457
    %v4459 = vpop.f32.mrb[0].mxu0
    %4460 = vmatprep.mubr.f32.mxu0 %v4092
    %4461 = vmatmul.mubr.f32.gmra.mrb[0].mxu0 %v4076
    %v4462 = vpop.f32.mrb[0].mxu0
    %v4463 = vadd.f32 %v4318, %v4462
    %v4464 = vpop.f32.mrb[0].mxu0
    %4465 = vmatprep.mubr.f32.mxu0 %v4093
    %4466 = vmatmul.mubr.f32.gmra.mrb[0].mxu0 %v4077
    %v4467 = vpop.f32.mrb[0].mxu0
    %v4468 = vadd.f32 %v4323, %v4467
    %v4469 = vpop.f32.mrb[0].mxu0
    %4470 = vmatprep.mubr.f32.mxu0 %v4094
    %4471 = vmatmul.mubr.f32.gmra.mrb[0].mxu0 %v4078
    %v4472 = vpop.f32.mrb[0].mxu0
    %v4473 = vadd.f32 %v4328, %v4472
    %v4474 = vpop.f32.mrb[0].mxu0
    %4475 = vmatprep.mubr.f32.mxu0 %v4095
    %4476 = vmatmul.mubr.f32.gmra.mrb[0].mxu0 %v4079
    %v4477 = vpop.f32.mrb[0].mxu0
    %v4478 = vadd.f32 %v4333, %v4477
    %v4479 = vpop.f32.mrb[0].mxu0
    %4480 = vmatprep.mubr.f32.mxu0 %v4096
    %4481 = vmatmul.mubr.f32.gmra.mrb[0].mxu0 %v4080
    %v4482 = vpop.f32.mrb[0].mxu0
    %v4483 = vadd.f32 %v4338, %v4482
    %v4484 = vpop.f32.mrb[0].mxu0
    %4485 = vmatprep.mubr.f32.mxu0 %v4097
    %4486 = vmatmul.mubr.f32.gmra.mrb[0].mxu0 %v4081
    %v4487 = vpop.f32.mrb[0].mxu0
    %v4488 = vadd.f32 %v4343, %v4487
    %v4489 = vpop.f32.mrb[0].mxu0
    %4490 = vmatprep.mubr.f32.mxu0 %v4098
    %4491 = vmatmul.mubr.f32.gmra.mrb[0].mxu0 %v4082
    %v4492 = vpop.f32.mrb[0].mxu0
    %v4493 = vadd.f32 %v4348, %v4492
    %v4494 = vpop.f32.mrb[0].mxu0
    %4495 = vmatprep.mubr.f32.mxu0 %v4099
    %4496 = vmatmul.mubr.f32.gmra.mrb[0].mxu0 %v4083
    %v4497 = vpop.f32.mrb[0].mxu0
    %v4498 = vadd.f32 %v4353, %v4497
    %v4499 = vpop.f32.mrb[0].mxu0
    %4500 = vmatprep.mubr.f32.mxu0 %v4100
    %4501 = vmatmul.mubr.f32.gmra.mrb[0].mxu0 %v4084
    %v4502 = vpop.f32.mrb[0].mxu0
    %v4503 = vadd.f32 %v4358, %v4502
    %v4504 = vpop.f32.mrb[0].mxu0
    %4505 = vmatprep.mubr.f32.mxu0 %v4101
    %4506 = vmatmul.mubr.f32.gmra.mrb[0].mxu0 %v4085
    %v4507 = vpop.f32.mrb[0].mxu0
    %v4508 = vadd.f32 %v4363, %v4507
    %v4509 = vpop.f32.mrb[0].mxu0
    %4510 = vmatprep.mubr.f32.mxu0 %v4102
    %4511 = vmatmul.mubr.f32.gmra.mrb[0].mxu0 %v4086
    %v4512 = vpop.f32.mrb[0].mxu0
    %v4513 = vadd.f32 %v4368, %v4512
    %v4514 = vpop.f32.mrb[0].mxu0
    %4515 = vmatprep.mubr.f32.mxu0 %v4103
    %4516 = vmatmul.mubr.f32.gmra.mrb[0].mxu0 %v4087
    %v4517 = vpop.f32.mrb[0].mxu0
    %v4518 = vadd.f32 %v4373, %v4517
    %v4519 = vpop.f32.mrb[0].mxu0
    %4520 = vdwg.mxu0
    %4521 = vmatprep.subr.mxu0 0.0
    %4522 = vmatpush1.msra.mxu0 %v4168
    %4523 = vmatprep.subr.mxu0 0.0
    %4524 = vmatpush1.msra.mxu0 %v4169
    %4525 = vmatprep.subr.mxu0 0.0
    %4526 = vmatpush1.msra.mxu0 %v4170
    %4527 = vmatprep.subr.mxu0 0.0
    %4528 = vmatpush1.msra.mxu0 %v4171
    %4529 = vmatprep.subr.mxu0 0.0
    %4530 = vmatpush1.msra.mxu0 %v4172
    %4531 = vmatprep.subr.mxu0 0.0
    %4532 = vmatpush1.msra.mxu0 %v4173
    %4533 = vmatprep.subr.mxu0 0.0
    %4534 = vmatpush1.msra.mxu0 %v4174
    %4535 = vmatprep.subr.mxu0 0.0
    %4536 = vmatpush1.msra.mxu0 %v4175
    %4537 = vmatprep.subr.mxu0 0.0
    %4538 = vmatpush1.msra.mxu0 0.0
    %4539 = vmatprep.subr.mxu0 0.0
    %4540 = vmatpush1.msra.mxu0 0.0
    %4541 = vmatprep.subr.mxu0 0.0
    %4542 = vmatpush1.msra.mxu0 0.0
    %4543 = vmatprep.subr.mxu0 0.0
    %4544 = vmatpush1.msra.mxu0 0.0
    %4545 = vmatprep.subr.mxu0 0.0
    %4546 = vmatpush1.msra.mxu0 0.0
    %4547 = vmatprep.subr.mxu0 0.0
    %4548 = vmatpush1.msra.mxu0 0.0
    %4549 = vmatprep.subr.mxu0 0.0
    %4550 = vmatpush1.msra.mxu0 0.0
    %4551 = vmatprep.subr.mxu0 0.0
    %4552 = vmatpush1.msra.mxu0 0.0
    %4553 = vmatprep.subr.mxu0 0.0
    %4554 = vmatpush1.msra.mxu0 0.0
    %4555 = vmatprep.subr.mxu0 0.0
    %4556 = vmatpush1.msra.mxu0 0.0
    %4557 = vmatprep.subr.mxu0 0.0
    %4558 = vmatpush1.msra.mxu0 0.0
    %4559 = vmatprep.subr.mxu0 0.0
    %4560 = vmatpush1.msra.mxu0 0.0
    %4561 = vmatprep.subr.mxu0 0.0
    %4562 = vmatpush1.msra.mxu0 0.0
    %4563 = vmatprep.subr.mxu0 0.0
    %4564 = vmatpush1.msra.mxu0 0.0
    %4565 = vmatprep.subr.mxu0 0.0
    %4566 = vmatpush1.msra.mxu0 0.0
    %4567 = vmatprep.subr.mxu0 0.0
    %4568 = vmatpush1.msra.mxu0 0.0
    %4569 = vmatprep.subr.mxu0 0.0
    %4570 = vmatpush1.msra.mxu0 0.0
    %4571 = vmatprep.subr.mxu0 0.0
    %4572 = vmatpush1.msra.mxu0 0.0
    %4573 = vmatprep.subr.mxu0 0.0
    %4574 = vmatpush1.msra.mxu0 0.0
    %4575 = vmatprep.subr.mxu0 0.0
    %4576 = vmatpush1.msra.mxu0 0.0
    %4577 = vmatprep.subr.mxu0 0.0
    %4578 = vmatpush1.msra.mxu0 0.0
    %4579 = vmatprep.subr.mxu0 0.0
    %4580 = vmatpush1.msra.mxu0 0.0
    %4581 = vmatprep.subr.mxu0 0.0
    %4582 = vmatpush1.msra.mxu0 0.0
    %4583 = vmatprep.subr.mxu0 0.0
    %4584 = vmatpush1.msra.mxu0 0.0
    %4585 = vmatprep.mubr.f32.mxu0 0.0
    %4586 = vmatmul.mubr.f32.gmra.mrb[0].mxu0 %v4184
    %v4587 = vpop.f32.mrb[0].mxu0
    %v4588 = vadd.f32 %v4443, %v4587
    %v4589 = vpop.f32.mrb[0].mxu0
    %4590 = vmatprep.mubr.f32.mxu0 0.0
    %4591 = vmatmul.mubr.f32.gmra.mrb[0].mxu0 %v4187
    %v4592 = vpop.f32.mrb[0].mxu0
    %v4593 = vadd.f32 %v4448, %v4592
    %v4594 = vpop.f32.mrb[0].mxu0
    %4595 = vmatprep.mubr.f32.mxu0 0.0
    %4596 = vmatmul.mubr.f32.gmra.mrb[0].mxu0 %v4190
    %v4597 = vpop.f32.mrb[0].mxu0
    %v4598 = vadd.f32 %v4453, %v4597
    %v4599 = vpop.f32.mrb[0].mxu0
    %4600 = vmatprep.mubr.f32.mxu0 0.0
    %4601 = vmatmul.mubr.f32.gmra.mrb[0].mxu0 %v4193
    %v4602 = vpop.f32.mrb[0].mxu0
    %v4603 = vadd.f32 %v4458, %v4602
    %v4604 = vpop.f32.mrb[0].mxu0
    %4605 = vmatprep.mubr.f32.mxu0 0.0
    %4606 = vmatmul.mubr.f32.gmra.mrb[0].mxu0 %v4196
    %v4607 = vpop.f32.mrb[0].mxu0
    %v4608 = vadd.f32 %v4463, %v4607
    %v4609 = vpop.f32.mrb[0].mxu0
    %4610 = vmatprep.mubr.f32.mxu0 0.0
    %4611 = vmatmul.mubr.f32.gmra.mrb[0].mxu0 %v4199
    %v4612 = vpop.f32.mrb[0].mxu0
    %v4613 = vadd.f32 %v4468, %v4612
    %v4614 = vpop.f32.mrb[0].mxu0
    %4615 = vmatprep.mubr.f32.mxu0 0.0
    %4616 = vmatmul.mubr.f32.gmra.mrb[0].mxu0 %v4202
    %v4617 = vpop.f32.mrb[0].mxu0
    %v4618 = vadd.f32 %v4473, %v4617
    %v4619 = vpop.f32.mrb[0].mxu0
    %4620 = vmatprep.mubr.f32.mxu0 0.0
    %4621 = vmatmul.mubr.f32.gmra.mrb[0].mxu0 %v4205
    %v4622 = vpop.f32.mrb[0].mxu0
    %v4623 = vadd.f32 %v4478, %v4622
    %v4624 = vpop.f32.mrb[0].mxu0
    %4625 = vmatprep.mubr.f32.mxu0 0.0
    %4626 = vmatmul.mubr.f32.gmra.mrb[0].mxu0 %v4208
    %v4627 = vpop.f32.mrb[0].mxu0
    %v4628 = vadd.f32 %v4483, %v4627
    %v4629 = vpop.f32.mrb[0].mxu0
    %4630 = vmatprep.mubr.f32.mxu0 0.0
    %4631 = vmatmul.mubr.f32.gmra.mrb[0].mxu0 %v4211
    %v4632 = vpop.f32.mrb[0].mxu0
    %v4633 = vadd.f32 %v4488, %v4632
    %v4634 = vpop.f32.mrb[0].mxu0
    %4635 = vmatprep.mubr.f32.mxu0 0.0
    %4636 = vmatmul.mubr.f32.gmra.mrb[0].mxu0 %v4214
    %v4637 = vpop.f32.mrb[0].mxu0
    %v4638 = vadd.f32 %v4493, %v4637
    %v4639 = vpop.f32.mrb[0].mxu0
    %4640 = vmatprep.mubr.f32.mxu0 0.0
    %4641 = vmatmul.mubr.f32.gmra.mrb[0].mxu0 %v4217
    %v4642 = vpop.f32.mrb[0].mxu0
    %v4643 = vadd.f32 %v4498, %v4642
    %v4644 = vpop.f32.mrb[0].mxu0
    %4645 = vmatprep.mubr.f32.mxu0 0.0
    %4646 = vmatmul.mubr.f32.gmra.mrb[0].mxu0 %v4220
    %v4647 = vpop.f32.mrb[0].mxu0
    %v4648 = vadd.f32 %v4503, %v4647
    %v4649 = vpop.f32.mrb[0].mxu0
    %4650 = vmatprep.mubr.f32.mxu0 0.0
    %4651 = vmatmul.mubr.f32.gmra.mrb[0].mxu0 %v4223
    %v4652 = vpop.f32.mrb[0].mxu0
    %v4653 = vadd.f32 %v4508, %v4652
    %v4654 = vpop.f32.mrb[0].mxu0
    %4655 = vmatprep.mubr.f32.mxu0 0.0
    %4656 = vmatmul.mubr.f32.gmra.mrb[0].mxu0 %v4226
    %v4657 = vpop.f32.mrb[0].mxu0
    %v4658 = vadd.f32 %v4513, %v4657
    %v4659 = vpop.f32.mrb[0].mxu0
    %4660 = vmatprep.mubr.f32.mxu0 0.0
    %4661 = vmatmul.mubr.f32.gmra.mrb[0].mxu0 %v4229
    %v4662 = vpop.f32.mrb[0].mxu0
    %v4663 = vadd.f32 %v4518, %v4662
    %v4664 = vpop.f32.mrb[0].mxu0
    %4665 = vdwg.mxu0
    %4666 = vst.msk [vmem:[#allocation5] sm:$0xff] %vm27, %v4588
    %4667 = vst.msk [vmem:[#allocation5 + $0x8] sm:$0xff] %vm27, %v4593
    %4668 = vst.msk [vmem:[#allocation5 + $0x10] sm:$0xff] %vm27, %v4598
    %4669 = vst.msk [vmem:[#allocation5 + $0x18] sm:$0xff] %vm27, %v4603
    %4670 = vst.msk [vmem:[#allocation5 + $0x20] sm:$0xff] %vm27, %v4608
    %4671 = vst.msk [vmem:[#allocation5 + $0x28] sm:$0xff] %vm27, %v4613
    %4672 = vst.msk [vmem:[#allocation5 + $0x30] sm:$0xff] %vm27, %v4618
    %4673 = vst.msk [vmem:[#allocation5 + $0x38] sm:$0xff] %vm27, %v4623
    %4674 = vst.msk [vmem:[#allocation5 + $0x40] sm:$0xff] %vm27, %v4628
    %4675 = vst.msk [vmem:[#allocation5 + $0x48] sm:$0xff] %vm27, %v4633
    %4676 = vst.msk [vmem:[#allocation5 + $0x50] sm:$0xff] %vm27, %v4638
    %4677 = vst.msk [vmem:[#allocation5 + $0x58] sm:$0xff] %vm27, %v4643
    %4678 = vst.msk [vmem:[#allocation5 + $0x60] sm:$0xff] %vm27, %v4648
    %4679 = vst.msk [vmem:[#allocation5 + $0x68] sm:$0xff] %vm27, %v4653
    %4680 = vst.msk [vmem:[#allocation5 + $0x70] sm:$0xff] %vm27, %v4658
    %4681 = vst.msk [vmem:[#allocation5 + $0x78] sm:$0xff] %vm27, %v4663
    // Predicated region
    $region26: #{paraphraser_forward.1} parent=1 // pred_check
      _
    $region27: #{paraphraser_forward.1} parent=1 // pred_check_branch
      %4683 = sbr.rel (0) target = $region29
    $region28: #{paraphraser_forward.1} parent=1 // pred_region
      %s4685 = ssub.s32 2048, 2048
      %4686 = vsyncadd [#allocation4], %s4685
      %s4687 = sshll.u32 [#allocation3], 4
      %s4688 = int_to_ptr.vmem [resolvable:$true] %s4687
      %4693 = dma.vmem_to_hbm [thread:$0]  %s4688, 2048, %s6, [#allocation4], 128, 128, 8
    $region29: #{paraphraser_forward.1} parent=1 // pred_fallthru
      _
    // Predicated region
    $region30: #{paraphraser_forward.1} parent=1 // pred_check
      _
    $region31: #{paraphraser_forward.1} parent=1 // pred_check_branch
      %4695 = sbr.rel (0) target = $region33
    $region32: #{paraphraser_forward.1} parent=1 // pred_region
      %s4697 = ssub.s32 2048, 2048
      %4698 = vsyncadd [#allocation6], %s4697
      %s4699 = sshll.u32 [#allocation5], 4
      %s4700 = int_to_ptr.vmem [resolvable:$true] %s4699
      %4705 = dma.vmem_to_hbm [thread:$0]  %s4700, 2048, %s7, [#allocation6], 128, 128, 8
    $region33: #{paraphraser_forward.1} parent=1 // pred_fallthru
      _
    // Predicated region
    $region34: #{paraphraser_forward.1} parent=1 // pred_check
      _
    $region35: #{paraphraser_forward.1} parent=1 // pred_check_branch
      %4707 = sbr.rel (0) target = $region37
    $region36: #{paraphraser_forward.1} parent=1 // pred_region
      %4708 = dma.done [#allocation4], 2048
    $region37: #{paraphraser_forward.1} parent=1 // pred_fallthru
      _
    // Predicated region
    $region38: #{paraphraser_forward.1} parent=1 // pred_check
      _
    $region39: #{paraphraser_forward.1} parent=1 // pred_check_branch
      %4710 = sbr.rel (0) target = $region41
    $region40: #{paraphraser_forward.1} parent=1 // pred_region
      %4711 = dma.done [#allocation6], 2048
    $region41: #{paraphraser_forward.1} parent=1 // pred_fallthru
      _
    %4712 = vsyncpa [#allocation4], 1
    %4713 = vsyncpa [#allocation6], 1

</llo_original>
